<compile_context>
chip_gen: v7x
topology: tpu7x:2x2x1
jax: 0.10.0
libtpu: 0.0.40
codegen_flags: <defaults>
</compile_context>

<pallas_src>
import math
from functools import partial

import jax
import jax.numpy as jnp
from jax.experimental import pallas as pl
from jax.experimental.pallas import tpu as pltpu

# ----------------------------- configuration --------------------------------
MODEL_DIM = 32
HEADS = 4
NUM_DECODERS = 2
D_FF = 64            # FeedForward hidden dim (kept small; repo default is 2048)
VOCAB = 50
MAX_SEQ = 16
B = 2                # batch
ST = 8               # target sequence length
SS = 8               # source (encoder) sequence length
EPS = 1e-6


# ------------------------------ fused kernel --------------------------------
def _decoder_kernel(x_ref, e_ref, ms_ref, mc_ref,
                    w_ref, wff2_ref, wckv_ref, bckv_ref, b_ref, n_ref,
                    o_ref, *, num_layers, heads, d_ff, eps):
    """Whole 2-layer decoder forward, all operands VMEM resident.

    Packed layouts (lane offsets, D = model_dim):
      w_ref  (L, D, 8D):   [Wq|Wk|Wv : 0..3D] [Wo_self : 3D..4D]
                           [Wq_cross : 4D..5D] [Wo_cross : 5D..6D]
                           [Wff1 : 6D..6D+d_ff]
      b_ref  (L, 7D+d_ff): same order as w_ref, plus [bff2 : 6D+d_ff..7D+d_ff]
      wckv_ref (D, L*2D) / bckv_ref (1, L*2D): cross K|V for all layers
      n_ref  (6L+2, D):    per layer (a1,b1,a2,b2,a3,b3), then final (a,b)
    """
    D = x_ref.shape[-1]
    dk = D // heads
    scale = 1.0 / math.sqrt(dk)

    x = x_ref[...]            # (B*St, D)
    ms = ms_ref[...]          # (B*St, B*St) additive mask (0 / -1e9)
    mc = mc_ref[...]          # (B*St, B*Ss) additive mask (0 / -1e9)

    # Cross-attention K/V projection hoisted across ALL layers:
    # one (B*Ss, D) @ (D, L*2D = 128) matmul, 128-lane-wide output.
    kv_all = (jnp.dot(e_ref[...], wckv_ref[...],
                      preferred_element_type=jnp.float32) + bckv_ref[...])

    def norm(v, row):
        # alpha * (x - mean) / (std + eps) + bias ; torch.std is unbiased (D-1).
        a = n_ref[row:row + 1, :]
        b = n_ref[row + 1:row + 2, :]
        mean = jnp.mean(v, axis=-1, keepdims=True)
        var = jnp.sum((v - mean) ** 2, axis=-1, keepdims=True) / (D - 1)
        return a * (v - mean) / (jnp.sqrt(var) + eps) + b

    def mha(q, k, v, madd, w_o, b_o):
        # q: (B*s_q, D); k, v: (B*s_k, D); madd: (B*s_q, B*s_k) additive mask
        # that already encodes BOTH the user mask and the batch block-diagonal
        # structure (-1e9 outside the own-batch block -> exp underflows to 0).
        q = q * scale
        outs = []
        for h in range(heads):
            qh = q[:, h * dk:(h + 1) * dk]
            kh = k[:, h * dk:(h + 1) * dk]
            vh = v[:, h * dk:(h + 1) * dk]
            s = jax.lax.dot_general(
                qh, kh, (((1,), (1,)), ((), ())),
                preferred_element_type=jnp.float32) + madd
            s = s - jnp.max(s, axis=-1, keepdims=True)
            p = jnp.exp(s)
            p = p * pl.reciprocal(jnp.sum(p, axis=-1, keepdims=True),
                                  approx=True)
            outs.append(jnp.dot(p, vh, preferred_element_type=jnp.float32))
        # Fused output projection: concat heads along lanes, ONE (.,D)@(D,D).
        concat = jnp.concatenate(outs, axis=-1)
        return jnp.dot(concat, w_o, preferred_element_type=jnp.float32) + b_o

    for l in range(num_layers):
        r = l * 6
        # ---- self-attention sub-block (dropout_1 = identity, eval mode) ----
        x2 = norm(x, r)
        qkv = (jnp.dot(x2, w_ref[l, :, 0:3 * D],
                       preferred_element_type=jnp.float32)
               + b_ref[l:l + 1, 0:3 * D])
        x = x + mha(qkv[:, 0:D], qkv[:, D:2 * D], qkv[:, 2 * D:3 * D], ms,
                    w_ref[l, :, 3 * D:4 * D], b_ref[l:l + 1, 3 * D:4 * D])
        # ---- cross-attention sub-block (dropout_2 = identity) --------------
        x2 = norm(x, r + 2)
        q = (jnp.dot(x2, w_ref[l, :, 4 * D:5 * D],
                     preferred_element_type=jnp.float32)
             + b_ref[l:l + 1, 4 * D:5 * D])
        x = x + mha(q,
                    kv_all[:, 2 * D * l:2 * D * l + D],
                    kv_all[:, 2 * D * l + D:2 * D * (l + 1)],
                    mc,
                    w_ref[l, :, 5 * D:6 * D], b_ref[l:l + 1, 5 * D:6 * D])
        # ---- feed-forward sub-block (dropout_3 = identity) ------------------
        x2 = norm(x, r + 4)
        h1 = jnp.maximum(
            jnp.dot(x2, w_ref[l, :, 6 * D:6 * D + d_ff],
                    preferred_element_type=jnp.float32)
            + b_ref[l:l + 1, 6 * D:6 * D + d_ff], 0.0)
        x = x + (jnp.dot(h1, wff2_ref[l], preferred_element_type=jnp.float32)
                 + b_ref[l:l + 1, 6 * D + d_ff:7 * D + d_ff])

    o_ref[...] = norm(x, num_layers * 6)


# ------------------------------ wrapper glue ---------------------------------
def _full_spec(shape):
    nd = len(shape)
    return pl.BlockSpec(shape, lambda i, _nd=nd: (0,) * _nd)


def decoder_pallas(x2d, e2d, ms, mc, p):
    M, D = x2d.shape
    args = (x2d, e2d, ms, mc,
            p["w_blk"], p["w_ff2"], p["w_ckv"], p["b_ckv"],
            p["b_blk"], p["norms"])
    kernel = partial(_decoder_kernel,
                     num_layers=NUM_DECODERS, heads=HEADS, d_ff=D_FF, eps=EPS)
    return pl.pallas_call(
        kernel,
        out_shape=jax.ShapeDtypeStruct((M, D), jnp.float32),
        grid=(1,),
        in_specs=[_full_spec(a.shape) for a in args],
        out_specs=_full_spec((M, D)),
        compiler_params=pltpu.CompilerParams(
            dimension_semantics=("arbitrary",)),
    )(*args)


def _block_diag_additive(mask, s_q):
    """(B, mq, s_k) bool mask -> (B*s_q, B*s_k) additive mask with the batch
    block-diagonal structure folded in (0 = keep, -1e9 = masked)."""
    Bm, _, sk = mask.shape
    m = jnp.broadcast_to(mask.astype(jnp.float32), (Bm, s_q, sk))
    eye = jnp.eye(Bm, dtype=jnp.float32)[:, None, :, None]          # (B,1,B,1)
    keep = (eye * m[:, :, None, :]).reshape(Bm * s_q, Bm * sk)
    return jnp.where(keep > 0.0, 0.0, -1e9).astype(jnp.float32)


def decoder_forward(params, trg, e_outputs, src_mask, trg_mask):
    Bx, St = trg.shape
    _, Ss, D = e_outputs.shape
    # w2v embedding lookup (glue) + positional encoding (x*sqrt(D) + pe).
    x = params["emb"][trg] * math.sqrt(D) + params["pe"][:St][None, :, :]
    ms = _block_diag_additive(trg_mask, St)     # (B*St, B*St)
    mc = _block_diag_additive(src_mask, St)     # (B*St, B*Ss)
    out2d = decoder_pallas(x.reshape(Bx * St, D),
                           e_outputs.reshape(Bx * Ss, D),
                           ms, mc, params)
    # TODO(synk): L0 hard-concrete gate (use_gate=True) not implemented; with
    # use_gate=False MultiHeadAttention returns a zero l0 loss, reproduced here.
    l0_loss = jnp.zeros((1,), jnp.float32)
    return out2d.reshape(Bx, St, D), l0_loss


# --------------------------- parameter construction -------------------------
def _make_pe(max_len, d):
    # Matches the SamLynnEvans PositionalEncoder table.
    pos = jnp.arange(max_len, dtype=jnp.float32)[:, None]
    i = jnp.arange(0, d, 2, dtype=jnp.float32)[None, :]
    sin_part = jnp.sin(pos / jnp.power(10000.0, (2.0 * i) / d))
    cos_part = jnp.cos(pos / jnp.power(10000.0, (2.0 * (i + 1.0)) / d))
    pe = jnp.zeros((max_len, d), jnp.float32)
    pe = pe.at[:, 0::2].set(sin_part).at[:, 1::2].set(cos_part)
    return pe


def init_params(key):
    D = MODEL_DIM

    def lin(k, din, dout):
        kw, kb = jax.random.split(k)
        s = 1.0 / math.sqrt(din)
        return (jax.random.uniform(kw, (din, dout), jnp.float32, -s, s),
                jax.random.uniform(kb, (1, dout), jnp.float32, -s, s))

    keys = jax.random.split(key, 2 + NUM_DECODERS)

    w_blk, b_blk, w_ff2, w_ckv, b_ckv, norms = [], [], [], [], [], []
    for li in range(NUM_DECODERS):
        lk = jax.random.split(keys[2 + li], 10)
        # self-attention projections
        wq, bq = lin(lk[0], D, D)
        wk, bk = lin(lk[1], D, D)
        wv, bv = lin(lk[2], D, D)
        wo, bo = lin(lk[3], D, D)
        # cross-attention projections
        wq2, bq2 = lin(lk[4], D, D)
        wk2, bk2 = lin(lk[5], D, D)
        wv2, bv2 = lin(lk[6], D, D)
        wo2, bo2 = lin(lk[7], D, D)
        # feed-forward
        wf1, bf1 = lin(lk[8], D, D_FF)
        wf2, bf2 = lin(lk[9], D_FF, D)

        # packed per-layer weights / biases (see kernel docstring for layout)
        w_blk.append(jnp.concatenate([wq, wk, wv, wo, wq2, wo2, wf1], axis=1))
        b_blk.append(jnp.concatenate([bq, bk, bv, bo, bq2, bo2, bf1, bf2],
                                     axis=1)[0])
        w_ff2.append(wf2)
        w_ckv.append(jnp.concatenate([wk2, wv2], axis=1))     # (D, 2D)
        b_ckv.append(jnp.concatenate([bk2, bv2], axis=1))     # (1, 2D)
        # the three pre-norms of the layer (alpha, beta pairs)
        for _ in range(3):
            norms.append(jnp.ones((D,), jnp.float32))
            norms.append(jnp.zeros((D,), jnp.float32))
    # final decoder norm
    norms.append(jnp.ones((D,), jnp.float32))
    norms.append(jnp.zeros((D,), jnp.float32))

    return {
        "emb": jax.random.normal(keys[0], (VOCAB, D), jnp.float32) * 0.1,
        "pe": _make_pe(MAX_SEQ, D),
        "w_blk": jnp.stack(w_blk),                # (L, D, 8D = 256)
        "b_blk": jnp.stack(b_blk),                # (L, 7D + d_ff = 288)
        "w_ff2": jnp.stack(w_ff2),                # (L, D_FF, D)
        "w_ckv": jnp.concatenate(w_ckv, axis=1),  # (D, L*2D = 128)
        "b_ckv": jnp.concatenate(b_ckv, axis=1),  # (1, L*2D = 128)
        "norms": jnp.stack(norms),                # (6L+2, D)
    }


# --------------------------------- main --------------------------------------
if __name__ == "__main__":
    root = jax.random.PRNGKey(0)
    k_par, k_trg, k_enc = jax.random.split(root, 3)

    params = init_params(k_par)

    trg = jax.random.randint(k_trg, (B, ST), 0, VOCAB, dtype=jnp.int32)
    e_outputs = jax.random.normal(k_enc, (B, SS, MODEL_DIM), jnp.float32)
    # src_mask: (B, 1, SS) all-keep; trg_mask: (B, ST, ST) causal (no-peek).
    src_mask = jnp.ones((B, 1, SS), dtype=bool)
    trg_mask = jnp.tril(jnp.ones((ST, ST), dtype=bool))[None, :, :].repeat(B, axis=0)

    fwd = jax.jit(decoder_forward)
    out, l0_loss = fwd(params, trg, e_outputs, src_mask, trg_mask)
    jax.block_until_ready((out, l0_loss))

    assert out.shape == (B, ST, MODEL_DIM) and l0_loss.shape == (1,)
    assert bool(jnp.all(jnp.isfinite(out)))
    print("KERNEL_OK")
</pallas_src>

<mosaic_0001>
module attributes {stable_mosaic.version = 11 : i64} {
  func.func @_decoder_kernel(%arg0: i32, %arg1: memref<16x32xf32, #tpu.memory_space<vmem>>, %arg2: memref<16x32xf32, #tpu.memory_space<vmem>>, %arg3: memref<16x16xf32, #tpu.memory_space<vmem>>, %arg4: memref<16x16xf32, #tpu.memory_space<vmem>>, %arg5: memref<2x32x256xf32, #tpu.memory_space<vmem>>, %arg6: memref<2x64x32xf32, #tpu.memory_space<vmem>>, %arg7: memref<32x128xf32, #tpu.memory_space<vmem>>, %arg8: memref<1x128xf32, #tpu.memory_space<vmem>>, %arg9: memref<2x288xf32, #tpu.memory_space<vmem>>, %arg10: memref<14x32xf32, #tpu.memory_space<vmem>>, %arg11: memref<16x32xf32, #tpu.memory_space<vmem>>) attributes {dimension_semantics = [#tpu.dimension_semantics<arbitrary>], iteration_bounds = array<i64: 1>, scalar_prefetch = 0 : i64, scratch_operands = 0 : i64, tpu.core_type = #tpu.core_type<tc>, window_params = [{pipeline_mode = #tpu.pipeline_mode<synchronous>, transform_indices = @transform_0, window_bounds = array<i64: 16, 32>}, {pipeline_mode = #tpu.pipeline_mode<synchronous>, transform_indices = @transform_1, window_bounds = array<i64: 16, 32>}, {pipeline_mode = #tpu.pipeline_mode<synchronous>, transform_indices = @transform_2, window_bounds = array<i64: 16, 16>}, {pipeline_mode = #tpu.pipeline_mode<synchronous>, transform_indices = @transform_3, window_bounds = array<i64: 16, 16>}, {pipeline_mode = #tpu.pipeline_mode<synchronous>, transform_indices = @transform_4, window_bounds = array<i64: 2, 32, 256>}, {pipeline_mode = #tpu.pipeline_mode<synchronous>, transform_indices = @transform_5, window_bounds = array<i64: 2, 64, 32>}, {pipeline_mode = #tpu.pipeline_mode<synchronous>, transform_indices = @transform_6, window_bounds = array<i64: 32, 128>}, {pipeline_mode = #tpu.pipeline_mode<synchronous>, transform_indices = @transform_7, window_bounds = array<i64: 1, 128>}, {pipeline_mode = #tpu.pipeline_mode<synchronous>, transform_indices = @transform_8, window_bounds = array<i64: 2, 288>}, {pipeline_mode = #tpu.pipeline_mode<synchronous>, transform_indices = @transform_9, window_bounds = array<i64: 14, 32>}, {pipeline_mode = #tpu.pipeline_mode<synchronous>, transform_indices = @transform_10, window_bounds = array<i64: 16, 32>}]} {
    %c0 = arith.constant 0 : index
    %c0_0 = arith.constant 0 : index
    %0 = vector.load %arg1[%c0, %c0_0] : memref<16x32xf32, #tpu.memory_space<vmem>>, vector<16x32xf32>
    %c0_1 = arith.constant 0 : index
    %c0_2 = arith.constant 0 : index
    %1 = vector.load %arg3[%c0_1, %c0_2] : memref<16x16xf32, #tpu.memory_space<vmem>>, vector<16x16xf32>
    %c0_3 = arith.constant 0 : index
    %c0_4 = arith.constant 0 : index
    %2 = vector.load %arg4[%c0_3, %c0_4] : memref<16x16xf32, #tpu.memory_space<vmem>>, vector<16x16xf32>
    %c0_5 = arith.constant 0 : index
    %c0_6 = arith.constant 0 : index
    %3 = vector.load %arg2[%c0_5, %c0_6] : memref<16x32xf32, #tpu.memory_space<vmem>>, vector<16x32xf32>
    %c0_7 = arith.constant 0 : index
    %c0_8 = arith.constant 0 : index
    %4 = vector.load %arg7[%c0_7, %c0_8] : memref<32x128xf32, #tpu.memory_space<vmem>>, vector<32x128xf32>
    %cst = arith.constant dense<0.000000e+00> : vector<16x128xf32>
    %5 = tpu.matmul %3, %4, %cst {dimension_numbers = #tpu.dot_dimension_numbers<[1], [0], [0], [1], [0, 0, 1, 1], [], []>} : vector<16x32xf32>, vector<32x128xf32>, vector<16x128xf32> -> vector<16x128xf32>
    %c0_9 = arith.constant 0 : index
    %c0_10 = arith.constant 0 : index
    %6 = vector.load %arg8[%c0_9, %c0_10] : memref<1x128xf32, #tpu.memory_space<vmem>>, vector<1x128xf32>
    %7 = vector.broadcast %6 : vector<1x128xf32> to vector<16x128xf32>
    %8 = arith.addf %5, %7 : vector<16x128xf32>
    %c0_11 = arith.constant 0 : index
    %c0_12 = arith.constant 0 : index
    %9 = vector.load %arg10[%c0_11, %c0_12] : memref<14x32xf32, #tpu.memory_space<vmem>>, vector<1x32xf32>
    %c1 = arith.constant 1 : index
    %c0_13 = arith.constant 0 : index
    %10 = vector.load %arg10[%c1, %c0_13] : memref<14x32xf32, #tpu.memory_space<vmem>>, vector<1x32xf32>
    %cst_14 = arith.constant dense<0.000000e+00> : vector<16xf32>
    %11 = vector.multi_reduction <add>, %0, %cst_14 [1] : vector<16x32xf32> to vector<16xf32>
    %12 = vector.shape_cast %11 : vector<16xf32> to vector<16x1xf32>
    %cst_15 = arith.constant 3.200000e+01 : f32
    %13 = vector.broadcast %cst_15 : f32 to vector<16x1xf32>
    %14 = arith.divf %12, %13 : vector<16x1xf32>
    %15 = vector.broadcast %14 : vector<16x1xf32> to vector<16x32xf32>
    %16 = arith.subf %0, %15 : vector<16x32xf32>
    %17 = arith.mulf %16, %16 : vector<16x32xf32>
    %cst_16 = arith.constant dense<0.000000e+00> : vector<16xf32>
    %18 = vector.multi_reduction <add>, %17, %cst_16 [1] : vector<16x32xf32> to vector<16xf32>
    %19 = vector.shape_cast %18 : vector<16xf32> to vector<16x1xf32>
    %cst_17 = arith.constant 3.100000e+01 : f32
    %20 = vector.broadcast %cst_17 : f32 to vector<16x1xf32>
    %21 = arith.divf %19, %20 : vector<16x1xf32>
    %22 = vector.broadcast %14 : vector<16x1xf32> to vector<16x32xf32>
    %23 = arith.subf %0, %22 : vector<16x32xf32>
    %24 = vector.broadcast %9 : vector<1x32xf32> to vector<16x32xf32>
    %25 = arith.mulf %24, %23 : vector<16x32xf32>
    %26 = math.sqrt %21 : vector<16x1xf32>
    %cst_18 = arith.constant 9.99999997E-7 : f32
    %27 = vector.broadcast %cst_18 : f32 to vector<16x1xf32>
    %28 = arith.addf %26, %27 : vector<16x1xf32>
    %29 = vector.broadcast %28 : vector<16x1xf32> to vector<16x32xf32>
    %30 = arith.divf %25, %29 : vector<16x32xf32>
    %31 = vector.broadcast %10 : vector<1x32xf32> to vector<16x32xf32>
    %32 = arith.addf %30, %31 : vector<16x32xf32>
    %c0_19 = arith.constant 0 : index
    %c0_20 = arith.constant 0 : index
    %c0_21 = arith.constant 0 : index
    %33 = vector.load %arg5[%c0_19, %c0_20, %c0_21] : memref<2x32x256xf32, #tpu.memory_space<vmem>>, vector<1x32x96xf32>
    %34 = vector.shape_cast %33 : vector<1x32x96xf32> to vector<32x96xf32>
    %cst_22 = arith.constant dense<0.000000e+00> : vector<16x96xf32>
    %35 = tpu.matmul %32, %34, %cst_22 {dimension_numbers = #tpu.dot_dimension_numbers<[1], [0], [0], [1], [0, 0, 1, 1], [], []>} : vector<16x32xf32>, vector<32x96xf32>, vector<16x96xf32> -> vector<16x96xf32>
    %c0_23 = arith.constant 0 : index
    %c0_24 = arith.constant 0 : index
    %36 = vector.load %arg9[%c0_23, %c0_24] : memref<2x288xf32, #tpu.memory_space<vmem>>, vector<1x96xf32>
    %37 = vector.broadcast %36 : vector<1x96xf32> to vector<16x96xf32>
    %38 = arith.addf %35, %37 : vector<16x96xf32>
    %39 = vector.extract_strided_slice %38 {offsets = [0, 0], sizes = [16, 32], strides = [1, 1]} : vector<16x96xf32> to vector<16x32xf32>
    %40 = vector.extract_strided_slice %38 {offsets = [0, 32], sizes = [16, 32], strides = [1, 1]} : vector<16x96xf32> to vector<16x32xf32>
    %41 = vector.extract_strided_slice %38 {offsets = [0, 64], sizes = [16, 32], strides = [1, 1]} : vector<16x96xf32> to vector<16x32xf32>
    %c0_25 = arith.constant 0 : index
    %c0_26 = arith.constant 0 : index
    %c96 = arith.constant 96 : index
    %42 = vector.load %arg5[%c0_25, %c0_26, %c96] : memref<2x32x256xf32, #tpu.memory_space<vmem>>, vector<1x32x32xf32>
    %43 = vector.shape_cast %42 : vector<1x32x32xf32> to vector<32x32xf32>
    %c0_27 = arith.constant 0 : index
    %c96_28 = arith.constant 96 : index
    %44 = vector.load %arg9[%c0_27, %c96_28] : memref<2x288xf32, #tpu.memory_space<vmem>>, vector<1x32xf32>
    %cst_29 = arith.constant 0.353553385 : f32
    %45 = vector.broadcast %cst_29 : f32 to vector<16x32xf32>
    %46 = arith.mulf %39, %45 : vector<16x32xf32>
    %47 = vector.extract_strided_slice %46 {offsets = [0, 0], sizes = [16, 8], strides = [1, 1]} : vector<16x32xf32> to vector<16x8xf32>
    %48 = vector.extract_strided_slice %40 {offsets = [0, 0], sizes = [16, 8], strides = [1, 1]} : vector<16x32xf32> to vector<16x8xf32>
    %49 = vector.extract_strided_slice %41 {offsets = [0, 0], sizes = [16, 8], strides = [1, 1]} : vector<16x32xf32> to vector<16x8xf32>
    %cst_30 = arith.constant dense<0.000000e+00> : vector<16x16xf32>
    %50 = tpu.matmul %47, %48, %cst_30 {dimension_numbers = #tpu.dot_dimension_numbers<[1], [1], [0], [0], [0, 0, 1, 0], [], []>} : vector<16x8xf32>, vector<16x8xf32>, vector<16x16xf32> -> vector<16x16xf32>
    %51 = arith.addf %50, %1 : vector<16x16xf32>
    %cst_31 = arith.constant dense<0xFF800000> : vector<16xf32>
    %52 = vector.multi_reduction <maximumf>, %51, %cst_31 [1] : vector<16x16xf32> to vector<16xf32>
    %53 = vector.shape_cast %52 : vector<16xf32> to vector<16x1xf32>
    %54 = vector.broadcast %53 : vector<16x1xf32> to vector<16x16xf32>
    %55 = arith.subf %51, %54 : vector<16x16xf32>
    %56 = math.exp %55 : vector<16x16xf32>
    %cst_32 = arith.constant dense<0.000000e+00> : vector<16xf32>
    %57 = vector.multi_reduction <add>, %56, %cst_32 [1] : vector<16x16xf32> to vector<16xf32>
    %58 = vector.shape_cast %57 : vector<16xf32> to vector<16x1xf32>
    %59 = tpu.reciprocal %58 {approx = true} : vector<16x1xf32> -> vector<16x1xf32>
    %60 = vector.broadcast %59 : vector<16x1xf32> to vector<16x16xf32>
    %61 = arith.mulf %56, %60 : vector<16x16xf32>
    %cst_33 = arith.constant dense<0.000000e+00> : vector<16x8xf32>
    %62 = tpu.matmul %61, %49, %cst_33 {dimension_numbers = #tpu.dot_dimension_numbers<[1], [0], [0], [1], [0, 0, 1, 1], [], []>} : vector<16x16xf32>, vector<16x8xf32>, vector<16x8xf32> -> vector<16x8xf32>
    %63 = vector.extract_strided_slice %46 {offsets = [0, 8], sizes = [16, 8], strides = [1, 1]} : vector<16x32xf32> to vector<16x8xf32>
    %64 = vector.extract_strided_slice %40 {offsets = [0, 8], sizes = [16, 8], strides = [1, 1]} : vector<16x32xf32> to vector<16x8xf32>
    %65 = vector.extract_strided_slice %41 {offsets = [0, 8], sizes = [16, 8], strides = [1, 1]} : vector<16x32xf32> to vector<16x8xf32>
    %cst_34 = arith.constant dense<0.000000e+00> : vector<16x16xf32>
    %66 = tpu.matmul %63, %64, %cst_34 {dimension_numbers = #tpu.dot_dimension_numbers<[1], [1], [0], [0], [0, 0, 1, 0], [], []>} : vector<16x8xf32>, vector<16x8xf32>, vector<16x16xf32> -> vector<16x16xf32>
    %67 = arith.addf %66, %1 : vector<16x16xf32>
    %cst_35 = arith.constant dense<0xFF800000> : vector<16xf32>
    %68 = vector.multi_reduction <maximumf>, %67, %cst_35 [1] : vector<16x16xf32> to vector<16xf32>
    %69 = vector.shape_cast %68 : vector<16xf32> to vector<16x1xf32>
    %70 = vector.broadcast %69 : vector<16x1xf32> to vector<16x16xf32>
    %71 = arith.subf %67, %70 : vector<16x16xf32>
    %72 = math.exp %71 : vector<16x16xf32>
    %cst_36 = arith.constant dense<0.000000e+00> : vector<16xf32>
    %73 = vector.multi_reduction <add>, %72, %cst_36 [1] : vector<16x16xf32> to vector<16xf32>
    %74 = vector.shape_cast %73 : vector<16xf32> to vector<16x1xf32>
    %75 = tpu.reciprocal %74 {approx = true} : vector<16x1xf32> -> vector<16x1xf32>
    %76 = vector.broadcast %75 : vector<16x1xf32> to vector<16x16xf32>
    %77 = arith.mulf %72, %76 : vector<16x16xf32>
    %cst_37 = arith.constant dense<0.000000e+00> : vector<16x8xf32>
    %78 = tpu.matmul %77, %65, %cst_37 {dimension_numbers = #tpu.dot_dimension_numbers<[1], [0], [0], [1], [0, 0, 1, 1], [], []>} : vector<16x16xf32>, vector<16x8xf32>, vector<16x8xf32> -> vector<16x8xf32>
    %79 = vector.extract_strided_slice %46 {offsets = [0, 16], sizes = [16, 8], strides = [1, 1]} : vector<16x32xf32> to vector<16x8xf32>
    %80 = vector.extract_strided_slice %40 {offsets = [0, 16], sizes = [16, 8], strides = [1, 1]} : vector<16x32xf32> to vector<16x8xf32>
    %81 = vector.extract_strided_slice %41 {offsets = [0, 16], sizes = [16, 8], strides = [1, 1]} : vector<16x32xf32> to vector<16x8xf32>
    %cst_38 = arith.constant dense<0.000000e+00> : vector<16x16xf32>
    %82 = tpu.matmul %79, %80, %cst_38 {dimension_numbers = #tpu.dot_dimension_numbers<[1], [1], [0], [0], [0, 0, 1, 0], [], []>} : vector<16x8xf32>, vector<16x8xf32>, vector<16x16xf32> -> vector<16x16xf32>
    %83 = arith.addf %82, %1 : vector<16x16xf32>
    %cst_39 = arith.constant dense<0xFF800000> : vector<16xf32>
    %84 = vector.multi_reduction <maximumf>, %83, %cst_39 [1] : vector<16x16xf32> to vector<16xf32>
    %85 = vector.shape_cast %84 : vector<16xf32> to vector<16x1xf32>
    %86 = vector.broadcast %85 : vector<16x1xf32> to vector<16x16xf32>
    %87 = arith.subf %83, %86 : vector<16x16xf32>
    %88 = math.exp %87 : vector<16x16xf32>
    %cst_40 = arith.constant dense<0.000000e+00> : vector<16xf32>
    %89 = vector.multi_reduction <add>, %88, %cst_40 [1] : vector<16x16xf32> to vector<16xf32>
    %90 = vector.shape_cast %89 : vector<16xf32> to vector<16x1xf32>
    %91 = tpu.reciprocal %90 {approx = true} : vector<16x1xf32> -> vector<16x1xf32>
    %92 = vector.broadcast %91 : vector<16x1xf32> to vector<16x16xf32>
    %93 = arith.mulf %88, %92 : vector<16x16xf32>
    %cst_41 = arith.constant dense<0.000000e+00> : vector<16x8xf32>
    %94 = tpu.matmul %93, %81, %cst_41 {dimension_numbers = #tpu.dot_dimension_numbers<[1], [0], [0], [1], [0, 0, 1, 1], [], []>} : vector<16x16xf32>, vector<16x8xf32>, vector<16x8xf32> -> vector<16x8xf32>
    %95 = vector.extract_strided_slice %46 {offsets = [0, 24], sizes = [16, 8], strides = [1, 1]} : vector<16x32xf32> to vector<16x8xf32>
    %96 = vector.extract_strided_slice %40 {offsets = [0, 24], sizes = [16, 8], strides = [1, 1]} : vector<16x32xf32> to vector<16x8xf32>
    %97 = vector.extract_strided_slice %41 {offsets = [0, 24], sizes = [16, 8], strides = [1, 1]} : vector<16x32xf32> to vector<16x8xf32>
    %cst_42 = arith.constant dense<0.000000e+00> : vector<16x16xf32>
    %98 = tpu.matmul %95, %96, %cst_42 {dimension_numbers = #tpu.dot_dimension_numbers<[1], [1], [0], [0], [0, 0, 1, 0], [], []>} : vector<16x8xf32>, vector<16x8xf32>, vector<16x16xf32> -> vector<16x16xf32>
    %99 = arith.addf %98, %1 : vector<16x16xf32>
    %cst_43 = arith.constant dense<0xFF800000> : vector<16xf32>
    %100 = vector.multi_reduction <maximumf>, %99, %cst_43 [1] : vector<16x16xf32> to vector<16xf32>
    %101 = vector.shape_cast %100 : vector<16xf32> to vector<16x1xf32>
    %102 = vector.broadcast %101 : vector<16x1xf32> to vector<16x16xf32>
    %103 = arith.subf %99, %102 : vector<16x16xf32>
    %104 = math.exp %103 : vector<16x16xf32>
    %cst_44 = arith.constant dense<0.000000e+00> : vector<16xf32>
    %105 = vector.multi_reduction <add>, %104, %cst_44 [1] : vector<16x16xf32> to vector<16xf32>
    %106 = vector.shape_cast %105 : vector<16xf32> to vector<16x1xf32>
    %107 = tpu.reciprocal %106 {approx = true} : vector<16x1xf32> -> vector<16x1xf32>
    %108 = vector.broadcast %107 : vector<16x1xf32> to vector<16x16xf32>
    %109 = arith.mulf %104, %108 : vector<16x16xf32>
    %cst_45 = arith.constant dense<0.000000e+00> : vector<16x8xf32>
    %110 = tpu.matmul %109, %97, %cst_45 {dimension_numbers = #tpu.dot_dimension_numbers<[1], [0], [0], [1], [0, 0, 1, 1], [], []>} : vector<16x16xf32>, vector<16x8xf32>, vector<16x8xf32> -> vector<16x8xf32>
    %111 = tpu.concatenate %62, %78, %94, %110 in 1 : vector<16x8xf32>, vector<16x8xf32>, vector<16x8xf32>, vector<16x8xf32> -> vector<16x32xf32>
    %cst_46 = arith.constant dense<0.000000e+00> : vector<16x32xf32>
    %112 = tpu.matmul %111, %43, %cst_46 {dimension_numbers = #tpu.dot_dimension_numbers<[1], [0], [0], [1], [0, 0, 1, 1], [], []>} : vector<16x32xf32>, vector<32x32xf32>, vector<16x32xf32> -> vector<16x32xf32>
    %113 = vector.broadcast %44 : vector<1x32xf32> to vector<16x32xf32>
    %114 = arith.addf %112, %113 : vector<16x32xf32>
    %115 = arith.addf %0, %114 : vector<16x32xf32>
    %c2 = arith.constant 2 : index
    %c0_47 = arith.constant 0 : index
    %116 = vector.load %arg10[%c2, %c0_47] : memref<14x32xf32, #tpu.memory_space<vmem>>, vector<1x32xf32>
    %c3 = arith.constant 3 : index
    %c0_48 = arith.constant 0 : index
    %117 = vector.load %arg10[%c3, %c0_48] : memref<14x32xf32, #tpu.memory_space<vmem>>, vector<1x32xf32>
    %cst_49 = arith.constant dense<0.000000e+00> : vector<16xf32>
    %118 = vector.multi_reduction <add>, %115, %cst_49 [1] : vector<16x32xf32> to vector<16xf32>
    %119 = vector.shape_cast %118 : vector<16xf32> to vector<16x1xf32>
    %cst_50 = arith.constant 3.200000e+01 : f32
    %120 = vector.broadcast %cst_50 : f32 to vector<16x1xf32>
    %121 = arith.divf %119, %120 : vector<16x1xf32>
    %122 = vector.broadcast %121 : vector<16x1xf32> to vector<16x32xf32>
    %123 = arith.subf %115, %122 : vector<16x32xf32>
    %124 = arith.mulf %123, %123 : vector<16x32xf32>
    %cst_51 = arith.constant dense<0.000000e+00> : vector<16xf32>
    %125 = vector.multi_reduction <add>, %124, %cst_51 [1] : vector<16x32xf32> to vector<16xf32>
    %126 = vector.shape_cast %125 : vector<16xf32> to vector<16x1xf32>
    %cst_52 = arith.constant 3.100000e+01 : f32
    %127 = vector.broadcast %cst_52 : f32 to vector<16x1xf32>
    %128 = arith.divf %126, %127 : vector<16x1xf32>
    %129 = vector.broadcast %121 : vector<16x1xf32> to vector<16x32xf32>
    %130 = arith.subf %115, %129 : vector<16x32xf32>
    %131 = vector.broadcast %116 : vector<1x32xf32> to vector<16x32xf32>
    %132 = arith.mulf %131, %130 : vector<16x32xf32>
    %133 = math.sqrt %128 : vector<16x1xf32>
    %cst_53 = arith.constant 9.99999997E-7 : f32
    %134 = vector.broadcast %cst_53 : f32 to vector<16x1xf32>
    %135 = arith.addf %133, %134 : vector<16x1xf32>
    %136 = vector.broadcast %135 : vector<16x1xf32> to vector<16x32xf32>
    %137 = arith.divf %132, %136 : vector<16x32xf32>
    %138 = vector.broadcast %117 : vector<1x32xf32> to vector<16x32xf32>
    %139 = arith.addf %137, %138 : vector<16x32xf32>
    %c0_54 = arith.constant 0 : index
    %c0_55 = arith.constant 0 : index
    %c128 = arith.constant 128 : index
    %140 = vector.load %arg5[%c0_54, %c0_55, %c128] : memref<2x32x256xf32, #tpu.memory_space<vmem>>, vector<1x32x32xf32>
    %141 = vector.shape_cast %140 : vector<1x32x32xf32> to vector<32x32xf32>
    %cst_56 = arith.constant dense<0.000000e+00> : vector<16x32xf32>
    %142 = tpu.matmul %139, %141, %cst_56 {dimension_numbers = #tpu.dot_dimension_numbers<[1], [0], [0], [1], [0, 0, 1, 1], [], []>} : vector<16x32xf32>, vector<32x32xf32>, vector<16x32xf32> -> vector<16x32xf32>
    %c0_57 = arith.constant 0 : index
    %c128_58 = arith.constant 128 : index
    %143 = vector.load %arg9[%c0_57, %c128_58] : memref<2x288xf32, #tpu.memory_space<vmem>>, vector<1x32xf32>
    %144 = vector.broadcast %143 : vector<1x32xf32> to vector<16x32xf32>
    %145 = arith.addf %142, %144 : vector<16x32xf32>
    %146 = vector.extract_strided_slice %8 {offsets = [0, 0], sizes = [16, 32], strides = [1, 1]} : vector<16x128xf32> to vector<16x32xf32>
    %147 = vector.extract_strided_slice %8 {offsets = [0, 32], sizes = [16, 32], strides = [1, 1]} : vector<16x128xf32> to vector<16x32xf32>
    %c0_59 = arith.constant 0 : index
    %c0_60 = arith.constant 0 : index
    %c160 = arith.constant 160 : index
    %148 = vector.load %arg5[%c0_59, %c0_60, %c160] : memref<2x32x256xf32, #tpu.memory_space<vmem>>, vector<1x32x32xf32>
    %149 = vector.shape_cast %148 : vector<1x32x32xf32> to vector<32x32xf32>
    %c0_61 = arith.constant 0 : index
    %c160_62 = arith.constant 160 : index
    %150 = vector.load %arg9[%c0_61, %c160_62] : memref<2x288xf32, #tpu.memory_space<vmem>>, vector<1x32xf32>
    %cst_63 = arith.constant 0.353553385 : f32
    %151 = vector.broadcast %cst_63 : f32 to vector<16x32xf32>
    %152 = arith.mulf %145, %151 : vector<16x32xf32>
    %153 = vector.extract_strided_slice %152 {offsets = [0, 0], sizes = [16, 8], strides = [1, 1]} : vector<16x32xf32> to vector<16x8xf32>
    %154 = vector.extract_strided_slice %146 {offsets = [0, 0], sizes = [16, 8], strides = [1, 1]} : vector<16x32xf32> to vector<16x8xf32>
    %155 = vector.extract_strided_slice %147 {offsets = [0, 0], sizes = [16, 8], strides = [1, 1]} : vector<16x32xf32> to vector<16x8xf32>
    %cst_64 = arith.constant dense<0.000000e+00> : vector<16x16xf32>
    %156 = tpu.matmul %153, %154, %cst_64 {dimension_numbers = #tpu.dot_dimension_numbers<[1], [1], [0], [0], [0, 0, 1, 0], [], []>} : vector<16x8xf32>, vector<16x8xf32>, vector<16x16xf32> -> vector<16x16xf32>
    %157 = arith.addf %156, %2 : vector<16x16xf32>
    %cst_65 = arith.constant dense<0xFF800000> : vector<16xf32>
    %158 = vector.multi_reduction <maximumf>, %157, %cst_65 [1] : vector<16x16xf32> to vector<16xf32>
    %159 = vector.shape_cast %158 : vector<16xf32> to vector<16x1xf32>
    %160 = vector.broadcast %159 : vector<16x1xf32> to vector<16x16xf32>
    %161 = arith.subf %157, %160 : vector<16x16xf32>
    %162 = math.exp %161 : vector<16x16xf32>
    %cst_66 = arith.constant dense<0.000000e+00> : vector<16xf32>
    %163 = vector.multi_reduction <add>, %162, %cst_66 [1] : vector<16x16xf32> to vector<16xf32>
    %164 = vector.shape_cast %163 : vector<16xf32> to vector<16x1xf32>
    %165 = tpu.reciprocal %164 {approx = true} : vector<16x1xf32> -> vector<16x1xf32>
    %166 = vector.broadcast %165 : vector<16x1xf32> to vector<16x16xf32>
    %167 = arith.mulf %162, %166 : vector<16x16xf32>
    %cst_67 = arith.constant dense<0.000000e+00> : vector<16x8xf32>
    %168 = tpu.matmul %167, %155, %cst_67 {dimension_numbers = #tpu.dot_dimension_numbers<[1], [0], [0], [1], [0, 0, 1, 1], [], []>} : vector<16x16xf32>, vector<16x8xf32>, vector<16x8xf32> -> vector<16x8xf32>
    %169 = vector.extract_strided_slice %152 {offsets = [0, 8], sizes = [16, 8], strides = [1, 1]} : vector<16x32xf32> to vector<16x8xf32>
    %170 = vector.extract_strided_slice %146 {offsets = [0, 8], sizes = [16, 8], strides = [1, 1]} : vector<16x32xf32> to vector<16x8xf32>
    %171 = vector.extract_strided_slice %147 {offsets = [0, 8], sizes = [16, 8], strides = [1, 1]} : vector<16x32xf32> to vector<16x8xf32>
    %cst_68 = arith.constant dense<0.000000e+00> : vector<16x16xf32>
    %172 = tpu.matmul %169, %170, %cst_68 {dimension_numbers = #tpu.dot_dimension_numbers<[1], [1], [0], [0], [0, 0, 1, 0], [], []>} : vector<16x8xf32>, vector<16x8xf32>, vector<16x16xf32> -> vector<16x16xf32>
    %173 = arith.addf %172, %2 : vector<16x16xf32>
    %cst_69 = arith.constant dense<0xFF800000> : vector<16xf32>
    %174 = vector.multi_reduction <maximumf>, %173, %cst_69 [1] : vector<16x16xf32> to vector<16xf32>
    %175 = vector.shape_cast %174 : vector<16xf32> to vector<16x1xf32>
    %176 = vector.broadcast %175 : vector<16x1xf32> to vector<16x16xf32>
    %177 = arith.subf %173, %176 : vector<16x16xf32>
    %178 = math.exp %177 : vector<16x16xf32>
    %cst_70 = arith.constant dense<0.000000e+00> : vector<16xf32>
    %179 = vector.multi_reduction <add>, %178, %cst_70 [1] : vector<16x16xf32> to vector<16xf32>
    %180 = vector.shape_cast %179 : vector<16xf32> to vector<16x1xf32>
    %181 = tpu.reciprocal %180 {approx = true} : vector<16x1xf32> -> vector<16x1xf32>
    %182 = vector.broadcast %181 : vector<16x1xf32> to vector<16x16xf32>
    %183 = arith.mulf %178, %182 : vector<16x16xf32>
    %cst_71 = arith.constant dense<0.000000e+00> : vector<16x8xf32>
    %184 = tpu.matmul %183, %171, %cst_71 {dimension_numbers = #tpu.dot_dimension_numbers<[1], [0], [0], [1], [0, 0, 1, 1], [], []>} : vector<16x16xf32>, vector<16x8xf32>, vector<16x8xf32> -> vector<16x8xf32>
    %185 = vector.extract_strided_slice %152 {offsets = [0, 16], sizes = [16, 8], strides = [1, 1]} : vector<16x32xf32> to vector<16x8xf32>
    %186 = vector.extract_strided_slice %146 {offsets = [0, 16], sizes = [16, 8], strides = [1, 1]} : vector<16x32xf32> to vector<16x8xf32>
    %187 = vector.extract_strided_slice %147 {offsets = [0, 16], sizes = [16, 8], strides = [1, 1]} : vector<16x32xf32> to vector<16x8xf32>
    %cst_72 = arith.constant dense<0.000000e+00> : vector<16x16xf32>
    %188 = tpu.matmul %185, %186, %cst_72 {dimension_numbers = #tpu.dot_dimension_numbers<[1], [1], [0], [0], [0, 0, 1, 0], [], []>} : vector<16x8xf32>, vector<16x8xf32>, vector<16x16xf32> -> vector<16x16xf32>
    %189 = arith.addf %188, %2 : vector<16x16xf32>
    %cst_73 = arith.constant dense<0xFF800000> : vector<16xf32>
    %190 = vector.multi_reduction <maximumf>, %189, %cst_73 [1] : vector<16x16xf32> to vector<16xf32>
    %191 = vector.shape_cast %190 : vector<16xf32> to vector<16x1xf32>
    %192 = vector.broadcast %191 : vector<16x1xf32> to vector<16x16xf32>
    %193 = arith.subf %189, %192 : vector<16x16xf32>
    %194 = math.exp %193 : vector<16x16xf32>
    %cst_74 = arith.constant dense<0.000000e+00> : vector<16xf32>
    %195 = vector.multi_reduction <add>, %194, %cst_74 [1] : vector<16x16xf32> to vector<16xf32>
    %196 = vector.shape_cast %195 : vector<16xf32> to vector<16x1xf32>
    %197 = tpu.reciprocal %196 {approx = true} : vector<16x1xf32> -> vector<16x1xf32>
    %198 = vector.broadcast %197 : vector<16x1xf32> to vector<16x16xf32>
    %199 = arith.mulf %194, %198 : vector<16x16xf32>
    %cst_75 = arith.constant dense<0.000000e+00> : vector<16x8xf32>
    %200 = tpu.matmul %199, %187, %cst_75 {dimension_numbers = #tpu.dot_dimension_numbers<[1], [0], [0], [1], [0, 0, 1, 1], [], []>} : vector<16x16xf32>, vector<16x8xf32>, vector<16x8xf32> -> vector<16x8xf32>
    %201 = vector.extract_strided_slice %152 {offsets = [0, 24], sizes = [16, 8], strides = [1, 1]} : vector<16x32xf32> to vector<16x8xf32>
    %202 = vector.extract_strided_slice %146 {offsets = [0, 24], sizes = [16, 8], strides = [1, 1]} : vector<16x32xf32> to vector<16x8xf32>
    %203 = vector.extract_strided_slice %147 {offsets = [0, 24], sizes = [16, 8], strides = [1, 1]} : vector<16x32xf32> to vector<16x8xf32>
    %cst_76 = arith.constant dense<0.000000e+00> : vector<16x16xf32>
    %204 = tpu.matmul %201, %202, %cst_76 {dimension_numbers = #tpu.dot_dimension_numbers<[1], [1], [0], [0], [0, 0, 1, 0], [], []>} : vector<16x8xf32>, vector<16x8xf32>, vector<16x16xf32> -> vector<16x16xf32>
    %205 = arith.addf %204, %2 : vector<16x16xf32>
    %cst_77 = arith.constant dense<0xFF800000> : vector<16xf32>
    %206 = vector.multi_reduction <maximumf>, %205, %cst_77 [1] : vector<16x16xf32> to vector<16xf32>
    %207 = vector.shape_cast %206 : vector<16xf32> to vector<16x1xf32>
    %208 = vector.broadcast %207 : vector<16x1xf32> to vector<16x16xf32>
    %209 = arith.subf %205, %208 : vector<16x16xf32>
    %210 = math.exp %209 : vector<16x16xf32>
    %cst_78 = arith.constant dense<0.000000e+00> : vector<16xf32>
    %211 = vector.multi_reduction <add>, %210, %cst_78 [1] : vector<16x16xf32> to vector<16xf32>
    %212 = vector.shape_cast %211 : vector<16xf32> to vector<16x1xf32>
    %213 = tpu.reciprocal %212 {approx = true} : vector<16x1xf32> -> vector<16x1xf32>
    %214 = vector.broadcast %213 : vector<16x1xf32> to vector<16x16xf32>
    %215 = arith.mulf %210, %214 : vector<16x16xf32>
    %cst_79 = arith.constant dense<0.000000e+00> : vector<16x8xf32>
    %216 = tpu.matmul %215, %203, %cst_79 {dimension_numbers = #tpu.dot_dimension_numbers<[1], [0], [0], [1], [0, 0, 1, 1], [], []>} : vector<16x16xf32>, vector<16x8xf32>, vector<16x8xf32> -> vector<16x8xf32>
    %217 = tpu.concatenate %168, %184, %200, %216 in 1 : vector<16x8xf32>, vector<16x8xf32>, vector<16x8xf32>, vector<16x8xf32> -> vector<16x32xf32>
    %cst_80 = arith.constant dense<0.000000e+00> : vector<16x32xf32>
    %218 = tpu.matmul %217, %149, %cst_80 {dimension_numbers = #tpu.dot_dimension_numbers<[1], [0], [0], [1], [0, 0, 1, 1], [], []>} : vector<16x32xf32>, vector<32x32xf32>, vector<16x32xf32> -> vector<16x32xf32>
    %219 = vector.broadcast %150 : vector<1x32xf32> to vector<16x32xf32>
    %220 = arith.addf %218, %219 : vector<16x32xf32>
    %221 = arith.addf %115, %220 : vector<16x32xf32>
    %c4 = arith.constant 4 : index
    %c0_81 = arith.constant 0 : index
    %222 = vector.load %arg10[%c4, %c0_81] : memref<14x32xf32, #tpu.memory_space<vmem>>, vector<1x32xf32>
    %c5 = arith.constant 5 : index
    %c0_82 = arith.constant 0 : index
    %223 = vector.load %arg10[%c5, %c0_82] : memref<14x32xf32, #tpu.memory_space<vmem>>, vector<1x32xf32>
    %cst_83 = arith.constant dense<0.000000e+00> : vector<16xf32>
    %224 = vector.multi_reduction <add>, %221, %cst_83 [1] : vector<16x32xf32> to vector<16xf32>
    %225 = vector.shape_cast %224 : vector<16xf32> to vector<16x1xf32>
    %cst_84 = arith.constant 3.200000e+01 : f32
    %226 = vector.broadcast %cst_84 : f32 to vector<16x1xf32>
    %227 = arith.divf %225, %226 : vector<16x1xf32>
    %228 = vector.broadcast %227 : vector<16x1xf32> to vector<16x32xf32>
    %229 = arith.subf %221, %228 : vector<16x32xf32>
    %230 = arith.mulf %229, %229 : vector<16x32xf32>
    %cst_85 = arith.constant dense<0.000000e+00> : vector<16xf32>
    %231 = vector.multi_reduction <add>, %230, %cst_85 [1] : vector<16x32xf32> to vector<16xf32>
    %232 = vector.shape_cast %231 : vector<16xf32> to vector<16x1xf32>
    %cst_86 = arith.constant 3.100000e+01 : f32
    %233 = vector.broadcast %cst_86 : f32 to vector<16x1xf32>
    %234 = arith.divf %232, %233 : vector<16x1xf32>
    %235 = vector.broadcast %227 : vector<16x1xf32> to vector<16x32xf32>
    %236 = arith.subf %221, %235 : vector<16x32xf32>
    %237 = vector.broadcast %222 : vector<1x32xf32> to vector<16x32xf32>
    %238 = arith.mulf %237, %236 : vector<16x32xf32>
    %239 = math.sqrt %234 : vector<16x1xf32>
    %cst_87 = arith.constant 9.99999997E-7 : f32
    %240 = vector.broadcast %cst_87 : f32 to vector<16x1xf32>
    %241 = arith.addf %239, %240 : vector<16x1xf32>
    %242 = vector.broadcast %241 : vector<16x1xf32> to vector<16x32xf32>
    %243 = arith.divf %238, %242 : vector<16x32xf32>
    %244 = vector.broadcast %223 : vector<1x32xf32> to vector<16x32xf32>
    %245 = arith.addf %243, %244 : vector<16x32xf32>
    %c0_88 = arith.constant 0 : index
    %c0_89 = arith.constant 0 : index
    %c192 = arith.constant 192 : index
    %246 = vector.load %arg5[%c0_88, %c0_89, %c192] : memref<2x32x256xf32, #tpu.memory_space<vmem>>, vector<1x32x64xf32>
    %247 = vector.shape_cast %246 : vector<1x32x64xf32> to vector<32x64xf32>
    %cst_90 = arith.constant dense<0.000000e+00> : vector<16x64xf32>
    %248 = tpu.matmul %245, %247, %cst_90 {dimension_numbers = #tpu.dot_dimension_numbers<[1], [0], [0], [1], [0, 0, 1, 1], [], []>} : vector<16x32xf32>, vector<32x64xf32>, vector<16x64xf32> -> vector<16x64xf32>
    %c0_91 = arith.constant 0 : index
    %c192_92 = arith.constant 192 : index
    %249 = vector.load %arg9[%c0_91, %c192_92] : memref<2x288xf32, #tpu.memory_space<vmem>>, vector<1x64xf32>
    %250 = vector.broadcast %249 : vector<1x64xf32> to vector<16x64xf32>
    %251 = arith.addf %248, %250 : vector<16x64xf32>
    %cst_93 = arith.constant 0.000000e+00 : f32
    %252 = vector.broadcast %cst_93 : f32 to vector<16x64xf32>
    %253 = arith.maximumf %251, %252 : vector<16x64xf32>
    %c0_94 = arith.constant 0 : index
    %c0_95 = arith.constant 0 : index
    %c0_96 = arith.constant 0 : index
    %254 = vector.load %arg6[%c0_94, %c0_95, %c0_96] : memref<2x64x32xf32, #tpu.memory_space<vmem>>, vector<1x64x32xf32>
    %255 = vector.shape_cast %254 : vector<1x64x32xf32> to vector<64x32xf32>
    %cst_97 = arith.constant dense<0.000000e+00> : vector<16x32xf32>
    %256 = tpu.matmul %253, %255, %cst_97 {dimension_numbers = #tpu.dot_dimension_numbers<[1], [0], [0], [1], [0, 0, 1, 1], [], []>} : vector<16x64xf32>, vector<64x32xf32>, vector<16x32xf32> -> vector<16x32xf32>
    %c0_98 = arith.constant 0 : index
    %c256 = arith.constant 256 : index
    %257 = vector.load %arg9[%c0_98, %c256] : memref<2x288xf32, #tpu.memory_space<vmem>>, vector<1x32xf32>
    %258 = vector.broadcast %257 : vector<1x32xf32> to vector<16x32xf32>
    %259 = arith.addf %256, %258 : vector<16x32xf32>
    %260 = arith.addf %221, %259 : vector<16x32xf32>
    %c6 = arith.constant 6 : index
    %c0_99 = arith.constant 0 : index
    %261 = vector.load %arg10[%c6, %c0_99] : memref<14x32xf32, #tpu.memory_space<vmem>>, vector<1x32xf32>
    %c7 = arith.constant 7 : index
    %c0_100 = arith.constant 0 : index
    %262 = vector.load %arg10[%c7, %c0_100] : memref<14x32xf32, #tpu.memory_space<vmem>>, vector<1x32xf32>
    %cst_101 = arith.constant dense<0.000000e+00> : vector<16xf32>
    %263 = vector.multi_reduction <add>, %260, %cst_101 [1] : vector<16x32xf32> to vector<16xf32>
    %264 = vector.shape_cast %263 : vector<16xf32> to vector<16x1xf32>
    %cst_102 = arith.constant 3.200000e+01 : f32
    %265 = vector.broadcast %cst_102 : f32 to vector<16x1xf32>
    %266 = arith.divf %264, %265 : vector<16x1xf32>
    %267 = vector.broadcast %266 : vector<16x1xf32> to vector<16x32xf32>
    %268 = arith.subf %260, %267 : vector<16x32xf32>
    %269 = arith.mulf %268, %268 : vector<16x32xf32>
    %cst_103 = arith.constant dense<0.000000e+00> : vector<16xf32>
    %270 = vector.multi_reduction <add>, %269, %cst_103 [1] : vector<16x32xf32> to vector<16xf32>
    %271 = vector.shape_cast %270 : vector<16xf32> to vector<16x1xf32>
    %cst_104 = arith.constant 3.100000e+01 : f32
    %272 = vector.broadcast %cst_104 : f32 to vector<16x1xf32>
    %273 = arith.divf %271, %272 : vector<16x1xf32>
    %274 = vector.broadcast %266 : vector<16x1xf32> to vector<16x32xf32>
    %275 = arith.subf %260, %274 : vector<16x32xf32>
    %276 = vector.broadcast %261 : vector<1x32xf32> to vector<16x32xf32>
    %277 = arith.mulf %276, %275 : vector<16x32xf32>
    %278 = math.sqrt %273 : vector<16x1xf32>
    %cst_105 = arith.constant 9.99999997E-7 : f32
    %279 = vector.broadcast %cst_105 : f32 to vector<16x1xf32>
    %280 = arith.addf %278, %279 : vector<16x1xf32>
    %281 = vector.broadcast %280 : vector<16x1xf32> to vector<16x32xf32>
    %282 = arith.divf %277, %281 : vector<16x32xf32>
    %283 = vector.broadcast %262 : vector<1x32xf32> to vector<16x32xf32>
    %284 = arith.addf %282, %283 : vector<16x32xf32>
    %c1_106 = arith.constant 1 : index
    %c0_107 = arith.constant 0 : index
    %c0_108 = arith.constant 0 : index
    %285 = vector.load %arg5[%c1_106, %c0_107, %c0_108] : memref<2x32x256xf32, #tpu.memory_space<vmem>>, vector<1x32x96xf32>
    %286 = vector.shape_cast %285 : vector<1x32x96xf32> to vector<32x96xf32>
    %cst_109 = arith.constant dense<0.000000e+00> : vector<16x96xf32>
    %287 = tpu.matmul %284, %286, %cst_109 {dimension_numbers = #tpu.dot_dimension_numbers<[1], [0], [0], [1], [0, 0, 1, 1], [], []>} : vector<16x32xf32>, vector<32x96xf32>, vector<16x96xf32> -> vector<16x96xf32>
    %c1_110 = arith.constant 1 : index
    %c0_111 = arith.constant 0 : index
    %288 = vector.load %arg9[%c1_110, %c0_111] : memref<2x288xf32, #tpu.memory_space<vmem>>, vector<1x96xf32>
    %289 = vector.broadcast %288 : vector<1x96xf32> to vector<16x96xf32>
    %290 = arith.addf %287, %289 : vector<16x96xf32>
    %291 = vector.extract_strided_slice %290 {offsets = [0, 0], sizes = [16, 32], strides = [1, 1]} : vector<16x96xf32> to vector<16x32xf32>
    %292 = vector.extract_strided_slice %290 {offsets = [0, 32], sizes = [16, 32], strides = [1, 1]} : vector<16x96xf32> to vector<16x32xf32>
    %293 = vector.extract_strided_slice %290 {offsets = [0, 64], sizes = [16, 32], strides = [1, 1]} : vector<16x96xf32> to vector<16x32xf32>
    %c1_112 = arith.constant 1 : index
    %c0_113 = arith.constant 0 : index
    %c96_114 = arith.constant 96 : index
    %294 = vector.load %arg5[%c1_112, %c0_113, %c96_114] : memref<2x32x256xf32, #tpu.memory_space<vmem>>, vector<1x32x32xf32>
    %295 = vector.shape_cast %294 : vector<1x32x32xf32> to vector<32x32xf32>
    %c1_115 = arith.constant 1 : index
    %c96_116 = arith.constant 96 : index
    %296 = vector.load %arg9[%c1_115, %c96_116] : memref<2x288xf32, #tpu.memory_space<vmem>>, vector<1x32xf32>
    %cst_117 = arith.constant 0.353553385 : f32
    %297 = vector.broadcast %cst_117 : f32 to vector<16x32xf32>
    %298 = arith.mulf %291, %297 : vector<16x32xf32>
    %299 = vector.extract_strided_slice %298 {offsets = [0, 0], sizes = [16, 8], strides = [1, 1]} : vector<16x32xf32> to vector<16x8xf32>
    %300 = vector.extract_strided_slice %292 {offsets = [0, 0], sizes = [16, 8], strides = [1, 1]} : vector<16x32xf32> to vector<16x8xf32>
    %301 = vector.extract_strided_slice %293 {offsets = [0, 0], sizes = [16, 8], strides = [1, 1]} : vector<16x32xf32> to vector<16x8xf32>
    %cst_118 = arith.constant dense<0.000000e+00> : vector<16x16xf32>
    %302 = tpu.matmul %299, %300, %cst_118 {dimension_numbers = #tpu.dot_dimension_numbers<[1], [1], [0], [0], [0, 0, 1, 0], [], []>} : vector<16x8xf32>, vector<16x8xf32>, vector<16x16xf32> -> vector<16x16xf32>
    %303 = arith.addf %302, %1 : vector<16x16xf32>
    %cst_119 = arith.constant dense<0xFF800000> : vector<16xf32>
    %304 = vector.multi_reduction <maximumf>, %303, %cst_119 [1] : vector<16x16xf32> to vector<16xf32>
    %305 = vector.shape_cast %304 : vector<16xf32> to vector<16x1xf32>
    %306 = vector.broadcast %305 : vector<16x1xf32> to vector<16x16xf32>
    %307 = arith.subf %303, %306 : vector<16x16xf32>
    %308 = math.exp %307 : vector<16x16xf32>
    %cst_120 = arith.constant dense<0.000000e+00> : vector<16xf32>
    %309 = vector.multi_reduction <add>, %308, %cst_120 [1] : vector<16x16xf32> to vector<16xf32>
    %310 = vector.shape_cast %309 : vector<16xf32> to vector<16x1xf32>
    %311 = tpu.reciprocal %310 {approx = true} : vector<16x1xf32> -> vector<16x1xf32>
    %312 = vector.broadcast %311 : vector<16x1xf32> to vector<16x16xf32>
    %313 = arith.mulf %308, %312 : vector<16x16xf32>
    %cst_121 = arith.constant dense<0.000000e+00> : vector<16x8xf32>
    %314 = tpu.matmul %313, %301, %cst_121 {dimension_numbers = #tpu.dot_dimension_numbers<[1], [0], [0], [1], [0, 0, 1, 1], [], []>} : vector<16x16xf32>, vector<16x8xf32>, vector<16x8xf32> -> vector<16x8xf32>
    %315 = vector.extract_strided_slice %298 {offsets = [0, 8], sizes = [16, 8], strides = [1, 1]} : vector<16x32xf32> to vector<16x8xf32>
    %316 = vector.extract_strided_slice %292 {offsets = [0, 8], sizes = [16, 8], strides = [1, 1]} : vector<16x32xf32> to vector<16x8xf32>
    %317 = vector.extract_strided_slice %293 {offsets = [0, 8], sizes = [16, 8], strides = [1, 1]} : vector<16x32xf32> to vector<16x8xf32>
    %cst_122 = arith.constant dense<0.000000e+00> : vector<16x16xf32>
    %318 = tpu.matmul %315, %316, %cst_122 {dimension_numbers = #tpu.dot_dimension_numbers<[1], [1], [0], [0], [0, 0, 1, 0], [], []>} : vector<16x8xf32>, vector<16x8xf32>, vector<16x16xf32> -> vector<16x16xf32>
    %319 = arith.addf %318, %1 : vector<16x16xf32>
    %cst_123 = arith.constant dense<0xFF800000> : vector<16xf32>
    %320 = vector.multi_reduction <maximumf>, %319, %cst_123 [1] : vector<16x16xf32> to vector<16xf32>
    %321 = vector.shape_cast %320 : vector<16xf32> to vector<16x1xf32>
    %322 = vector.broadcast %321 : vector<16x1xf32> to vector<16x16xf32>
    %323 = arith.subf %319, %322 : vector<16x16xf32>
    %324 = math.exp %323 : vector<16x16xf32>
    %cst_124 = arith.constant dense<0.000000e+00> : vector<16xf32>
    %325 = vector.multi_reduction <add>, %324, %cst_124 [1] : vector<16x16xf32> to vector<16xf32>
    %326 = vector.shape_cast %325 : vector<16xf32> to vector<16x1xf32>
    %327 = tpu.reciprocal %326 {approx = true} : vector<16x1xf32> -> vector<16x1xf32>
    %328 = vector.broadcast %327 : vector<16x1xf32> to vector<16x16xf32>
    %329 = arith.mulf %324, %328 : vector<16x16xf32>
    %cst_125 = arith.constant dense<0.000000e+00> : vector<16x8xf32>
    %330 = tpu.matmul %329, %317, %cst_125 {dimension_numbers = #tpu.dot_dimension_numbers<[1], [0], [0], [1], [0, 0, 1, 1], [], []>} : vector<16x16xf32>, vector<16x8xf32>, vector<16x8xf32> -> vector<16x8xf32>
    %331 = vector.extract_strided_slice %298 {offsets = [0, 16], sizes = [16, 8], strides = [1, 1]} : vector<16x32xf32> to vector<16x8xf32>
    %332 = vector.extract_strided_slice %292 {offsets = [0, 16], sizes = [16, 8], strides = [1, 1]} : vector<16x32xf32> to vector<16x8xf32>
    %333 = vector.extract_strided_slice %293 {offsets = [0, 16], sizes = [16, 8], strides = [1, 1]} : vector<16x32xf32> to vector<16x8xf32>
    %cst_126 = arith.constant dense<0.000000e+00> : vector<16x16xf32>
    %334 = tpu.matmul %331, %332, %cst_126 {dimension_numbers = #tpu.dot_dimension_numbers<[1], [1], [0], [0], [0, 0, 1, 0], [], []>} : vector<16x8xf32>, vector<16x8xf32>, vector<16x16xf32> -> vector<16x16xf32>
    %335 = arith.addf %334, %1 : vector<16x16xf32>
    %cst_127 = arith.constant dense<0xFF800000> : vector<16xf32>
    %336 = vector.multi_reduction <maximumf>, %335, %cst_127 [1] : vector<16x16xf32> to vector<16xf32>
    %337 = vector.shape_cast %336 : vector<16xf32> to vector<16x1xf32>
    %338 = vector.broadcast %337 : vector<16x1xf32> to vector<16x16xf32>
    %339 = arith.subf %335, %338 : vector<16x16xf32>
    %340 = math.exp %339 : vector<16x16xf32>
    %cst_128 = arith.constant dense<0.000000e+00> : vector<16xf32>
    %341 = vector.multi_reduction <add>, %340, %cst_128 [1] : vector<16x16xf32> to vector<16xf32>
    %342 = vector.shape_cast %341 : vector<16xf32> to vector<16x1xf32>
    %343 = tpu.reciprocal %342 {approx = true} : vector<16x1xf32> -> vector<16x1xf32>
    %344 = vector.broadcast %343 : vector<16x1xf32> to vector<16x16xf32>
    %345 = arith.mulf %340, %344 : vector<16x16xf32>
    %cst_129 = arith.constant dense<0.000000e+00> : vector<16x8xf32>
    %346 = tpu.matmul %345, %333, %cst_129 {dimension_numbers = #tpu.dot_dimension_numbers<[1], [0], [0], [1], [0, 0, 1, 1], [], []>} : vector<16x16xf32>, vector<16x8xf32>, vector<16x8xf32> -> vector<16x8xf32>
    %347 = vector.extract_strided_slice %298 {offsets = [0, 24], sizes = [16, 8], strides = [1, 1]} : vector<16x32xf32> to vector<16x8xf32>
    %348 = vector.extract_strided_slice %292 {offsets = [0, 24], sizes = [16, 8], strides = [1, 1]} : vector<16x32xf32> to vector<16x8xf32>
    %349 = vector.extract_strided_slice %293 {offsets = [0, 24], sizes = [16, 8], strides = [1, 1]} : vector<16x32xf32> to vector<16x8xf32>
    %cst_130 = arith.constant dense<0.000000e+00> : vector<16x16xf32>
    %350 = tpu.matmul %347, %348, %cst_130 {dimension_numbers = #tpu.dot_dimension_numbers<[1], [1], [0], [0], [0, 0, 1, 0], [], []>} : vector<16x8xf32>, vector<16x8xf32>, vector<16x16xf32> -> vector<16x16xf32>
    %351 = arith.addf %350, %1 : vector<16x16xf32>
    %cst_131 = arith.constant dense<0xFF800000> : vector<16xf32>
    %352 = vector.multi_reduction <maximumf>, %351, %cst_131 [1] : vector<16x16xf32> to vector<16xf32>
    %353 = vector.shape_cast %352 : vector<16xf32> to vector<16x1xf32>
    %354 = vector.broadcast %353 : vector<16x1xf32> to vector<16x16xf32>
    %355 = arith.subf %351, %354 : vector<16x16xf32>
    %356 = math.exp %355 : vector<16x16xf32>
    %cst_132 = arith.constant dense<0.000000e+00> : vector<16xf32>
    %357 = vector.multi_reduction <add>, %356, %cst_132 [1] : vector<16x16xf32> to vector<16xf32>
    %358 = vector.shape_cast %357 : vector<16xf32> to vector<16x1xf32>
    %359 = tpu.reciprocal %358 {approx = true} : vector<16x1xf32> -> vector<16x1xf32>
    %360 = vector.broadcast %359 : vector<16x1xf32> to vector<16x16xf32>
    %361 = arith.mulf %356, %360 : vector<16x16xf32>
    %cst_133 = arith.constant dense<0.000000e+00> : vector<16x8xf32>
    %362 = tpu.matmul %361, %349, %cst_133 {dimension_numbers = #tpu.dot_dimension_numbers<[1], [0], [0], [1], [0, 0, 1, 1], [], []>} : vector<16x16xf32>, vector<16x8xf32>, vector<16x8xf32> -> vector<16x8xf32>
    %363 = tpu.concatenate %314, %330, %346, %362 in 1 : vector<16x8xf32>, vector<16x8xf32>, vector<16x8xf32>, vector<16x8xf32> -> vector<16x32xf32>
    %cst_134 = arith.constant dense<0.000000e+00> : vector<16x32xf32>
    %364 = tpu.matmul %363, %295, %cst_134 {dimension_numbers = #tpu.dot_dimension_numbers<[1], [0], [0], [1], [0, 0, 1, 1], [], []>} : vector<16x32xf32>, vector<32x32xf32>, vector<16x32xf32> -> vector<16x32xf32>
    %365 = vector.broadcast %296 : vector<1x32xf32> to vector<16x32xf32>
    %366 = arith.addf %364, %365 : vector<16x32xf32>
    %367 = arith.addf %260, %366 : vector<16x32xf32>
    %c8 = arith.constant 8 : index
    %c0_135 = arith.constant 0 : index
    %368 = vector.load %arg10[%c8, %c0_135] : memref<14x32xf32, #tpu.memory_space<vmem>>, vector<1x32xf32>
    %c9 = arith.constant 9 : index
    %c0_136 = arith.constant 0 : index
    %369 = vector.load %arg10[%c9, %c0_136] : memref<14x32xf32, #tpu.memory_space<vmem>>, vector<1x32xf32>
    %cst_137 = arith.constant dense<0.000000e+00> : vector<16xf32>
    %370 = vector.multi_reduction <add>, %367, %cst_137 [1] : vector<16x32xf32> to vector<16xf32>
    %371 = vector.shape_cast %370 : vector<16xf32> to vector<16x1xf32>
    %cst_138 = arith.constant 3.200000e+01 : f32
    %372 = vector.broadcast %cst_138 : f32 to vector<16x1xf32>
    %373 = arith.divf %371, %372 : vector<16x1xf32>
    %374 = vector.broadcast %373 : vector<16x1xf32> to vector<16x32xf32>
    %375 = arith.subf %367, %374 : vector<16x32xf32>
    %376 = arith.mulf %375, %375 : vector<16x32xf32>
    %cst_139 = arith.constant dense<0.000000e+00> : vector<16xf32>
    %377 = vector.multi_reduction <add>, %376, %cst_139 [1] : vector<16x32xf32> to vector<16xf32>
    %378 = vector.shape_cast %377 : vector<16xf32> to vector<16x1xf32>
    %cst_140 = arith.constant 3.100000e+01 : f32
    %379 = vector.broadcast %cst_140 : f32 to vector<16x1xf32>
    %380 = arith.divf %378, %379 : vector<16x1xf32>
    %381 = vector.broadcast %373 : vector<16x1xf32> to vector<16x32xf32>
    %382 = arith.subf %367, %381 : vector<16x32xf32>
    %383 = vector.broadcast %368 : vector<1x32xf32> to vector<16x32xf32>
    %384 = arith.mulf %383, %382 : vector<16x32xf32>
    %385 = math.sqrt %380 : vector<16x1xf32>
    %cst_141 = arith.constant 9.99999997E-7 : f32
    %386 = vector.broadcast %cst_141 : f32 to vector<16x1xf32>
    %387 = arith.addf %385, %386 : vector<16x1xf32>
    %388 = vector.broadcast %387 : vector<16x1xf32> to vector<16x32xf32>
    %389 = arith.divf %384, %388 : vector<16x32xf32>
    %390 = vector.broadcast %369 : vector<1x32xf32> to vector<16x32xf32>
    %391 = arith.addf %389, %390 : vector<16x32xf32>
    %c1_142 = arith.constant 1 : index
    %c0_143 = arith.constant 0 : index
    %c128_144 = arith.constant 128 : index
    %392 = vector.load %arg5[%c1_142, %c0_143, %c128_144] : memref<2x32x256xf32, #tpu.memory_space<vmem>>, vector<1x32x32xf32>
    %393 = vector.shape_cast %392 : vector<1x32x32xf32> to vector<32x32xf32>
    %cst_145 = arith.constant dense<0.000000e+00> : vector<16x32xf32>
    %394 = tpu.matmul %391, %393, %cst_145 {dimension_numbers = #tpu.dot_dimension_numbers<[1], [0], [0], [1], [0, 0, 1, 1], [], []>} : vector<16x32xf32>, vector<32x32xf32>, vector<16x32xf32> -> vector<16x32xf32>
    %c1_146 = arith.constant 1 : index
    %c128_147 = arith.constant 128 : index
    %395 = vector.load %arg9[%c1_146, %c128_147] : memref<2x288xf32, #tpu.memory_space<vmem>>, vector<1x32xf32>
    %396 = vector.broadcast %395 : vector<1x32xf32> to vector<16x32xf32>
    %397 = arith.addf %394, %396 : vector<16x32xf32>
    %398 = vector.extract_strided_slice %8 {offsets = [0, 64], sizes = [16, 32], strides = [1, 1]} : vector<16x128xf32> to vector<16x32xf32>
    %399 = vector.extract_strided_slice %8 {offsets = [0, 96], sizes = [16, 32], strides = [1, 1]} : vector<16x128xf32> to vector<16x32xf32>
    %c1_148 = arith.constant 1 : index
    %c0_149 = arith.constant 0 : index
    %c160_150 = arith.constant 160 : index
    %400 = vector.load %arg5[%c1_148, %c0_149, %c160_150] : memref<2x32x256xf32, #tpu.memory_space<vmem>>, vector<1x32x32xf32>
    %401 = vector.shape_cast %400 : vector<1x32x32xf32> to vector<32x32xf32>
    %c1_151 = arith.constant 1 : index
    %c160_152 = arith.constant 160 : index
    %402 = vector.load %arg9[%c1_151, %c160_152] : memref<2x288xf32, #tpu.memory_space<vmem>>, vector<1x32xf32>
    %cst_153 = arith.constant 0.353553385 : f32
    %403 = vector.broadcast %cst_153 : f32 to vector<16x32xf32>
    %404 = arith.mulf %397, %403 : vector<16x32xf32>
    %405 = vector.extract_strided_slice %404 {offsets = [0, 0], sizes = [16, 8], strides = [1, 1]} : vector<16x32xf32> to vector<16x8xf32>
    %406 = vector.extract_strided_slice %398 {offsets = [0, 0], sizes = [16, 8], strides = [1, 1]} : vector<16x32xf32> to vector<16x8xf32>
    %407 = vector.extract_strided_slice %399 {offsets = [0, 0], sizes = [16, 8], strides = [1, 1]} : vector<16x32xf32> to vector<16x8xf32>
    %cst_154 = arith.constant dense<0.000000e+00> : vector<16x16xf32>
    %408 = tpu.matmul %405, %406, %cst_154 {dimension_numbers = #tpu.dot_dimension_numbers<[1], [1], [0], [0], [0, 0, 1, 0], [], []>} : vector<16x8xf32>, vector<16x8xf32>, vector<16x16xf32> -> vector<16x16xf32>
    %409 = arith.addf %408, %2 : vector<16x16xf32>
    %cst_155 = arith.constant dense<0xFF800000> : vector<16xf32>
    %410 = vector.multi_reduction <maximumf>, %409, %cst_155 [1] : vector<16x16xf32> to vector<16xf32>
    %411 = vector.shape_cast %410 : vector<16xf32> to vector<16x1xf32>
    %412 = vector.broadcast %411 : vector<16x1xf32> to vector<16x16xf32>
    %413 = arith.subf %409, %412 : vector<16x16xf32>
    %414 = math.exp %413 : vector<16x16xf32>
    %cst_156 = arith.constant dense<0.000000e+00> : vector<16xf32>
    %415 = vector.multi_reduction <add>, %414, %cst_156 [1] : vector<16x16xf32> to vector<16xf32>
    %416 = vector.shape_cast %415 : vector<16xf32> to vector<16x1xf32>
    %417 = tpu.reciprocal %416 {approx = true} : vector<16x1xf32> -> vector<16x1xf32>
    %418 = vector.broadcast %417 : vector<16x1xf32> to vector<16x16xf32>
    %419 = arith.mulf %414, %418 : vector<16x16xf32>
    %cst_157 = arith.constant dense<0.000000e+00> : vector<16x8xf32>
    %420 = tpu.matmul %419, %407, %cst_157 {dimension_numbers = #tpu.dot_dimension_numbers<[1], [0], [0], [1], [0, 0, 1, 1], [], []>} : vector<16x16xf32>, vector<16x8xf32>, vector<16x8xf32> -> vector<16x8xf32>
    %421 = vector.extract_strided_slice %404 {offsets = [0, 8], sizes = [16, 8], strides = [1, 1]} : vector<16x32xf32> to vector<16x8xf32>
    %422 = vector.extract_strided_slice %398 {offsets = [0, 8], sizes = [16, 8], strides = [1, 1]} : vector<16x32xf32> to vector<16x8xf32>
    %423 = vector.extract_strided_slice %399 {offsets = [0, 8], sizes = [16, 8], strides = [1, 1]} : vector<16x32xf32> to vector<16x8xf32>
    %cst_158 = arith.constant dense<0.000000e+00> : vector<16x16xf32>
    %424 = tpu.matmul %421, %422, %cst_158 {dimension_numbers = #tpu.dot_dimension_numbers<[1], [1], [0], [0], [0, 0, 1, 0], [], []>} : vector<16x8xf32>, vector<16x8xf32>, vector<16x16xf32> -> vector<16x16xf32>
    %425 = arith.addf %424, %2 : vector<16x16xf32>
    %cst_159 = arith.constant dense<0xFF800000> : vector<16xf32>
    %426 = vector.multi_reduction <maximumf>, %425, %cst_159 [1] : vector<16x16xf32> to vector<16xf32>
    %427 = vector.shape_cast %426 : vector<16xf32> to vector<16x1xf32>
    %428 = vector.broadcast %427 : vector<16x1xf32> to vector<16x16xf32>
    %429 = arith.subf %425, %428 : vector<16x16xf32>
    %430 = math.exp %429 : vector<16x16xf32>
    %cst_160 = arith.constant dense<0.000000e+00> : vector<16xf32>
    %431 = vector.multi_reduction <add>, %430, %cst_160 [1] : vector<16x16xf32> to vector<16xf32>
    %432 = vector.shape_cast %431 : vector<16xf32> to vector<16x1xf32>
    %433 = tpu.reciprocal %432 {approx = true} : vector<16x1xf32> -> vector<16x1xf32>
    %434 = vector.broadcast %433 : vector<16x1xf32> to vector<16x16xf32>
    %435 = arith.mulf %430, %434 : vector<16x16xf32>
    %cst_161 = arith.constant dense<0.000000e+00> : vector<16x8xf32>
    %436 = tpu.matmul %435, %423, %cst_161 {dimension_numbers = #tpu.dot_dimension_numbers<[1], [0], [0], [1], [0, 0, 1, 1], [], []>} : vector<16x16xf32>, vector<16x8xf32>, vector<16x8xf32> -> vector<16x8xf32>
    %437 = vector.extract_strided_slice %404 {offsets = [0, 16], sizes = [16, 8], strides = [1, 1]} : vector<16x32xf32> to vector<16x8xf32>
    %438 = vector.extract_strided_slice %398 {offsets = [0, 16], sizes = [16, 8], strides = [1, 1]} : vector<16x32xf32> to vector<16x8xf32>
    %439 = vector.extract_strided_slice %399 {offsets = [0, 16], sizes = [16, 8], strides = [1, 1]} : vector<16x32xf32> to vector<16x8xf32>
    %cst_162 = arith.constant dense<0.000000e+00> : vector<16x16xf32>
    %440 = tpu.matmul %437, %438, %cst_162 {dimension_numbers = #tpu.dot_dimension_numbers<[1], [1], [0], [0], [0, 0, 1, 0], [], []>} : vector<16x8xf32>, vector<16x8xf32>, vector<16x16xf32> -> vector<16x16xf32>
    %441 = arith.addf %440, %2 : vector<16x16xf32>
    %cst_163 = arith.constant dense<0xFF800000> : vector<16xf32>
    %442 = vector.multi_reduction <maximumf>, %441, %cst_163 [1] : vector<16x16xf32> to vector<16xf32>
    %443 = vector.shape_cast %442 : vector<16xf32> to vector<16x1xf32>
    %444 = vector.broadcast %443 : vector<16x1xf32> to vector<16x16xf32>
    %445 = arith.subf %441, %444 : vector<16x16xf32>
    %446 = math.exp %445 : vector<16x16xf32>
    %cst_164 = arith.constant dense<0.000000e+00> : vector<16xf32>
    %447 = vector.multi_reduction <add>, %446, %cst_164 [1] : vector<16x16xf32> to vector<16xf32>
    %448 = vector.shape_cast %447 : vector<16xf32> to vector<16x1xf32>
    %449 = tpu.reciprocal %448 {approx = true} : vector<16x1xf32> -> vector<16x1xf32>
    %450 = vector.broadcast %449 : vector<16x1xf32> to vector<16x16xf32>
    %451 = arith.mulf %446, %450 : vector<16x16xf32>
    %cst_165 = arith.constant dense<0.000000e+00> : vector<16x8xf32>
    %452 = tpu.matmul %451, %439, %cst_165 {dimension_numbers = #tpu.dot_dimension_numbers<[1], [0], [0], [1], [0, 0, 1, 1], [], []>} : vector<16x16xf32>, vector<16x8xf32>, vector<16x8xf32> -> vector<16x8xf32>
    %453 = vector.extract_strided_slice %404 {offsets = [0, 24], sizes = [16, 8], strides = [1, 1]} : vector<16x32xf32> to vector<16x8xf32>
    %454 = vector.extract_strided_slice %398 {offsets = [0, 24], sizes = [16, 8], strides = [1, 1]} : vector<16x32xf32> to vector<16x8xf32>
    %455 = vector.extract_strided_slice %399 {offsets = [0, 24], sizes = [16, 8], strides = [1, 1]} : vector<16x32xf32> to vector<16x8xf32>
    %cst_166 = arith.constant dense<0.000000e+00> : vector<16x16xf32>
    %456 = tpu.matmul %453, %454, %cst_166 {dimension_numbers = #tpu.dot_dimension_numbers<[1], [1], [0], [0], [0, 0, 1, 0], [], []>} : vector<16x8xf32>, vector<16x8xf32>, vector<16x16xf32> -> vector<16x16xf32>
    %457 = arith.addf %456, %2 : vector<16x16xf32>
    %cst_167 = arith.constant dense<0xFF800000> : vector<16xf32>
    %458 = vector.multi_reduction <maximumf>, %457, %cst_167 [1] : vector<16x16xf32> to vector<16xf32>
    %459 = vector.shape_cast %458 : vector<16xf32> to vector<16x1xf32>
    %460 = vector.broadcast %459 : vector<16x1xf32> to vector<16x16xf32>
    %461 = arith.subf %457, %460 : vector<16x16xf32>
    %462 = math.exp %461 : vector<16x16xf32>
    %cst_168 = arith.constant dense<0.000000e+00> : vector<16xf32>
    %463 = vector.multi_reduction <add>, %462, %cst_168 [1] : vector<16x16xf32> to vector<16xf32>
    %464 = vector.shape_cast %463 : vector<16xf32> to vector<16x1xf32>
    %465 = tpu.reciprocal %464 {approx = true} : vector<16x1xf32> -> vector<16x1xf32>
    %466 = vector.broadcast %465 : vector<16x1xf32> to vector<16x16xf32>
    %467 = arith.mulf %462, %466 : vector<16x16xf32>
    %cst_169 = arith.constant dense<0.000000e+00> : vector<16x8xf32>
    %468 = tpu.matmul %467, %455, %cst_169 {dimension_numbers = #tpu.dot_dimension_numbers<[1], [0], [0], [1], [0, 0, 1, 1], [], []>} : vector<16x16xf32>, vector<16x8xf32>, vector<16x8xf32> -> vector<16x8xf32>
    %469 = tpu.concatenate %420, %436, %452, %468 in 1 : vector<16x8xf32>, vector<16x8xf32>, vector<16x8xf32>, vector<16x8xf32> -> vector<16x32xf32>
    %cst_170 = arith.constant dense<0.000000e+00> : vector<16x32xf32>
    %470 = tpu.matmul %469, %401, %cst_170 {dimension_numbers = #tpu.dot_dimension_numbers<[1], [0], [0], [1], [0, 0, 1, 1], [], []>} : vector<16x32xf32>, vector<32x32xf32>, vector<16x32xf32> -> vector<16x32xf32>
    %471 = vector.broadcast %402 : vector<1x32xf32> to vector<16x32xf32>
    %472 = arith.addf %470, %471 : vector<16x32xf32>
    %473 = arith.addf %367, %472 : vector<16x32xf32>
    %c10 = arith.constant 10 : index
    %c0_171 = arith.constant 0 : index
    %474 = vector.load %arg10[%c10, %c0_171] : memref<14x32xf32, #tpu.memory_space<vmem>>, vector<1x32xf32>
    %c11 = arith.constant 11 : index
    %c0_172 = arith.constant 0 : index
    %475 = vector.load %arg10[%c11, %c0_172] : memref<14x32xf32, #tpu.memory_space<vmem>>, vector<1x32xf32>
    %cst_173 = arith.constant dense<0.000000e+00> : vector<16xf32>
    %476 = vector.multi_reduction <add>, %473, %cst_173 [1] : vector<16x32xf32> to vector<16xf32>
    %477 = vector.shape_cast %476 : vector<16xf32> to vector<16x1xf32>
    %cst_174 = arith.constant 3.200000e+01 : f32
    %478 = vector.broadcast %cst_174 : f32 to vector<16x1xf32>
    %479 = arith.divf %477, %478 : vector<16x1xf32>
    %480 = vector.broadcast %479 : vector<16x1xf32> to vector<16x32xf32>
    %481 = arith.subf %473, %480 : vector<16x32xf32>
    %482 = arith.mulf %481, %481 : vector<16x32xf32>
    %cst_175 = arith.constant dense<0.000000e+00> : vector<16xf32>
    %483 = vector.multi_reduction <add>, %482, %cst_175 [1] : vector<16x32xf32> to vector<16xf32>
    %484 = vector.shape_cast %483 : vector<16xf32> to vector<16x1xf32>
    %cst_176 = arith.constant 3.100000e+01 : f32
    %485 = vector.broadcast %cst_176 : f32 to vector<16x1xf32>
    %486 = arith.divf %484, %485 : vector<16x1xf32>
    %487 = vector.broadcast %479 : vector<16x1xf32> to vector<16x32xf32>
    %488 = arith.subf %473, %487 : vector<16x32xf32>
    %489 = vector.broadcast %474 : vector<1x32xf32> to vector<16x32xf32>
    %490 = arith.mulf %489, %488 : vector<16x32xf32>
    %491 = math.sqrt %486 : vector<16x1xf32>
    %cst_177 = arith.constant 9.99999997E-7 : f32
    %492 = vector.broadcast %cst_177 : f32 to vector<16x1xf32>
    %493 = arith.addf %491, %492 : vector<16x1xf32>
    %494 = vector.broadcast %493 : vector<16x1xf32> to vector<16x32xf32>
    %495 = arith.divf %490, %494 : vector<16x32xf32>
    %496 = vector.broadcast %475 : vector<1x32xf32> to vector<16x32xf32>
    %497 = arith.addf %495, %496 : vector<16x32xf32>
    %c1_178 = arith.constant 1 : index
    %c0_179 = arith.constant 0 : index
    %c192_180 = arith.constant 192 : index
    %498 = vector.load %arg5[%c1_178, %c0_179, %c192_180] : memref<2x32x256xf32, #tpu.memory_space<vmem>>, vector<1x32x64xf32>
    %499 = vector.shape_cast %498 : vector<1x32x64xf32> to vector<32x64xf32>
    %cst_181 = arith.constant dense<0.000000e+00> : vector<16x64xf32>
    %500 = tpu.matmul %497, %499, %cst_181 {dimension_numbers = #tpu.dot_dimension_numbers<[1], [0], [0], [1], [0, 0, 1, 1], [], []>} : vector<16x32xf32>, vector<32x64xf32>, vector<16x64xf32> -> vector<16x64xf32>
    %c1_182 = arith.constant 1 : index
    %c192_183 = arith.constant 192 : index
    %501 = vector.load %arg9[%c1_182, %c192_183] : memref<2x288xf32, #tpu.memory_space<vmem>>, vector<1x64xf32>
    %502 = vector.broadcast %501 : vector<1x64xf32> to vector<16x64xf32>
    %503 = arith.addf %500, %502 : vector<16x64xf32>
    %cst_184 = arith.constant 0.000000e+00 : f32
    %504 = vector.broadcast %cst_184 : f32 to vector<16x64xf32>
    %505 = arith.maximumf %503, %504 : vector<16x64xf32>
    %c1_185 = arith.constant 1 : index
    %c0_186 = arith.constant 0 : index
    %c0_187 = arith.constant 0 : index
    %506 = vector.load %arg6[%c1_185, %c0_186, %c0_187] : memref<2x64x32xf32, #tpu.memory_space<vmem>>, vector<1x64x32xf32>
    %507 = vector.shape_cast %506 : vector<1x64x32xf32> to vector<64x32xf32>
    %cst_188 = arith.constant dense<0.000000e+00> : vector<16x32xf32>
    %508 = tpu.matmul %505, %507, %cst_188 {dimension_numbers = #tpu.dot_dimension_numbers<[1], [0], [0], [1], [0, 0, 1, 1], [], []>} : vector<16x64xf32>, vector<64x32xf32>, vector<16x32xf32> -> vector<16x32xf32>
    %c1_189 = arith.constant 1 : index
    %c256_190 = arith.constant 256 : index
    %509 = vector.load %arg9[%c1_189, %c256_190] : memref<2x288xf32, #tpu.memory_space<vmem>>, vector<1x32xf32>
    %510 = vector.broadcast %509 : vector<1x32xf32> to vector<16x32xf32>
    %511 = arith.addf %508, %510 : vector<16x32xf32>
    %512 = arith.addf %473, %511 : vector<16x32xf32>
    %c12 = arith.constant 12 : index
    %c0_191 = arith.constant 0 : index
    %513 = vector.load %arg10[%c12, %c0_191] : memref<14x32xf32, #tpu.memory_space<vmem>>, vector<1x32xf32>
    %c13 = arith.constant 13 : index
    %c0_192 = arith.constant 0 : index
    %514 = vector.load %arg10[%c13, %c0_192] : memref<14x32xf32, #tpu.memory_space<vmem>>, vector<1x32xf32>
    %cst_193 = arith.constant dense<0.000000e+00> : vector<16xf32>
    %515 = vector.multi_reduction <add>, %512, %cst_193 [1] : vector<16x32xf32> to vector<16xf32>
    %516 = vector.shape_cast %515 : vector<16xf32> to vector<16x1xf32>
    %cst_194 = arith.constant 3.200000e+01 : f32
    %517 = vector.broadcast %cst_194 : f32 to vector<16x1xf32>
    %518 = arith.divf %516, %517 : vector<16x1xf32>
    %519 = vector.broadcast %518 : vector<16x1xf32> to vector<16x32xf32>
    %520 = arith.subf %512, %519 : vector<16x32xf32>
    %521 = arith.mulf %520, %520 : vector<16x32xf32>
    %cst_195 = arith.constant dense<0.000000e+00> : vector<16xf32>
    %522 = vector.multi_reduction <add>, %521, %cst_195 [1] : vector<16x32xf32> to vector<16xf32>
    %523 = vector.shape_cast %522 : vector<16xf32> to vector<16x1xf32>
    %cst_196 = arith.constant 3.100000e+01 : f32
    %524 = vector.broadcast %cst_196 : f32 to vector<16x1xf32>
    %525 = arith.divf %523, %524 : vector<16x1xf32>
    %526 = vector.broadcast %518 : vector<16x1xf32> to vector<16x32xf32>
    %527 = arith.subf %512, %526 : vector<16x32xf32>
    %528 = vector.broadcast %513 : vector<1x32xf32> to vector<16x32xf32>
    %529 = arith.mulf %528, %527 : vector<16x32xf32>
    %530 = math.sqrt %525 : vector<16x1xf32>
    %cst_197 = arith.constant 9.99999997E-7 : f32
    %531 = vector.broadcast %cst_197 : f32 to vector<16x1xf32>
    %532 = arith.addf %530, %531 : vector<16x1xf32>
    %533 = vector.broadcast %532 : vector<16x1xf32> to vector<16x32xf32>
    %534 = arith.divf %529, %533 : vector<16x32xf32>
    %535 = vector.broadcast %514 : vector<1x32xf32> to vector<16x32xf32>
    %536 = arith.addf %534, %535 : vector<16x32xf32>
    %c0_198 = arith.constant 0 : index
    %c0_199 = arith.constant 0 : index
    %537 = vector.load %arg11[%c0_198, %c0_199] : memref<16x32xf32, #tpu.memory_space<vmem>>, vector<16x32xf32>
    tpu.vector_store %arg11[%c0_198, %c0_199], %536 {strides = array<i32>} : memref<16x32xf32, #tpu.memory_space<vmem>>, vector<16x32xf32>,
    return
  }
  func.func @transform_0(%arg0: i32) -> (i32, i32) {
    %c0_i32 = arith.constant 0 : i32
    %c0_i32_0 = arith.constant 0 : i32
    %c0_i32_1 = arith.constant 0 : i32
    return %c0_i32, %c0_i32_0 : i32, i32
  }
  func.func @transform_1(%arg0: i32) -> (i32, i32) {
    %c0_i32 = arith.constant 0 : i32
    %c0_i32_0 = arith.constant 0 : i32
    %c0_i32_1 = arith.constant 0 : i32
    return %c0_i32, %c0_i32_0 : i32, i32
  }
  func.func @transform_2(%arg0: i32) -> (i32, i32) {
    %c0_i32 = arith.constant 0 : i32
    %c0_i32_0 = arith.constant 0 : i32
    %c0_i32_1 = arith.constant 0 : i32
    return %c0_i32, %c0_i32_0 : i32, i32
  }
  func.func @transform_3(%arg0: i32) -> (i32, i32) {
    %c0_i32 = arith.constant 0 : i32
    %c0_i32_0 = arith.constant 0 : i32
    %c0_i32_1 = arith.constant 0 : i32
    return %c0_i32, %c0_i32_0 : i32, i32
  }
  func.func @transform_4(%arg0: i32) -> (i32, i32, i32) {
    %c0_i32 = arith.constant 0 : i32
    %c0_i32_0 = arith.constant 0 : i32
    %c0_i32_1 = arith.constant 0 : i32
    %c0_i32_2 = arith.constant 0 : i32
    return %c0_i32, %c0_i32_0, %c0_i32_1 : i32, i32, i32
  }
  func.func @transform_5(%arg0: i32) -> (i32, i32, i32) {
    %c0_i32 = arith.constant 0 : i32
    %c0_i32_0 = arith.constant 0 : i32
    %c0_i32_1 = arith.constant 0 : i32
    %c0_i32_2 = arith.constant 0 : i32
    return %c0_i32, %c0_i32_0, %c0_i32_1 : i32, i32, i32
  }
  func.func @transform_6(%arg0: i32) -> (i32, i32) {
    %c0_i32 = arith.constant 0 : i32
    %c0_i32_0 = arith.constant 0 : i32
    %c0_i32_1 = arith.constant 0 : i32
    return %c0_i32, %c0_i32_0 : i32, i32
  }
  func.func @transform_7(%arg0: i32) -> (i32, i32) {
    %c0_i32 = arith.constant 0 : i32
    %c0_i32_0 = arith.constant 0 : i32
    %c0_i32_1 = arith.constant 0 : i32
    return %c0_i32, %c0_i32_0 : i32, i32
  }
  func.func @transform_8(%arg0: i32) -> (i32, i32) {
    %c0_i32 = arith.constant 0 : i32
    %c0_i32_0 = arith.constant 0 : i32
    %c0_i32_1 = arith.constant 0 : i32
    return %c0_i32, %c0_i32_0 : i32, i32
  }
  func.func @transform_9(%arg0: i32) -> (i32, i32) {
    %c0_i32 = arith.constant 0 : i32
    %c0_i32_0 = arith.constant 0 : i32
    %c0_i32_1 = arith.constant 0 : i32
    return %c0_i32, %c0_i32_0 : i32, i32
  }
  func.func @transform_10(%arg0: i32) -> (i32, i32) {
    %c0_i32 = arith.constant 0 : i32
    %c0_i32_0 = arith.constant 0 : i32
    %c0_i32_1 = arith.constant 0 : i32
    return %c0_i32, %c0_i32_0 : i32, i32
  }
}

</mosaic_0001>

<llo_original>
// kernel: decoder_forward.1
$region0: #{decoder_forward.1}
  #allocation0 [shape = 'u32[]', space=smem, size = 0x4, offset = 0x4, fixed_abs, tag = 'smem constant byte address 0x4 - core index']
  #allocation1 [shape = 'u32[144,128]{1,0:T(1,128)}', space=vmem, size = 0x12000, scoped, tag = 'internal scratch']
  %s0 = inlined_call_operand.vmem [shape: f32[16,32], index: 0, kind: input, shape index: {}]
  %s1 = inlined_call_operand.vmem [shape: f32[16,32], index: 1, kind: input, shape index: {}]
  %s2 = inlined_call_operand.vmem [shape: f32[16,16], index: 2, kind: input, shape index: {}]
  %s3 = inlined_call_operand.vmem [shape: f32[16,16], index: 3, kind: input, shape index: {}]
  %s4 = inlined_call_operand.vmem [shape: f32[2,32,256], index: 4, kind: input, shape index: {}]
  %s5 = inlined_call_operand.vmem [shape: f32[2,64,32], index: 5, kind: input, shape index: {}]
  %s6 = inlined_call_operand.vmem [shape: f32[32,128], index: 6, kind: input, shape index: {}]
  %s7 = inlined_call_operand.vmem [shape: f32[1,128], index: 7, kind: input, shape index: {}]
  %s8 = inlined_call_operand.vmem [shape: f32[2,288], index: 8, kind: input, shape index: {}]
  %s9 = inlined_call_operand.vmem [shape: f32[14,32], index: 9, kind: input, shape index: {}]
  %s10 = inlined_call_operand.hbm [shape: f32[16,32], index: 10, kind: output, shape index: {}]
  %s11 = sld [smem:[#allocation0]]
  $region50: #{decoder_forward.1} parent=0
    _
  %s13 = ssub.s32 1, %s11
  %s14 = scalar_select 0, %s13, %s11
  $region1: #{decoder_forward.1} parent=0
    #allocation2 [shape = 'u8[8192]{0}', space=vmem, size = 0x2000, scoped, tag = 'output window, operand 0, single buffered']
    #allocation3 [shape = 's32[1]{0}', space=sflag, size = 0x4, scoped, tag = 'scoped memory for decoder_forward.1']
    %15 = vsyncpa [#allocation3], 0
    // Predicated region
    $region2: #{decoder_forward.1} parent=1 // pred_check
      _
    $region3: #{decoder_forward.1} parent=1 // pred_check_branch
      %17 = sbr.rel (0) target = $region5
    $region4: #{decoder_forward.1} parent=1 // pred_region
      _
    $region5: #{decoder_forward.1} parent=1 // pred_fallthru
      _
    // Predicated region
    $region6: #{decoder_forward.1} parent=1 // pred_check
      _
    $region7: #{decoder_forward.1} parent=1 // pred_check_branch
      %19 = sbr.rel (0) target = $region9
    $region8: #{decoder_forward.1} parent=1 // pred_region
      _
    $region9: #{decoder_forward.1} parent=1 // pred_fallthru
      _
    // Predicated region
    $region10: #{decoder_forward.1} parent=1 // pred_check
      _
    $region11: #{decoder_forward.1} parent=1 // pred_check_branch
      %21 = sbr.rel (0) target = $region13
    $region12: #{decoder_forward.1} parent=1 // pred_region
      _
    $region13: #{decoder_forward.1} parent=1 // pred_fallthru
      _
    // Predicated region
    $region14: #{decoder_forward.1} parent=1 // pred_check
      _
    $region15: #{decoder_forward.1} parent=1 // pred_check_branch
      %23 = sbr.rel (0) target = $region17
    $region16: #{decoder_forward.1} parent=1 // pred_region
      _
    $region17: #{decoder_forward.1} parent=1 // pred_fallthru
      _
    // Predicated region
    $region18: #{decoder_forward.1} parent=1 // pred_check
      _
    $region19: #{decoder_forward.1} parent=1 // pred_check_branch
      %25 = sbr.rel (0) target = $region21
    $region20: #{decoder_forward.1} parent=1 // pred_region
      _
    $region21: #{decoder_forward.1} parent=1 // pred_fallthru
      _
    // Predicated region
    $region22: #{decoder_forward.1} parent=1 // pred_check
      _
    $region23: #{decoder_forward.1} parent=1 // pred_check_branch
      %27 = sbr.rel (0) target = $region25
    $region24: #{decoder_forward.1} parent=1 // pred_region
      _
    $region25: #{decoder_forward.1} parent=1 // pred_fallthru
      _
    // Predicated region
    $region26: #{decoder_forward.1} parent=1 // pred_check
      _
    $region27: #{decoder_forward.1} parent=1 // pred_check_branch
      %29 = sbr.rel (0) target = $region29
    $region28: #{decoder_forward.1} parent=1 // pred_region
      _
    $region29: #{decoder_forward.1} parent=1 // pred_fallthru
      _
    // Predicated region
    $region30: #{decoder_forward.1} parent=1 // pred_check
      _
    $region31: #{decoder_forward.1} parent=1 // pred_check_branch
      %31 = sbr.rel (0) target = $region33
    $region32: #{decoder_forward.1} parent=1 // pred_region
      _
    $region33: #{decoder_forward.1} parent=1 // pred_fallthru
      _
    // Predicated region
    $region34: #{decoder_forward.1} parent=1 // pred_check
      _
    $region35: #{decoder_forward.1} parent=1 // pred_check_branch
      %33 = sbr.rel (0) target = $region37
    $region36: #{decoder_forward.1} parent=1 // pred_region
      _
    $region37: #{decoder_forward.1} parent=1 // pred_fallthru
      _
    // Predicated region
    $region38: #{decoder_forward.1} parent=1 // pred_check
      _
    $region39: #{decoder_forward.1} parent=1 // pred_check_branch
      %35 = sbr.rel (0) target = $region41
    $region40: #{decoder_forward.1} parent=1 // pred_region
      _
    $region41: #{decoder_forward.1} parent=1 // pred_fallthru
      _
    %v36 = vld [vmem:[%s0] sm:$0xff]
    %v37 = vld [vmem:[%s0 + $0x8] sm:$0xff]
    %v38 = vld [vmem:[%s2] sm:$0xff]
    %v39 = vld [vmem:[%s2 + $0x8] sm:$0xff]
    %v40 = vld [vmem:[%s3] sm:$0xff]
    %v41 = vld [vmem:[%s3 + $0x8] sm:$0xff]
    %v42 = vld [vmem:[%s1] sm:$0xff]
    %v43 = vld [vmem:[%s1 + $0x8] sm:$0xff]
    %v44 = vld [vmem:[%s6] sm:$0xff]
    %v45 = vld [vmem:[%s6 + $0x8] sm:$0xff]
    %v46 = vld [vmem:[%s6 + $0x10] sm:$0xff]
    %v47 = vld [vmem:[%s6 + $0x18] sm:$0xff]
    %v48 = vld [vmem:[%s7] sm:$0x1]
    %v50 = vlaneseq
    %v51 = vshrl.u32 %v50, 7
    %v52 = vsub.s32 0, %v51
    %v53 = vrot.slane %v48, %v52
    %vm55 = vcmask 261120
    %v57 = vsel %vm55, %v42, 0
    %v60 = vsel %vm55, %v43, 0
    %62 = vmatprep.subr.mxu0 0.0
    %63 = vmatpush1.msra.mxu0 %v44
    %64 = vmatprep.subr.mxu0 0.0
    %65 = vmatpush1.msra.mxu0 %v45
    %66 = vmatprep.subr.mxu0 0.0
    %67 = vmatpush1.msra.mxu0 %v46
    %68 = vmatprep.subr.mxu0 0.0
    %69 = vmatpush1.msra.mxu0 %v47
    %70 = vmatprep.subr.mxu0 0.0
    %71 = vmatpush1.msra.mxu0 0.0
    %72 = vmatprep.subr.mxu0 0.0
    %73 = vmatpush1.msra.mxu0 0.0
    %74 = vmatprep.subr.mxu0 0.0
    %75 = vmatpush1.msra.mxu0 0.0
    %76 = vmatprep.subr.mxu0 0.0
    %77 = vmatpush1.msra.mxu0 0.0
    %78 = vmatprep.subr.mxu0 0.0
    %79 = vmatpush1.msra.mxu0 0.0
    %80 = vmatprep.subr.mxu0 0.0
    %81 = vmatpush1.msra.mxu0 0.0
    %82 = vmatprep.subr.mxu0 0.0
    %83 = vmatpush1.msra.mxu0 0.0
    %84 = vmatprep.subr.mxu0 0.0
    %85 = vmatpush1.msra.mxu0 0.0
    %86 = vmatprep.subr.mxu0 0.0
    %87 = vmatpush1.msra.mxu0 0.0
    %88 = vmatprep.subr.mxu0 0.0
    %89 = vmatpush1.msra.mxu0 0.0
    %90 = vmatprep.subr.mxu0 0.0
    %91 = vmatpush1.msra.mxu0 0.0
    %92 = vmatprep.subr.mxu0 0.0
    %93 = vmatpush1.msra.mxu0 0.0
    %94 = vmatprep.subr.mxu0 0.0
    %95 = vmatpush1.msra.mxu0 0.0
    %96 = vmatprep.subr.mxu0 0.0
    %97 = vmatpush1.msra.mxu0 0.0
    %98 = vmatprep.subr.mxu0 0.0
    %99 = vmatpush1.msra.mxu0 0.0
    %100 = vmatprep.subr.mxu0 0.0
    %101 = vmatpush1.msra.mxu0 0.0
    %102 = vmatprep.subr.mxu0 0.0
    %103 = vmatpush1.msra.mxu0 0.0
    %104 = vmatprep.subr.mxu0 0.0
    %105 = vmatpush1.msra.mxu0 0.0
    %106 = vmatprep.subr.mxu0 0.0
    %107 = vmatpush1.msra.mxu0 0.0
    %108 = vmatprep.subr.mxu0 0.0
    %109 = vmatpush1.msra.mxu0 0.0
    %110 = vmatprep.subr.mxu0 0.0
    %111 = vmatpush1.msra.mxu0 0.0
    %112 = vmatprep.subr.mxu0 0.0
    %113 = vmatpush1.msra.mxu0 0.0
    %114 = vmatprep.subr.mxu0 0.0
    %115 = vmatpush1.msra.mxu0 0.0
    %116 = vmatprep.subr.mxu0 0.0
    %117 = vmatpush1.msra.mxu0 0.0
    %118 = vmatprep.subr.mxu0 0.0
    %119 = vmatpush1.msra.mxu0 0.0
    %120 = vmatprep.subr.mxu0 0.0
    %121 = vmatpush1.msra.mxu0 0.0
    %122 = vmatprep.subr.mxu0 0.0
    %123 = vmatpush1.msra.mxu0 0.0
    %124 = vmatprep.subr.mxu0 0.0
    %125 = vmatpush1.msra.mxu0 0.0
    %126 = vmatprep.mubr.f32.mxu0 0.0
    %127 = vmatmul.mubr.f32.gmra.mrb[0].mxu0 %v57
    %v128 = vpop.f32.mrb[0].mxu0
    %v129 = vadd.f32 %v53, %v128
    %v130 = vpop.f32.mrb[0].mxu0
    %131 = vmatprep.mubr.f32.mxu0 0.0
    %132 = vmatmul.mubr.f32.gmra.mrb[0].mxu0 %v60
    %v133 = vpop.f32.mrb[0].mxu0
    %v134 = vadd.f32 %v53, %v133
    %v135 = vpop.f32.mrb[0].mxu0
    %136 = vdwg.mxu0
    %v137 = vld [vmem:[%s9] sm:$0x1]
    %v138 = vld [vmem:[%s9 + $0x1] sm:$0x1]
    %v139 = vsel %vm55, %v36, 0.0
    %140 = vadd.xlane.f32.xlu0 %v139
    %v141 = vpop.xlane.xlu0 %140
    %v142 = vsel %vm55, %v37, 0.0
    %143 = vadd.xlane.f32.xlu0 %v142
    %v144 = vpop.xlane.xlu0 %143
    %v145 = vrcp.pop 32.0
    %v146 = vmul.f32 %v141, %v145
    %v147 = vmul.f32 %v144, %v145
    %v148 = vsub.f32 %v36, %v146
    %v149 = vsub.f32 %v37, %v147
    %v150 = vmul.f32 %v148, %v148
    %v151 = vmul.f32 %v149, %v149
    %v152 = vsel %vm55, %v150, 0.0
    %153 = vadd.xlane.f32.xlu0 %v152
    %v154 = vpop.xlane.xlu0 %153
    %v155 = vsel %vm55, %v151, 0.0
    %156 = vadd.xlane.f32.xlu0 %v155
    %v157 = vpop.xlane.xlu0 %156
    %v158 = vrcp.pop 31.0
    %v159 = vmul.f32 %v154, %v158
    %v160 = vmul.f32 %v157, %v158
    %v161 = vlaneseq
    %v162 = vshrl.u32 %v161, 7
    %v163 = vsub.s32 0, %v162
    %v164 = vrot.slane %v137, %v163
    %v165 = vmul.f32 %v164, %v148
    %v166 = vmul.f32 %v164, %v149
    %v167 = vrsqrt.pop %v159
    %v168 = vmul.f32 %v159, %v167
    %vm169 = vcmp.eq.f32.partialorder %v159, inf
    %v170 = vsel %vm169, %v159, %v168
    %vm171 = vcmp.eq.f32.partialorder %v159, 0.0
    %v172 = vand.u32 %v159, 2147483648
    %v173 = vsel %vm171, %v172, %v170
    %v174 = vrsqrt.pop %v160
    %v175 = vmul.f32 %v160, %v174
    %vm176 = vcmp.eq.f32.partialorder %v160, inf
    %v177 = vsel %vm176, %v160, %v175
    %vm178 = vcmp.eq.f32.partialorder %v160, 0.0
    %v179 = vand.u32 %v160, 2147483648
    %v180 = vsel %vm178, %v179, %v177
    %v181 = vadd.f32 %v173, 1e-06
    %v182 = vadd.f32 %v180, 1e-06
    %v183 = vrcp.pop %v181
    %v184 = vmul.f32 %v165, %v183
    %v185 = vrcp.pop %v182
    %v186 = vmul.f32 %v166, %v185
    %v187 = vlaneseq
    %v188 = vshrl.u32 %v187, 7
    %v189 = vsub.s32 0, %v188
    %v190 = vrot.slane %v138, %v189
    %v191 = vadd.f32 %v184, %v190
    %v192 = vadd.f32 %v186, %v190
    %v193 = vld [vmem:[%s4] sm:$0xff]
    %v194 = vld [vmem:[%s4 + $0x10] sm:$0xff]
    %v195 = vld [vmem:[%s4 + $0x20] sm:$0xff]
    %v196 = vld [vmem:[%s4 + $0x30] sm:$0xff]
    %v197 = vld [vmem:[%s8] sm:$0x1]
    %v198 = vlaneseq
    %v199 = vshrl.u32 %v198, 7
    %v200 = vsub.s32 0, %v199
    %v201 = vrot.slane %v197, %v200
    %v203 = vsel %vm55, %v191, 0
    %v206 = vsel %vm55, %v192, 0
    %208 = vmatprep.subr.mxu0 0.0
    %209 = vmatpush1.msra.mxu0 %v193
    %210 = vmatprep.subr.mxu0 0.0
    %211 = vmatpush1.msra.mxu0 %v194
    %212 = vmatprep.subr.mxu0 0.0
    %213 = vmatpush1.msra.mxu0 %v195
    %214 = vmatprep.subr.mxu0 0.0
    %215 = vmatpush1.msra.mxu0 %v196
    %216 = vmatprep.subr.mxu0 0.0
    %217 = vmatpush1.msra.mxu0 0.0
    %218 = vmatprep.subr.mxu0 0.0
    %219 = vmatpush1.msra.mxu0 0.0
    %220 = vmatprep.subr.mxu0 0.0
    %221 = vmatpush1.msra.mxu0 0.0
    %222 = vmatprep.subr.mxu0 0.0
    %223 = vmatpush1.msra.mxu0 0.0
    %224 = vmatprep.subr.mxu0 0.0
    %225 = vmatpush1.msra.mxu0 0.0
    %226 = vmatprep.subr.mxu0 0.0
    %227 = vmatpush1.msra.mxu0 0.0
    %228 = vmatprep.subr.mxu0 0.0
    %229 = vmatpush1.msra.mxu0 0.0
    %230 = vmatprep.subr.mxu0 0.0
    %231 = vmatpush1.msra.mxu0 0.0
    %232 = vmatprep.subr.mxu0 0.0
    %233 = vmatpush1.msra.mxu0 0.0
    %234 = vmatprep.subr.mxu0 0.0
    %235 = vmatpush1.msra.mxu0 0.0
    %236 = vmatprep.subr.mxu0 0.0
    %237 = vmatpush1.msra.mxu0 0.0
    %238 = vmatprep.subr.mxu0 0.0
    %239 = vmatpush1.msra.mxu0 0.0
    %240 = vmatprep.subr.mxu0 0.0
    %241 = vmatpush1.msra.mxu0 0.0
    %242 = vmatprep.subr.mxu0 0.0
    %243 = vmatpush1.msra.mxu0 0.0
    %244 = vmatprep.subr.mxu0 0.0
    %245 = vmatpush1.msra.mxu0 0.0
    %246 = vmatprep.subr.mxu0 0.0
    %247 = vmatpush1.msra.mxu0 0.0
    %248 = vmatprep.subr.mxu0 0.0
    %249 = vmatpush1.msra.mxu0 0.0
    %250 = vmatprep.subr.mxu0 0.0
    %251 = vmatpush1.msra.mxu0 0.0
    %252 = vmatprep.subr.mxu0 0.0
    %253 = vmatpush1.msra.mxu0 0.0
    %254 = vmatprep.subr.mxu0 0.0
    %255 = vmatpush1.msra.mxu0 0.0
    %256 = vmatprep.subr.mxu0 0.0
    %257 = vmatpush1.msra.mxu0 0.0
    %258 = vmatprep.subr.mxu0 0.0
    %259 = vmatpush1.msra.mxu0 0.0
    %260 = vmatprep.subr.mxu0 0.0
    %261 = vmatpush1.msra.mxu0 0.0
    %262 = vmatprep.subr.mxu0 0.0
    %263 = vmatpush1.msra.mxu0 0.0
    %264 = vmatprep.subr.mxu0 0.0
    %265 = vmatpush1.msra.mxu0 0.0
    %266 = vmatprep.subr.mxu0 0.0
    %267 = vmatpush1.msra.mxu0 0.0
    %268 = vmatprep.subr.mxu0 0.0
    %269 = vmatpush1.msra.mxu0 0.0
    %270 = vmatprep.subr.mxu0 0.0
    %271 = vmatpush1.msra.mxu0 0.0
    %272 = vmatprep.mubr.f32.mxu0 0.0
    %273 = vmatmul.mubr.f32.gmra.mrb[0].mxu0 %v203
    %v274 = vpop.f32.mrb[0].mxu0
    %v275 = vadd.f32 %v201, %v274
    %v276 = vpop.f32.mrb[0].mxu0
    %277 = vmatprep.mubr.f32.mxu0 0.0
    %278 = vmatmul.mubr.f32.gmra.mrb[0].mxu0 %v206
    %v279 = vpop.f32.mrb[0].mxu0
    %v280 = vadd.f32 %v201, %v279
    %v281 = vpop.f32.mrb[0].mxu0
    %282 = vdwg.mxu0
    %v283 = vmul.f32 %v275, 0.35355338
    %v284 = vmul.f32 %v280, 0.35355338
    %287 = vrot.lane.b32.xlu0 %v275, 96
    %v288 = vpop.permute.xlu0 %287
    %289 = vrot.lane.b32.xlu0 %v280, 96
    %v290 = vpop.permute.xlu0 %289
    %vm291 = vcmask 64512
    %v293 = vsel %vm291, %v283, 0
    %v296 = vsel %vm291, %v284, 0
    %v298 = vsel %vm291, %v288, 0
    %v300 = vsel %vm291, %v290, 0
    %302 = vmatprep.subr.mxu0 0.0
    %303 = vmatpush1.xpose.msra.mxu0 %v298
    %304 = vmatprep.subr.mxu0 0.0
    %305 = vmatpush1.xpose.msra.mxu0 %v300
    %306 = vmatprep.subr.mxu0 0.0
    %307 = vmatpush1.xpose.msra.mxu0 0.0
    %308 = vmatprep.subr.mxu0 0.0
    %309 = vmatpush1.xpose.msra.mxu0 0.0
    %310 = vmatprep.subr.mxu0 0.0
    %311 = vmatpush1.xpose.msra.mxu0 0.0
    %312 = vmatprep.subr.mxu0 0.0
    %313 = vmatpush1.xpose.msra.mxu0 0.0
    %314 = vmatprep.subr.mxu0 0.0
    %315 = vmatpush1.xpose.msra.mxu0 0.0
    %316 = vmatprep.subr.mxu0 0.0
    %317 = vmatpush1.xpose.msra.mxu0 0.0
    %318 = vmatprep.subr.mxu0 0.0
    %319 = vmatpush1.xpose.msra.mxu0 0.0
    %320 = vmatprep.subr.mxu0 0.0
    %321 = vmatpush1.xpose.msra.mxu0 0.0
    %322 = vmatprep.subr.mxu0 0.0
    %323 = vmatpush1.xpose.msra.mxu0 0.0
    %324 = vmatprep.subr.mxu0 0.0
    %325 = vmatpush1.xpose.msra.mxu0 0.0
    %326 = vmatprep.subr.mxu0 0.0
    %327 = vmatpush1.xpose.msra.mxu0 0.0
    %328 = vmatprep.subr.mxu0 0.0
    %329 = vmatpush1.xpose.msra.mxu0 0.0
    %330 = vmatprep.subr.mxu0 0.0
    %331 = vmatpush1.xpose.msra.mxu0 0.0
    %332 = vmatprep.subr.mxu0 0.0
    %333 = vmatpush1.xpose.msra.mxu0 0.0
    %334 = vmatprep.subr.mxu0 0.0
    %335 = vmatpush1.xpose.msra.mxu0 0.0
    %336 = vmatprep.subr.mxu0 0.0
    %337 = vmatpush1.xpose.msra.mxu0 0.0
    %338 = vmatprep.subr.mxu0 0.0
    %339 = vmatpush1.xpose.msra.mxu0 0.0
    %340 = vmatprep.subr.mxu0 0.0
    %341 = vmatpush1.xpose.msra.mxu0 0.0
    %342 = vmatprep.subr.mxu0 0.0
    %343 = vmatpush1.xpose.msra.mxu0 0.0
    %344 = vmatprep.subr.mxu0 0.0
    %345 = vmatpush1.xpose.msra.mxu0 0.0
    %346 = vmatprep.subr.mxu0 0.0
    %347 = vmatpush1.xpose.msra.mxu0 0.0
    %348 = vmatprep.subr.mxu0 0.0
    %349 = vmatpush1.xpose.msra.mxu0 0.0
    %350 = vmatprep.subr.mxu0 0.0
    %351 = vmatpush1.xpose.msra.mxu0 0.0
    %352 = vmatprep.subr.mxu0 0.0
    %353 = vmatpush1.xpose.msra.mxu0 0.0
    %354 = vmatprep.subr.mxu0 0.0
    %355 = vmatpush1.xpose.msra.mxu0 0.0
    %356 = vmatprep.subr.mxu0 0.0
    %357 = vmatpush1.xpose.msra.mxu0 0.0
    %358 = vmatprep.subr.mxu0 0.0
    %359 = vmatpush1.xpose.msra.mxu0 0.0
    %360 = vmatprep.subr.mxu0 0.0
    %361 = vmatpush1.xpose.msra.mxu0 0.0
    %362 = vmatprep.subr.mxu0 0.0
    %363 = vmatpush1.xpose.msra.mxu0 0.0
    %364 = vmatprep.subr.mxu0 0.0
    %365 = vmatpush1.xpose.msra.mxu0 0.0
    %366 = vmatprep.mubr.f32.mxu0 0.0
    %367 = vmatmul.mubr.f32.gmra.mrb[0].mxu0 %v293
    %v368 = vpop.f32.mrb[0].mxu0
    %v369 = vadd.f32 %v38, %v368
    %v370 = vpop.f32.mrb[0].mxu0
    %371 = vmatprep.mubr.f32.mxu0 0.0
    %372 = vmatmul.mubr.f32.gmra.mrb[0].mxu0 %v296
    %v373 = vpop.f32.mrb[0].mxu0
    %v374 = vadd.f32 %v39, %v373
    %v375 = vpop.f32.mrb[0].mxu0
    %376 = vdwg.mxu0
    %vm377 = vcmask 130048
    %v378 = vsel %vm377, %v369, -inf
    %379 = vmax.xlane.f32.xlu0 %v378
    %v380 = vpop.xlane.xlu0 %379
    %v381 = vsel %vm377, %v374, -inf
    %382 = vmax.xlane.f32.xlu0 %v381
    %v383 = vpop.xlane.xlu0 %382
    %v384 = vsub.f32 %v369, %v380
    %v385 = vsub.f32 %v374, %v383
    %v386 = vmul.f32 %v384, 1.442695
    %v387 = vpow.pop %v386
    %v388 = vmul.f32 %v385, 1.442695
    %v389 = vpow.pop %v388
    %v390 = vsel %vm377, %v387, 0.0
    %391 = vadd.xlane.f32.xlu0 %v390
    %v392 = vpop.xlane.xlu0 %391
    %v393 = vsel %vm377, %v389, 0.0
    %394 = vadd.xlane.f32.xlu0 %v393
    %v395 = vpop.xlane.xlu0 %394
    %v396 = vrcp.pop %v392
    %v397 = vrcp.pop %v395
    %v398 = vmul.f32 %v387, %v396
    %v399 = vmul.f32 %v389, %v397
    %400 = vrot.lane.b32.xlu0 %v275, 64
    %v401 = vpop.permute.xlu0 %400
    %402 = vrot.lane.b32.xlu0 %v280, 64
    %v403 = vpop.permute.xlu0 %402
    %v407 = vsel %vm377, %v398, 0
    %v410 = vsel %vm377, %v399, 0
    %412 = vmatprep.subr.mxu0 0.0
    %413 = vmatpush1.msra.mxu0 %v401
    %414 = vmatprep.subr.mxu0 0.0
    %415 = vmatpush1.msra.mxu0 %v403
    %416 = vmatprep.subr.mxu0 0.0
    %417 = vmatpush1.msra.mxu0 0.0
    %418 = vmatprep.subr.mxu0 0.0
    %419 = vmatpush1.msra.mxu0 0.0
    %420 = vmatprep.subr.mxu0 0.0
    %421 = vmatpush1.msra.mxu0 0.0
    %422 = vmatprep.subr.mxu0 0.0
    %423 = vmatpush1.msra.mxu0 0.0
    %424 = vmatprep.subr.mxu0 0.0
    %425 = vmatpush1.msra.mxu0 0.0
    %426 = vmatprep.subr.mxu0 0.0
    %427 = vmatpush1.msra.mxu0 0.0
    %428 = vmatprep.subr.mxu0 0.0
    %429 = vmatpush1.msra.mxu0 0.0
    %430 = vmatprep.subr.mxu0 0.0
    %431 = vmatpush1.msra.mxu0 0.0
    %432 = vmatprep.subr.mxu0 0.0
    %433 = vmatpush1.msra.mxu0 0.0
    %434 = vmatprep.subr.mxu0 0.0
    %435 = vmatpush1.msra.mxu0 0.0
    %436 = vmatprep.subr.mxu0 0.0
    %437 = vmatpush1.msra.mxu0 0.0
    %438 = vmatprep.subr.mxu0 0.0
    %439 = vmatpush1.msra.mxu0 0.0
    %440 = vmatprep.subr.mxu0 0.0
    %441 = vmatpush1.msra.mxu0 0.0
    %442 = vmatprep.subr.mxu0 0.0
    %443 = vmatpush1.msra.mxu0 0.0
    %444 = vmatprep.subr.mxu0 0.0
    %445 = vmatpush1.msra.mxu0 0.0
    %446 = vmatprep.subr.mxu0 0.0
    %447 = vmatpush1.msra.mxu0 0.0
    %448 = vmatprep.subr.mxu0 0.0
    %449 = vmatpush1.msra.mxu0 0.0
    %450 = vmatprep.subr.mxu0 0.0
    %451 = vmatpush1.msra.mxu0 0.0
    %452 = vmatprep.subr.mxu0 0.0
    %453 = vmatpush1.msra.mxu0 0.0
    %454 = vmatprep.subr.mxu0 0.0
    %455 = vmatpush1.msra.mxu0 0.0
    %456 = vmatprep.subr.mxu0 0.0
    %457 = vmatpush1.msra.mxu0 0.0
    %458 = vmatprep.subr.mxu0 0.0
    %459 = vmatpush1.msra.mxu0 0.0
    %460 = vmatprep.subr.mxu0 0.0
    %461 = vmatpush1.msra.mxu0 0.0
    %462 = vmatprep.subr.mxu0 0.0
    %463 = vmatpush1.msra.mxu0 0.0
    %464 = vmatprep.subr.mxu0 0.0
    %465 = vmatpush1.msra.mxu0 0.0
    %466 = vmatprep.subr.mxu0 0.0
    %467 = vmatpush1.msra.mxu0 0.0
    %468 = vmatprep.subr.mxu0 0.0
    %469 = vmatpush1.msra.mxu0 0.0
    %470 = vmatprep.subr.mxu0 0.0
    %471 = vmatpush1.msra.mxu0 0.0
    %472 = vmatprep.subr.mxu0 0.0
    %473 = vmatpush1.msra.mxu0 0.0
    %474 = vmatprep.subr.mxu0 0.0
    %475 = vmatpush1.msra.mxu0 0.0
    %476 = vmatprep.mubr.f32.mxu0 0.0
    %477 = vmatmul.mubr.f32.gmra.mrb[0].mxu0 %v407
    %v478 = vpop.f32.mrb[0].mxu0
    %v479 = vadd.f32 0.0, %v478
    %v480 = vpop.f32.mrb[0].mxu0
    %481 = vmatprep.mubr.f32.mxu0 0.0
    %482 = vmatmul.mubr.f32.gmra.mrb[0].mxu0 %v410
    %v483 = vpop.f32.mrb[0].mxu0
    %v484 = vadd.f32 0.0, %v483
    %v485 = vpop.f32.mrb[0].mxu0
    %486 = vdwg.mxu0
    %487 = vrot.lane.b32.xlu0 %v283, 120
    %v488 = vpop.permute.xlu0 %487
    %489 = vrot.lane.b32.xlu0 %v284, 120
    %v490 = vpop.permute.xlu0 %489
    %491 = vrot.lane.b32.xlu0 %v275, 88
    %v492 = vpop.permute.xlu0 %491
    %493 = vrot.lane.b32.xlu0 %v280, 88
    %v494 = vpop.permute.xlu0 %493
    %v495 = vsel %vm291, %v488, 0
    %v497 = vsel %vm291, %v490, 0
    %v499 = vsel %vm291, %v492, 0
    %v501 = vsel %vm291, %v494, 0
    %503 = vmatprep.subr.mxu0 0.0
    %504 = vmatpush1.xpose.msra.mxu0 %v499
    %505 = vmatprep.subr.mxu0 0.0
    %506 = vmatpush1.xpose.msra.mxu0 %v501
    %507 = vmatprep.subr.mxu0 0.0
    %508 = vmatpush1.xpose.msra.mxu0 0.0
    %509 = vmatprep.subr.mxu0 0.0
    %510 = vmatpush1.xpose.msra.mxu0 0.0
    %511 = vmatprep.subr.mxu0 0.0
    %512 = vmatpush1.xpose.msra.mxu0 0.0
    %513 = vmatprep.subr.mxu0 0.0
    %514 = vmatpush1.xpose.msra.mxu0 0.0
    %515 = vmatprep.subr.mxu0 0.0
    %516 = vmatpush1.xpose.msra.mxu0 0.0
    %517 = vmatprep.subr.mxu0 0.0
    %518 = vmatpush1.xpose.msra.mxu0 0.0
    %519 = vmatprep.subr.mxu0 0.0
    %520 = vmatpush1.xpose.msra.mxu0 0.0
    %521 = vmatprep.subr.mxu0 0.0
    %522 = vmatpush1.xpose.msra.mxu0 0.0
    %523 = vmatprep.subr.mxu0 0.0
    %524 = vmatpush1.xpose.msra.mxu0 0.0
    %525 = vmatprep.subr.mxu0 0.0
    %526 = vmatpush1.xpose.msra.mxu0 0.0
    %527 = vmatprep.subr.mxu0 0.0
    %528 = vmatpush1.xpose.msra.mxu0 0.0
    %529 = vmatprep.subr.mxu0 0.0
    %530 = vmatpush1.xpose.msra.mxu0 0.0
    %531 = vmatprep.subr.mxu0 0.0
    %532 = vmatpush1.xpose.msra.mxu0 0.0
    %533 = vmatprep.subr.mxu0 0.0
    %534 = vmatpush1.xpose.msra.mxu0 0.0
    %535 = vmatprep.subr.mxu0 0.0
    %536 = vmatpush1.xpose.msra.mxu0 0.0
    %537 = vmatprep.subr.mxu0 0.0
    %538 = vmatpush1.xpose.msra.mxu0 0.0
    %539 = vmatprep.subr.mxu0 0.0
    %540 = vmatpush1.xpose.msra.mxu0 0.0
    %541 = vmatprep.subr.mxu0 0.0
    %542 = vmatpush1.xpose.msra.mxu0 0.0
    %543 = vmatprep.subr.mxu0 0.0
    %544 = vmatpush1.xpose.msra.mxu0 0.0
    %545 = vmatprep.subr.mxu0 0.0
    %546 = vmatpush1.xpose.msra.mxu0 0.0
    %547 = vmatprep.subr.mxu0 0.0
    %548 = vmatpush1.xpose.msra.mxu0 0.0
    %549 = vmatprep.subr.mxu0 0.0
    %550 = vmatpush1.xpose.msra.mxu0 0.0
    %551 = vmatprep.subr.mxu0 0.0
    %552 = vmatpush1.xpose.msra.mxu0 0.0
    %553 = vmatprep.subr.mxu0 0.0
    %554 = vmatpush1.xpose.msra.mxu0 0.0
    %555 = vmatprep.subr.mxu0 0.0
    %556 = vmatpush1.xpose.msra.mxu0 0.0
    %557 = vmatprep.subr.mxu0 0.0
    %558 = vmatpush1.xpose.msra.mxu0 0.0
    %559 = vmatprep.subr.mxu0 0.0
    %560 = vmatpush1.xpose.msra.mxu0 0.0
    %561 = vmatprep.subr.mxu0 0.0
    %562 = vmatpush1.xpose.msra.mxu0 0.0
    %563 = vmatprep.subr.mxu0 0.0
    %564 = vmatpush1.xpose.msra.mxu0 0.0
    %565 = vmatprep.subr.mxu0 0.0
    %566 = vmatpush1.xpose.msra.mxu0 0.0
    %567 = vmatprep.mubr.f32.mxu0 0.0
    %568 = vmatmul.mubr.f32.gmra.mrb[0].mxu0 %v495
    %v569 = vpop.f32.mrb[0].mxu0
    %v570 = vadd.f32 %v38, %v569
    %v571 = vpop.f32.mrb[0].mxu0
    %572 = vmatprep.mubr.f32.mxu0 0.0
    %573 = vmatmul.mubr.f32.gmra.mrb[0].mxu0 %v497
    %v574 = vpop.f32.mrb[0].mxu0
    %v575 = vadd.f32 %v39, %v574
    %v576 = vpop.f32.mrb[0].mxu0
    %577 = vdwg.mxu0
    %v578 = vsel %vm377, %v570, -inf
    %579 = vmax.xlane.f32.xlu0 %v578
    %v580 = vpop.xlane.xlu0 %579
    %v581 = vsel %vm377, %v575, -inf
    %582 = vmax.xlane.f32.xlu0 %v581
    %v583 = vpop.xlane.xlu0 %582
    %v584 = vsub.f32 %v570, %v580
    %v585 = vsub.f32 %v575, %v583
    %v586 = vmul.f32 %v584, 1.442695
    %v587 = vpow.pop %v586
    %v588 = vmul.f32 %v585, 1.442695
    %v589 = vpow.pop %v588
    %v590 = vsel %vm377, %v587, 0.0
    %591 = vadd.xlane.f32.xlu0 %v590
    %v592 = vpop.xlane.xlu0 %591
    %v593 = vsel %vm377, %v589, 0.0
    %594 = vadd.xlane.f32.xlu0 %v593
    %v595 = vpop.xlane.xlu0 %594
    %v596 = vrcp.pop %v592
    %v597 = vrcp.pop %v595
    %v598 = vmul.f32 %v587, %v596
    %v599 = vmul.f32 %v589, %v597
    %600 = vrot.lane.b32.xlu0 %v275, 56
    %v601 = vpop.permute.xlu0 %600
    %602 = vrot.lane.b32.xlu0 %v280, 56
    %v603 = vpop.permute.xlu0 %602
    %v607 = vsel %vm377, %v598, 0
    %v610 = vsel %vm377, %v599, 0
    %612 = vmatprep.subr.mxu0 0.0
    %613 = vmatpush1.msra.mxu0 %v601
    %614 = vmatprep.subr.mxu0 0.0
    %615 = vmatpush1.msra.mxu0 %v603
    %616 = vmatprep.subr.mxu0 0.0
    %617 = vmatpush1.msra.mxu0 0.0
    %618 = vmatprep.subr.mxu0 0.0
    %619 = vmatpush1.msra.mxu0 0.0
    %620 = vmatprep.subr.mxu0 0.0
    %621 = vmatpush1.msra.mxu0 0.0
    %622 = vmatprep.subr.mxu0 0.0
    %623 = vmatpush1.msra.mxu0 0.0
    %624 = vmatprep.subr.mxu0 0.0
    %625 = vmatpush1.msra.mxu0 0.0
    %626 = vmatprep.subr.mxu0 0.0
    %627 = vmatpush1.msra.mxu0 0.0
    %628 = vmatprep.subr.mxu0 0.0
    %629 = vmatpush1.msra.mxu0 0.0
    %630 = vmatprep.subr.mxu0 0.0
    %631 = vmatpush1.msra.mxu0 0.0
    %632 = vmatprep.subr.mxu0 0.0
    %633 = vmatpush1.msra.mxu0 0.0
    %634 = vmatprep.subr.mxu0 0.0
    %635 = vmatpush1.msra.mxu0 0.0
    %636 = vmatprep.subr.mxu0 0.0
    %637 = vmatpush1.msra.mxu0 0.0
    %638 = vmatprep.subr.mxu0 0.0
    %639 = vmatpush1.msra.mxu0 0.0
    %640 = vmatprep.subr.mxu0 0.0
    %641 = vmatpush1.msra.mxu0 0.0
    %642 = vmatprep.subr.mxu0 0.0
    %643 = vmatpush1.msra.mxu0 0.0
    %644 = vmatprep.subr.mxu0 0.0
    %645 = vmatpush1.msra.mxu0 0.0
    %646 = vmatprep.subr.mxu0 0.0
    %647 = vmatpush1.msra.mxu0 0.0
    %648 = vmatprep.subr.mxu0 0.0
    %649 = vmatpush1.msra.mxu0 0.0
    %650 = vmatprep.subr.mxu0 0.0
    %651 = vmatpush1.msra.mxu0 0.0
    %652 = vmatprep.subr.mxu0 0.0
    %653 = vmatpush1.msra.mxu0 0.0
    %654 = vmatprep.subr.mxu0 0.0
    %655 = vmatpush1.msra.mxu0 0.0
    %656 = vmatprep.subr.mxu0 0.0
    %657 = vmatpush1.msra.mxu0 0.0
    %658 = vmatprep.subr.mxu0 0.0
    %659 = vmatpush1.msra.mxu0 0.0
    %660 = vmatprep.subr.mxu0 0.0
    %661 = vmatpush1.msra.mxu0 0.0
    %662 = vmatprep.subr.mxu0 0.0
    %663 = vmatpush1.msra.mxu0 0.0
    %664 = vmatprep.subr.mxu0 0.0
    %665 = vmatpush1.msra.mxu0 0.0
    %666 = vmatprep.subr.mxu0 0.0
    %667 = vmatpush1.msra.mxu0 0.0
    %668 = vmatprep.subr.mxu0 0.0
    %669 = vmatpush1.msra.mxu0 0.0
    %670 = vmatprep.subr.mxu0 0.0
    %671 = vmatpush1.msra.mxu0 0.0
    %672 = vmatprep.subr.mxu0 0.0
    %673 = vmatpush1.msra.mxu0 0.0
    %674 = vmatprep.subr.mxu0 0.0
    %675 = vmatpush1.msra.mxu0 0.0
    %676 = vmatprep.mubr.f32.mxu0 0.0
    %677 = vmatmul.mubr.f32.gmra.mrb[0].mxu0 %v607
    %v678 = vpop.f32.mrb[0].mxu0
    %v679 = vadd.f32 0.0, %v678
    %v680 = vpop.f32.mrb[0].mxu0
    %681 = vmatprep.mubr.f32.mxu0 0.0
    %682 = vmatmul.mubr.f32.gmra.mrb[0].mxu0 %v610
    %v683 = vpop.f32.mrb[0].mxu0
    %v684 = vadd.f32 0.0, %v683
    %v685 = vpop.f32.mrb[0].mxu0
    %686 = vdwg.mxu0
    %687 = vrot.lane.b32.xlu0 %v283, 112
    %v688 = vpop.permute.xlu0 %687
    %689 = vrot.lane.b32.xlu0 %v284, 112
    %v690 = vpop.permute.xlu0 %689
    %691 = vrot.lane.b32.xlu0 %v275, 80
    %v692 = vpop.permute.xlu0 %691
    %693 = vrot.lane.b32.xlu0 %v280, 80
    %v694 = vpop.permute.xlu0 %693
    %v695 = vsel %vm291, %v688, 0
    %v697 = vsel %vm291, %v690, 0
    %v699 = vsel %vm291, %v692, 0
    %v701 = vsel %vm291, %v694, 0
    %703 = vmatprep.subr.mxu0 0.0
    %704 = vmatpush1.xpose.msra.mxu0 %v699
    %705 = vmatprep.subr.mxu0 0.0
    %706 = vmatpush1.xpose.msra.mxu0 %v701
    %707 = vmatprep.subr.mxu0 0.0
    %708 = vmatpush1.xpose.msra.mxu0 0.0
    %709 = vmatprep.subr.mxu0 0.0
    %710 = vmatpush1.xpose.msra.mxu0 0.0
    %711 = vmatprep.subr.mxu0 0.0
    %712 = vmatpush1.xpose.msra.mxu0 0.0
    %713 = vmatprep.subr.mxu0 0.0
    %714 = vmatpush1.xpose.msra.mxu0 0.0
    %715 = vmatprep.subr.mxu0 0.0
    %716 = vmatpush1.xpose.msra.mxu0 0.0
    %717 = vmatprep.subr.mxu0 0.0
    %718 = vmatpush1.xpose.msra.mxu0 0.0
    %719 = vmatprep.subr.mxu0 0.0
    %720 = vmatpush1.xpose.msra.mxu0 0.0
    %721 = vmatprep.subr.mxu0 0.0
    %722 = vmatpush1.xpose.msra.mxu0 0.0
    %723 = vmatprep.subr.mxu0 0.0
    %724 = vmatpush1.xpose.msra.mxu0 0.0
    %725 = vmatprep.subr.mxu0 0.0
    %726 = vmatpush1.xpose.msra.mxu0 0.0
    %727 = vmatprep.subr.mxu0 0.0
    %728 = vmatpush1.xpose.msra.mxu0 0.0
    %729 = vmatprep.subr.mxu0 0.0
    %730 = vmatpush1.xpose.msra.mxu0 0.0
    %731 = vmatprep.subr.mxu0 0.0
    %732 = vmatpush1.xpose.msra.mxu0 0.0
    %733 = vmatprep.subr.mxu0 0.0
    %734 = vmatpush1.xpose.msra.mxu0 0.0
    %735 = vmatprep.subr.mxu0 0.0
    %736 = vmatpush1.xpose.msra.mxu0 0.0
    %737 = vmatprep.subr.mxu0 0.0
    %738 = vmatpush1.xpose.msra.mxu0 0.0
    %739 = vmatprep.subr.mxu0 0.0
    %740 = vmatpush1.xpose.msra.mxu0 0.0
    %741 = vmatprep.subr.mxu0 0.0
    %742 = vmatpush1.xpose.msra.mxu0 0.0
    %743 = vmatprep.subr.mxu0 0.0
    %744 = vmatpush1.xpose.msra.mxu0 0.0
    %745 = vmatprep.subr.mxu0 0.0
    %746 = vmatpush1.xpose.msra.mxu0 0.0
    %747 = vmatprep.subr.mxu0 0.0
    %748 = vmatpush1.xpose.msra.mxu0 0.0
    %749 = vmatprep.subr.mxu0 0.0
    %750 = vmatpush1.xpose.msra.mxu0 0.0
    %751 = vmatprep.subr.mxu0 0.0
    %752 = vmatpush1.xpose.msra.mxu0 0.0
    %753 = vmatprep.subr.mxu0 0.0
    %754 = vmatpush1.xpose.msra.mxu0 0.0
    %755 = vmatprep.subr.mxu0 0.0
    %756 = vmatpush1.xpose.msra.mxu0 0.0
    %757 = vmatprep.subr.mxu0 0.0
    %758 = vmatpush1.xpose.msra.mxu0 0.0
    %759 = vmatprep.subr.mxu0 0.0
    %760 = vmatpush1.xpose.msra.mxu0 0.0
    %761 = vmatprep.subr.mxu0 0.0
    %762 = vmatpush1.xpose.msra.mxu0 0.0
    %763 = vmatprep.subr.mxu0 0.0
    %764 = vmatpush1.xpose.msra.mxu0 0.0
    %765 = vmatprep.subr.mxu0 0.0
    %766 = vmatpush1.xpose.msra.mxu0 0.0
    %767 = vmatprep.mubr.f32.mxu0 0.0
    %768 = vmatmul.mubr.f32.gmra.mrb[0].mxu0 %v695
    %v769 = vpop.f32.mrb[0].mxu0
    %v770 = vadd.f32 %v38, %v769
    %v771 = vpop.f32.mrb[0].mxu0
    %772 = vmatprep.mubr.f32.mxu0 0.0
    %773 = vmatmul.mubr.f32.gmra.mrb[0].mxu0 %v697
    %v774 = vpop.f32.mrb[0].mxu0
    %v775 = vadd.f32 %v39, %v774
    %v776 = vpop.f32.mrb[0].mxu0
    %777 = vdwg.mxu0
    %v778 = vsel %vm377, %v770, -inf
    %779 = vmax.xlane.f32.xlu0 %v778
    %v780 = vpop.xlane.xlu0 %779
    %v781 = vsel %vm377, %v775, -inf
    %782 = vmax.xlane.f32.xlu0 %v781
    %v783 = vpop.xlane.xlu0 %782
    %v784 = vsub.f32 %v770, %v780
    %v785 = vsub.f32 %v775, %v783
    %v786 = vmul.f32 %v784, 1.442695
    %v787 = vpow.pop %v786
    %v788 = vmul.f32 %v785, 1.442695
    %v789 = vpow.pop %v788
    %v790 = vsel %vm377, %v787, 0.0
    %791 = vadd.xlane.f32.xlu0 %v790
    %v792 = vpop.xlane.xlu0 %791
    %v793 = vsel %vm377, %v789, 0.0
    %794 = vadd.xlane.f32.xlu0 %v793
    %v795 = vpop.xlane.xlu0 %794
    %v796 = vrcp.pop %v792
    %v797 = vrcp.pop %v795
    %v798 = vmul.f32 %v787, %v796
    %v799 = vmul.f32 %v789, %v797
    %800 = vrot.lane.b32.xlu0 %v275, 48
    %v801 = vpop.permute.xlu0 %800
    %802 = vrot.lane.b32.xlu0 %v280, 48
    %v803 = vpop.permute.xlu0 %802
    %v807 = vsel %vm377, %v798, 0
    %v810 = vsel %vm377, %v799, 0
    %812 = vmatprep.subr.mxu0 0.0
    %813 = vmatpush1.msra.mxu0 %v801
    %814 = vmatprep.subr.mxu0 0.0
    %815 = vmatpush1.msra.mxu0 %v803
    %816 = vmatprep.subr.mxu0 0.0
    %817 = vmatpush1.msra.mxu0 0.0
    %818 = vmatprep.subr.mxu0 0.0
    %819 = vmatpush1.msra.mxu0 0.0
    %820 = vmatprep.subr.mxu0 0.0
    %821 = vmatpush1.msra.mxu0 0.0
    %822 = vmatprep.subr.mxu0 0.0
    %823 = vmatpush1.msra.mxu0 0.0
    %824 = vmatprep.subr.mxu0 0.0
    %825 = vmatpush1.msra.mxu0 0.0
    %826 = vmatprep.subr.mxu0 0.0
    %827 = vmatpush1.msra.mxu0 0.0
    %828 = vmatprep.subr.mxu0 0.0
    %829 = vmatpush1.msra.mxu0 0.0
    %830 = vmatprep.subr.mxu0 0.0
    %831 = vmatpush1.msra.mxu0 0.0
    %832 = vmatprep.subr.mxu0 0.0
    %833 = vmatpush1.msra.mxu0 0.0
    %834 = vmatprep.subr.mxu0 0.0
    %835 = vmatpush1.msra.mxu0 0.0
    %836 = vmatprep.subr.mxu0 0.0
    %837 = vmatpush1.msra.mxu0 0.0
    %838 = vmatprep.subr.mxu0 0.0
    %839 = vmatpush1.msra.mxu0 0.0
    %840 = vmatprep.subr.mxu0 0.0
    %841 = vmatpush1.msra.mxu0 0.0
    %842 = vmatprep.subr.mxu0 0.0
    %843 = vmatpush1.msra.mxu0 0.0
    %844 = vmatprep.subr.mxu0 0.0
    %845 = vmatpush1.msra.mxu0 0.0
    %846 = vmatprep.subr.mxu0 0.0
    %847 = vmatpush1.msra.mxu0 0.0
    %848 = vmatprep.subr.mxu0 0.0
    %849 = vmatpush1.msra.mxu0 0.0
    %850 = vmatprep.subr.mxu0 0.0
    %851 = vmatpush1.msra.mxu0 0.0
    %852 = vmatprep.subr.mxu0 0.0
    %853 = vmatpush1.msra.mxu0 0.0
    %854 = vmatprep.subr.mxu0 0.0
    %855 = vmatpush1.msra.mxu0 0.0
    %856 = vmatprep.subr.mxu0 0.0
    %857 = vmatpush1.msra.mxu0 0.0
    %858 = vmatprep.subr.mxu0 0.0
    %859 = vmatpush1.msra.mxu0 0.0
    %860 = vmatprep.subr.mxu0 0.0
    %861 = vmatpush1.msra.mxu0 0.0
    %862 = vmatprep.subr.mxu0 0.0
    %863 = vmatpush1.msra.mxu0 0.0
    %864 = vmatprep.subr.mxu0 0.0
    %865 = vmatpush1.msra.mxu0 0.0
    %866 = vmatprep.subr.mxu0 0.0
    %867 = vmatpush1.msra.mxu0 0.0
    %868 = vmatprep.subr.mxu0 0.0
    %869 = vmatpush1.msra.mxu0 0.0
    %870 = vmatprep.subr.mxu0 0.0
    %871 = vmatpush1.msra.mxu0 0.0
    %872 = vmatprep.subr.mxu0 0.0
    %873 = vmatpush1.msra.mxu0 0.0
    %874 = vmatprep.subr.mxu0 0.0
    %875 = vmatpush1.msra.mxu0 0.0
    %876 = vmatprep.mubr.f32.mxu0 0.0
    %877 = vmatmul.mubr.f32.gmra.mrb[0].mxu0 %v807
    %v878 = vpop.f32.mrb[0].mxu0
    %v879 = vadd.f32 0.0, %v878
    %v880 = vpop.f32.mrb[0].mxu0
    %881 = vmatprep.mubr.f32.mxu0 0.0
    %882 = vmatmul.mubr.f32.gmra.mrb[0].mxu0 %v810
    %v883 = vpop.f32.mrb[0].mxu0
    %v884 = vadd.f32 0.0, %v883
    %v885 = vpop.f32.mrb[0].mxu0
    %886 = vdwg.mxu0
    %887 = vrot.lane.b32.xlu0 %v283, 104
    %v888 = vpop.permute.xlu0 %887
    %889 = vrot.lane.b32.xlu0 %v284, 104
    %v890 = vpop.permute.xlu0 %889
    %891 = vrot.lane.b32.xlu0 %v275, 72
    %v892 = vpop.permute.xlu0 %891
    %893 = vrot.lane.b32.xlu0 %v280, 72
    %v894 = vpop.permute.xlu0 %893
    %v895 = vsel %vm291, %v888, 0
    %v897 = vsel %vm291, %v890, 0
    %v899 = vsel %vm291, %v892, 0
    %v901 = vsel %vm291, %v894, 0
    %903 = vmatprep.subr.mxu0 0.0
    %904 = vmatpush1.xpose.msra.mxu0 %v899
    %905 = vmatprep.subr.mxu0 0.0
    %906 = vmatpush1.xpose.msra.mxu0 %v901
    %907 = vmatprep.subr.mxu0 0.0
    %908 = vmatpush1.xpose.msra.mxu0 0.0
    %909 = vmatprep.subr.mxu0 0.0
    %910 = vmatpush1.xpose.msra.mxu0 0.0
    %911 = vmatprep.subr.mxu0 0.0
    %912 = vmatpush1.xpose.msra.mxu0 0.0
    %913 = vmatprep.subr.mxu0 0.0
    %914 = vmatpush1.xpose.msra.mxu0 0.0
    %915 = vmatprep.subr.mxu0 0.0
    %916 = vmatpush1.xpose.msra.mxu0 0.0
    %917 = vmatprep.subr.mxu0 0.0
    %918 = vmatpush1.xpose.msra.mxu0 0.0
    %919 = vmatprep.subr.mxu0 0.0
    %920 = vmatpush1.xpose.msra.mxu0 0.0
    %921 = vmatprep.subr.mxu0 0.0
    %922 = vmatpush1.xpose.msra.mxu0 0.0
    %923 = vmatprep.subr.mxu0 0.0
    %924 = vmatpush1.xpose.msra.mxu0 0.0
    %925 = vmatprep.subr.mxu0 0.0
    %926 = vmatpush1.xpose.msra.mxu0 0.0
    %927 = vmatprep.subr.mxu0 0.0
    %928 = vmatpush1.xpose.msra.mxu0 0.0
    %929 = vmatprep.subr.mxu0 0.0
    %930 = vmatpush1.xpose.msra.mxu0 0.0
    %931 = vmatprep.subr.mxu0 0.0
    %932 = vmatpush1.xpose.msra.mxu0 0.0
    %933 = vmatprep.subr.mxu0 0.0
    %934 = vmatpush1.xpose.msra.mxu0 0.0
    %935 = vmatprep.subr.mxu0 0.0
    %936 = vmatpush1.xpose.msra.mxu0 0.0
    %937 = vmatprep.subr.mxu0 0.0
    %938 = vmatpush1.xpose.msra.mxu0 0.0
    %939 = vmatprep.subr.mxu0 0.0
    %940 = vmatpush1.xpose.msra.mxu0 0.0
    %941 = vmatprep.subr.mxu0 0.0
    %942 = vmatpush1.xpose.msra.mxu0 0.0
    %943 = vmatprep.subr.mxu0 0.0
    %944 = vmatpush1.xpose.msra.mxu0 0.0
    %945 = vmatprep.subr.mxu0 0.0
    %946 = vmatpush1.xpose.msra.mxu0 0.0
    %947 = vmatprep.subr.mxu0 0.0
    %948 = vmatpush1.xpose.msra.mxu0 0.0
    %949 = vmatprep.subr.mxu0 0.0
    %950 = vmatpush1.xpose.msra.mxu0 0.0
    %951 = vmatprep.subr.mxu0 0.0
    %952 = vmatpush1.xpose.msra.mxu0 0.0
    %953 = vmatprep.subr.mxu0 0.0
    %954 = vmatpush1.xpose.msra.mxu0 0.0
    %955 = vmatprep.subr.mxu0 0.0
    %956 = vmatpush1.xpose.msra.mxu0 0.0
    %957 = vmatprep.subr.mxu0 0.0
    %958 = vmatpush1.xpose.msra.mxu0 0.0
    %959 = vmatprep.subr.mxu0 0.0
    %960 = vmatpush1.xpose.msra.mxu0 0.0
    %961 = vmatprep.subr.mxu0 0.0
    %962 = vmatpush1.xpose.msra.mxu0 0.0
    %963 = vmatprep.subr.mxu0 0.0
    %964 = vmatpush1.xpose.msra.mxu0 0.0
    %965 = vmatprep.subr.mxu0 0.0
    %966 = vmatpush1.xpose.msra.mxu0 0.0
    %967 = vmatprep.mubr.f32.mxu0 0.0
    %968 = vmatmul.mubr.f32.gmra.mrb[0].mxu0 %v895
    %v969 = vpop.f32.mrb[0].mxu0
    %v970 = vadd.f32 %v38, %v969
    %v971 = vpop.f32.mrb[0].mxu0
    %972 = vmatprep.mubr.f32.mxu0 0.0
    %973 = vmatmul.mubr.f32.gmra.mrb[0].mxu0 %v897
    %v974 = vpop.f32.mrb[0].mxu0
    %v975 = vadd.f32 %v39, %v974
    %v976 = vpop.f32.mrb[0].mxu0
    %977 = vdwg.mxu0
    %v978 = vsel %vm377, %v970, -inf
    %979 = vmax.xlane.f32.xlu0 %v978
    %v980 = vpop.xlane.xlu0 %979
    %v981 = vsel %vm377, %v975, -inf
    %982 = vmax.xlane.f32.xlu0 %v981
    %v983 = vpop.xlane.xlu0 %982
    %v984 = vsub.f32 %v970, %v980
    %v985 = vsub.f32 %v975, %v983
    %v986 = vmul.f32 %v984, 1.442695
    %v987 = vpow.pop %v986
    %v988 = vmul.f32 %v985, 1.442695
    %v989 = vpow.pop %v988
    %v990 = vsel %vm377, %v987, 0.0
    %991 = vadd.xlane.f32.xlu0 %v990
    %v992 = vpop.xlane.xlu0 %991
    %v993 = vsel %vm377, %v989, 0.0
    %994 = vadd.xlane.f32.xlu0 %v993
    %v995 = vpop.xlane.xlu0 %994
    %v996 = vrcp.pop %v992
    %v997 = vrcp.pop %v995
    %v998 = vmul.f32 %v987, %v996
    %v999 = vmul.f32 %v989, %v997
    %1000 = vrot.lane.b32.xlu0 %v275, 40
    %v1001 = vpop.permute.xlu0 %1000
    %1002 = vrot.lane.b32.xlu0 %v280, 40
    %v1003 = vpop.permute.xlu0 %1002
    %v1007 = vsel %vm377, %v998, 0
    %v1010 = vsel %vm377, %v999, 0
    %1012 = vmatprep.subr.mxu0 0.0
    %1013 = vmatpush1.msra.mxu0 %v1001
    %1014 = vmatprep.subr.mxu0 0.0
    %1015 = vmatpush1.msra.mxu0 %v1003
    %1016 = vmatprep.subr.mxu0 0.0
    %1017 = vmatpush1.msra.mxu0 0.0
    %1018 = vmatprep.subr.mxu0 0.0
    %1019 = vmatpush1.msra.mxu0 0.0
    %1020 = vmatprep.subr.mxu0 0.0
    %1021 = vmatpush1.msra.mxu0 0.0
    %1022 = vmatprep.subr.mxu0 0.0
    %1023 = vmatpush1.msra.mxu0 0.0
    %1024 = vmatprep.subr.mxu0 0.0
    %1025 = vmatpush1.msra.mxu0 0.0
    %1026 = vmatprep.subr.mxu0 0.0
    %1027 = vmatpush1.msra.mxu0 0.0
    %1028 = vmatprep.subr.mxu0 0.0
    %1029 = vmatpush1.msra.mxu0 0.0
    %1030 = vmatprep.subr.mxu0 0.0
    %1031 = vmatpush1.msra.mxu0 0.0
    %1032 = vmatprep.subr.mxu0 0.0
    %1033 = vmatpush1.msra.mxu0 0.0
    %1034 = vmatprep.subr.mxu0 0.0
    %1035 = vmatpush1.msra.mxu0 0.0
    %1036 = vmatprep.subr.mxu0 0.0
    %1037 = vmatpush1.msra.mxu0 0.0
    %1038 = vmatprep.subr.mxu0 0.0
    %1039 = vmatpush1.msra.mxu0 0.0
    %1040 = vmatprep.subr.mxu0 0.0
    %1041 = vmatpush1.msra.mxu0 0.0
    %1042 = vmatprep.subr.mxu0 0.0
    %1043 = vmatpush1.msra.mxu0 0.0
    %1044 = vmatprep.subr.mxu0 0.0
    %1045 = vmatpush1.msra.mxu0 0.0
    %1046 = vmatprep.subr.mxu0 0.0
    %1047 = vmatpush1.msra.mxu0 0.0
    %1048 = vmatprep.subr.mxu0 0.0
    %1049 = vmatpush1.msra.mxu0 0.0
    %1050 = vmatprep.subr.mxu0 0.0
    %1051 = vmatpush1.msra.mxu0 0.0
    %1052 = vmatprep.subr.mxu0 0.0
    %1053 = vmatpush1.msra.mxu0 0.0
    %1054 = vmatprep.subr.mxu0 0.0
    %1055 = vmatpush1.msra.mxu0 0.0
    %1056 = vmatprep.subr.mxu0 0.0
    %1057 = vmatpush1.msra.mxu0 0.0
    %1058 = vmatprep.subr.mxu0 0.0
    %1059 = vmatpush1.msra.mxu0 0.0
    %1060 = vmatprep.subr.mxu0 0.0
    %1061 = vmatpush1.msra.mxu0 0.0
    %1062 = vmatprep.subr.mxu0 0.0
    %1063 = vmatpush1.msra.mxu0 0.0
    %1064 = vmatprep.subr.mxu0 0.0
    %1065 = vmatpush1.msra.mxu0 0.0
    %1066 = vmatprep.subr.mxu0 0.0
    %1067 = vmatpush1.msra.mxu0 0.0
    %1068 = vmatprep.subr.mxu0 0.0
    %1069 = vmatpush1.msra.mxu0 0.0
    %1070 = vmatprep.subr.mxu0 0.0
    %1071 = vmatpush1.msra.mxu0 0.0
    %1072 = vmatprep.subr.mxu0 0.0
    %1073 = vmatpush1.msra.mxu0 0.0
    %1074 = vmatprep.subr.mxu0 0.0
    %1075 = vmatpush1.msra.mxu0 0.0
    %1076 = vmatprep.mubr.f32.mxu0 0.0
    %1077 = vmatmul.mubr.f32.gmra.mrb[0].mxu0 %v1007
    %v1078 = vpop.f32.mrb[0].mxu0
    %v1079 = vadd.f32 0.0, %v1078
    %v1080 = vpop.f32.mrb[0].mxu0
    %1081 = vmatprep.mubr.f32.mxu0 0.0
    %1082 = vmatmul.mubr.f32.gmra.mrb[0].mxu0 %v1010
    %v1083 = vpop.f32.mrb[0].mxu0
    %v1084 = vadd.f32 0.0, %v1083
    %v1085 = vpop.f32.mrb[0].mxu0
    %1086 = vdwg.mxu0
    %1089 = vrot.lane.b32.xlu0 %v679, 8
    %v1090 = vpop.permute.xlu0 %1089
    %1091 = vrot.lane.b32.xlu0 %v684, 8
    %v1092 = vpop.permute.xlu0 %1091
    %1097 = vrot.lane.b32.xlu0 %v879, 16
    %v1098 = vpop.permute.xlu0 %1097
    %1099 = vrot.lane.b32.xlu0 %v884, 16
    %v1100 = vpop.permute.xlu0 %1099
    %1105 = vrot.lane.b32.xlu0 %v1079, 24
    %v1106 = vpop.permute.xlu0 %1105
    %1107 = vrot.lane.b32.xlu0 %v1084, 24
    %v1108 = vpop.permute.xlu0 %1107
    %v1111 = vsel %vm291, %v479, %v1090
    %v1112 = vsel %vm291, %v484, %v1092
    %v1113 = vsel %vm377, %v1111, %v1098
    %v1114 = vsel %vm377, %v1112, %v1100
    %vm1115 = vcmask 195584
    %v1116 = vsel %vm1115, %v1113, %v1106
    %v1117 = vsel %vm1115, %v1114, %v1108
    %1122 = vrot.lane.b32.xlu0 %v193, 32
    %v1123 = vpop.permute.xlu0 %1122
    %1124 = vrot.lane.b32.xlu0 %v194, 32
    %v1125 = vpop.permute.xlu0 %1124
    %1126 = vrot.lane.b32.xlu0 %v195, 32
    %v1127 = vpop.permute.xlu0 %1126
    %1128 = vrot.lane.b32.xlu0 %v196, 32
    %v1129 = vpop.permute.xlu0 %1128
    %1135 = vrot.lane.b32.xlu0 %v201, 32
    %v1136 = vpop.permute.xlu0 %1135
    %v1139 = vsel %vm55, %v1116, 0
    %v1142 = vsel %vm55, %v1117, 0
    %1144 = vmatprep.subr.mxu0 0.0
    %1145 = vmatpush1.msra.mxu0 %v1123
    %1146 = vmatprep.subr.mxu0 0.0
    %1147 = vmatpush1.msra.mxu0 %v1125
    %1148 = vmatprep.subr.mxu0 0.0
    %1149 = vmatpush1.msra.mxu0 %v1127
    %1150 = vmatprep.subr.mxu0 0.0
    %1151 = vmatpush1.msra.mxu0 %v1129
    %1152 = vmatprep.subr.mxu0 0.0
    %1153 = vmatpush1.msra.mxu0 0.0
    %1154 = vmatprep.subr.mxu0 0.0
    %1155 = vmatpush1.msra.mxu0 0.0
    %1156 = vmatprep.subr.mxu0 0.0
    %1157 = vmatpush1.msra.mxu0 0.0
    %1158 = vmatprep.subr.mxu0 0.0
    %1159 = vmatpush1.msra.mxu0 0.0
    %1160 = vmatprep.subr.mxu0 0.0
    %1161 = vmatpush1.msra.mxu0 0.0
    %1162 = vmatprep.subr.mxu0 0.0
    %1163 = vmatpush1.msra.mxu0 0.0
    %1164 = vmatprep.subr.mxu0 0.0
    %1165 = vmatpush1.msra.mxu0 0.0
    %1166 = vmatprep.subr.mxu0 0.0
    %1167 = vmatpush1.msra.mxu0 0.0
    %1168 = vmatprep.subr.mxu0 0.0
    %1169 = vmatpush1.msra.mxu0 0.0
    %1170 = vmatprep.subr.mxu0 0.0
    %1171 = vmatpush1.msra.mxu0 0.0
    %1172 = vmatprep.subr.mxu0 0.0
    %1173 = vmatpush1.msra.mxu0 0.0
    %1174 = vmatprep.subr.mxu0 0.0
    %1175 = vmatpush1.msra.mxu0 0.0
    %1176 = vmatprep.subr.mxu0 0.0
    %1177 = vmatpush1.msra.mxu0 0.0
    %1178 = vmatprep.subr.mxu0 0.0
    %1179 = vmatpush1.msra.mxu0 0.0
    %1180 = vmatprep.subr.mxu0 0.0
    %1181 = vmatpush1.msra.mxu0 0.0
    %1182 = vmatprep.subr.mxu0 0.0
    %1183 = vmatpush1.msra.mxu0 0.0
    %1184 = vmatprep.subr.mxu0 0.0
    %1185 = vmatpush1.msra.mxu0 0.0
    %1186 = vmatprep.subr.mxu0 0.0
    %1187 = vmatpush1.msra.mxu0 0.0
    %1188 = vmatprep.subr.mxu0 0.0
    %1189 = vmatpush1.msra.mxu0 0.0
    %1190 = vmatprep.subr.mxu0 0.0
    %1191 = vmatpush1.msra.mxu0 0.0
    %1192 = vmatprep.subr.mxu0 0.0
    %1193 = vmatpush1.msra.mxu0 0.0
    %1194 = vmatprep.subr.mxu0 0.0
    %1195 = vmatpush1.msra.mxu0 0.0
    %1196 = vmatprep.subr.mxu0 0.0
    %1197 = vmatpush1.msra.mxu0 0.0
    %1198 = vmatprep.subr.mxu0 0.0
    %1199 = vmatpush1.msra.mxu0 0.0
    %1200 = vmatprep.subr.mxu0 0.0
    %1201 = vmatpush1.msra.mxu0 0.0
    %1202 = vmatprep.subr.mxu0 0.0
    %1203 = vmatpush1.msra.mxu0 0.0
    %1204 = vmatprep.subr.mxu0 0.0
    %1205 = vmatpush1.msra.mxu0 0.0
    %1206 = vmatprep.subr.mxu0 0.0
    %1207 = vmatpush1.msra.mxu0 0.0
    %1208 = vmatprep.mubr.f32.mxu0 0.0
    %1209 = vmatmul.mubr.f32.gmra.mrb[0].mxu0 %v1139
    %v1210 = vpop.f32.mrb[0].mxu0
    %v1211 = vadd.f32 %v1136, %v1210
    %v1212 = vpop.f32.mrb[0].mxu0
    %1213 = vmatprep.mubr.f32.mxu0 0.0
    %1214 = vmatmul.mubr.f32.gmra.mrb[0].mxu0 %v1142
    %v1215 = vpop.f32.mrb[0].mxu0
    %v1216 = vadd.f32 %v1136, %v1215
    %v1217 = vpop.f32.mrb[0].mxu0
    %1218 = vdwg.mxu0
    %v1219 = vadd.f32 %v36, %v1211
    %v1220 = vadd.f32 %v37, %v1216
    %v1221 = vld [vmem:[%s9 + $0x2] sm:$0x1]
    %v1222 = vld [vmem:[%s9 + $0x3] sm:$0x1]
    %v1223 = vsel %vm55, %v1219, 0.0
    %1224 = vadd.xlane.f32.xlu0 %v1223
    %v1225 = vpop.xlane.xlu0 %1224
    %v1226 = vsel %vm55, %v1220, 0.0
    %1227 = vadd.xlane.f32.xlu0 %v1226
    %v1228 = vpop.xlane.xlu0 %1227
    %v1229 = vmul.f32 %v1225, %v145
    %v1230 = vmul.f32 %v1228, %v145
    %v1231 = vsub.f32 %v1219, %v1229
    %v1232 = vsub.f32 %v1220, %v1230
    %v1233 = vmul.f32 %v1231, %v1231
    %v1234 = vmul.f32 %v1232, %v1232
    %v1235 = vsel %vm55, %v1233, 0.0
    %1236 = vadd.xlane.f32.xlu0 %v1235
    %v1237 = vpop.xlane.xlu0 %1236
    %v1238 = vsel %vm55, %v1234, 0.0
    %1239 = vadd.xlane.f32.xlu0 %v1238
    %v1240 = vpop.xlane.xlu0 %1239
    %v1241 = vmul.f32 %v1237, %v158
    %v1242 = vmul.f32 %v1240, %v158
    %v1243 = vlaneseq
    %v1244 = vshrl.u32 %v1243, 7
    %v1245 = vsub.s32 0, %v1244
    %v1246 = vrot.slane %v1221, %v1245
    %v1247 = vmul.f32 %v1246, %v1231
    %v1248 = vmul.f32 %v1246, %v1232
    %v1249 = vrsqrt.pop %v1241
    %v1250 = vmul.f32 %v1241, %v1249
    %vm1251 = vcmp.eq.f32.partialorder %v1241, inf
    %v1252 = vsel %vm1251, %v1241, %v1250
    %vm1253 = vcmp.eq.f32.partialorder %v1241, 0.0
    %v1254 = vand.u32 %v1241, 2147483648
    %v1255 = vsel %vm1253, %v1254, %v1252
    %v1256 = vrsqrt.pop %v1242
    %v1257 = vmul.f32 %v1242, %v1256
    %vm1258 = vcmp.eq.f32.partialorder %v1242, inf
    %v1259 = vsel %vm1258, %v1242, %v1257
    %vm1260 = vcmp.eq.f32.partialorder %v1242, 0.0
    %v1261 = vand.u32 %v1242, 2147483648
    %v1262 = vsel %vm1260, %v1261, %v1259
    %v1263 = vadd.f32 %v1255, 1e-06
    %v1264 = vadd.f32 %v1262, 1e-06
    %v1265 = vrcp.pop %v1263
    %v1266 = vmul.f32 %v1247, %v1265
    %v1267 = vrcp.pop %v1264
    %v1268 = vmul.f32 %v1248, %v1267
    %v1269 = vlaneseq
    %v1270 = vshrl.u32 %v1269, 7
    %v1271 = vsub.s32 0, %v1270
    %v1272 = vrot.slane %v1222, %v1271
    %v1273 = vadd.f32 %v1266, %v1272
    %v1274 = vadd.f32 %v1268, %v1272
    %v1275 = vld [vmem:[%s4 + $0x8] sm:$0xff]
    %v1276 = vld [vmem:[%s4 + $0x18] sm:$0xff]
    %v1277 = vld [vmem:[%s4 + $0x28] sm:$0xff]
    %v1278 = vld [vmem:[%s4 + $0x38] sm:$0xff]
    %v1279 = vld [vmem:[%s8 + $0x2] sm:$0x1]
    %v1280 = vlaneseq
    %v1281 = vshrl.u32 %v1280, 7
    %v1282 = vsub.s32 0, %v1281
    %v1283 = vrot.slane %v1279, %v1282
    %v1285 = vsel %vm55, %v1273, 0
    %v1288 = vsel %vm55, %v1274, 0
    %1290 = vmatprep.subr.mxu0 0.0
    %1291 = vmatpush1.msra.mxu0 %v1275
    %1292 = vmatprep.subr.mxu0 0.0
    %1293 = vmatpush1.msra.mxu0 %v1276
    %1294 = vmatprep.subr.mxu0 0.0
    %1295 = vmatpush1.msra.mxu0 %v1277
    %1296 = vmatprep.subr.mxu0 0.0
    %1297 = vmatpush1.msra.mxu0 %v1278
    %1298 = vmatprep.subr.mxu0 0.0
    %1299 = vmatpush1.msra.mxu0 0.0
    %1300 = vmatprep.subr.mxu0 0.0
    %1301 = vmatpush1.msra.mxu0 0.0
    %1302 = vmatprep.subr.mxu0 0.0
    %1303 = vmatpush1.msra.mxu0 0.0
    %1304 = vmatprep.subr.mxu0 0.0
    %1305 = vmatpush1.msra.mxu0 0.0
    %1306 = vmatprep.subr.mxu0 0.0
    %1307 = vmatpush1.msra.mxu0 0.0
    %1308 = vmatprep.subr.mxu0 0.0
    %1309 = vmatpush1.msra.mxu0 0.0
    %1310 = vmatprep.subr.mxu0 0.0
    %1311 = vmatpush1.msra.mxu0 0.0
    %1312 = vmatprep.subr.mxu0 0.0
    %1313 = vmatpush1.msra.mxu0 0.0
    %1314 = vmatprep.subr.mxu0 0.0
    %1315 = vmatpush1.msra.mxu0 0.0
    %1316 = vmatprep.subr.mxu0 0.0
    %1317 = vmatpush1.msra.mxu0 0.0
    %1318 = vmatprep.subr.mxu0 0.0
    %1319 = vmatpush1.msra.mxu0 0.0
    %1320 = vmatprep.subr.mxu0 0.0
    %1321 = vmatpush1.msra.mxu0 0.0
    %1322 = vmatprep.subr.mxu0 0.0
    %1323 = vmatpush1.msra.mxu0 0.0
    %1324 = vmatprep.subr.mxu0 0.0
    %1325 = vmatpush1.msra.mxu0 0.0
    %1326 = vmatprep.subr.mxu0 0.0
    %1327 = vmatpush1.msra.mxu0 0.0
    %1328 = vmatprep.subr.mxu0 0.0
    %1329 = vmatpush1.msra.mxu0 0.0
    %1330 = vmatprep.subr.mxu0 0.0
    %1331 = vmatpush1.msra.mxu0 0.0
    %1332 = vmatprep.subr.mxu0 0.0
    %1333 = vmatpush1.msra.mxu0 0.0
    %1334 = vmatprep.subr.mxu0 0.0
    %1335 = vmatpush1.msra.mxu0 0.0
    %1336 = vmatprep.subr.mxu0 0.0
    %1337 = vmatpush1.msra.mxu0 0.0
    %1338 = vmatprep.subr.mxu0 0.0
    %1339 = vmatpush1.msra.mxu0 0.0
    %1340 = vmatprep.subr.mxu0 0.0
    %1341 = vmatpush1.msra.mxu0 0.0
    %1342 = vmatprep.subr.mxu0 0.0
    %1343 = vmatpush1.msra.mxu0 0.0
    %1344 = vmatprep.subr.mxu0 0.0
    %1345 = vmatpush1.msra.mxu0 0.0
    %1346 = vmatprep.subr.mxu0 0.0
    %1347 = vmatpush1.msra.mxu0 0.0
    %1348 = vmatprep.subr.mxu0 0.0
    %1349 = vmatpush1.msra.mxu0 0.0
    %1350 = vmatprep.subr.mxu0 0.0
    %1351 = vmatpush1.msra.mxu0 0.0
    %1352 = vmatprep.subr.mxu0 0.0
    %1353 = vmatpush1.msra.mxu0 0.0
    %1354 = vmatprep.mubr.f32.mxu0 0.0
    %1355 = vmatmul.mubr.f32.gmra.mrb[0].mxu0 %v1285
    %v1356 = vpop.f32.mrb[0].mxu0
    %v1357 = vadd.f32 %v1283, %v1356
    %v1358 = vpop.f32.mrb[0].mxu0
    %1359 = vmatprep.mubr.f32.mxu0 0.0
    %1360 = vmatmul.mubr.f32.gmra.mrb[0].mxu0 %v1288
    %v1361 = vpop.f32.mrb[0].mxu0
    %v1362 = vadd.f32 %v1283, %v1361
    %v1363 = vpop.f32.mrb[0].mxu0
    %1364 = vdwg.mxu0
    %v1365 = vmul.f32 %v1357, 0.35355338
    %v1366 = vmul.f32 %v1362, 0.35355338
    %v1368 = vsel %vm291, %v1365, 0
    %v1371 = vsel %vm291, %v1366, 0
    %v1374 = vsel %vm291, %v129, 0
    %v1377 = vsel %vm291, %v134, 0
    %1379 = vmatprep.subr.mxu0 0.0
    %1380 = vmatpush1.xpose.msra.mxu0 %v1374
    %1381 = vmatprep.subr.mxu0 0.0
    %1382 = vmatpush1.xpose.msra.mxu0 %v1377
    %1383 = vmatprep.subr.mxu0 0.0
    %1384 = vmatpush1.xpose.msra.mxu0 0.0
    %1385 = vmatprep.subr.mxu0 0.0
    %1386 = vmatpush1.xpose.msra.mxu0 0.0
    %1387 = vmatprep.subr.mxu0 0.0
    %1388 = vmatpush1.xpose.msra.mxu0 0.0
    %1389 = vmatprep.subr.mxu0 0.0
    %1390 = vmatpush1.xpose.msra.mxu0 0.0
    %1391 = vmatprep.subr.mxu0 0.0
    %1392 = vmatpush1.xpose.msra.mxu0 0.0
    %1393 = vmatprep.subr.mxu0 0.0
    %1394 = vmatpush1.xpose.msra.mxu0 0.0
    %1395 = vmatprep.subr.mxu0 0.0
    %1396 = vmatpush1.xpose.msra.mxu0 0.0
    %1397 = vmatprep.subr.mxu0 0.0
    %1398 = vmatpush1.xpose.msra.mxu0 0.0
    %1399 = vmatprep.subr.mxu0 0.0
    %1400 = vmatpush1.xpose.msra.mxu0 0.0
    %1401 = vmatprep.subr.mxu0 0.0
    %1402 = vmatpush1.xpose.msra.mxu0 0.0
    %1403 = vmatprep.subr.mxu0 0.0
    %1404 = vmatpush1.xpose.msra.mxu0 0.0
    %1405 = vmatprep.subr.mxu0 0.0
    %1406 = vmatpush1.xpose.msra.mxu0 0.0
    %1407 = vmatprep.subr.mxu0 0.0
    %1408 = vmatpush1.xpose.msra.mxu0 0.0
    %1409 = vmatprep.subr.mxu0 0.0
    %1410 = vmatpush1.xpose.msra.mxu0 0.0
    %1411 = vmatprep.subr.mxu0 0.0
    %1412 = vmatpush1.xpose.msra.mxu0 0.0
    %1413 = vmatprep.subr.mxu0 0.0
    %1414 = vmatpush1.xpose.msra.mxu0 0.0
    %1415 = vmatprep.subr.mxu0 0.0
    %1416 = vmatpush1.xpose.msra.mxu0 0.0
    %1417 = vmatprep.subr.mxu0 0.0
    %1418 = vmatpush1.xpose.msra.mxu0 0.0
    %1419 = vmatprep.subr.mxu0 0.0
    %1420 = vmatpush1.xpose.msra.mxu0 0.0
    %1421 = vmatprep.subr.mxu0 0.0
    %1422 = vmatpush1.xpose.msra.mxu0 0.0
    %1423 = vmatprep.subr.mxu0 0.0
    %1424 = vmatpush1.xpose.msra.mxu0 0.0
    %1425 = vmatprep.subr.mxu0 0.0
    %1426 = vmatpush1.xpose.msra.mxu0 0.0
    %1427 = vmatprep.subr.mxu0 0.0
    %1428 = vmatpush1.xpose.msra.mxu0 0.0
    %1429 = vmatprep.subr.mxu0 0.0
    %1430 = vmatpush1.xpose.msra.mxu0 0.0
    %1431 = vmatprep.subr.mxu0 0.0
    %1432 = vmatpush1.xpose.msra.mxu0 0.0
    %1433 = vmatprep.subr.mxu0 0.0
    %1434 = vmatpush1.xpose.msra.mxu0 0.0
    %1435 = vmatprep.subr.mxu0 0.0
    %1436 = vmatpush1.xpose.msra.mxu0 0.0
    %1437 = vmatprep.subr.mxu0 0.0
    %1438 = vmatpush1.xpose.msra.mxu0 0.0
    %1439 = vmatprep.subr.mxu0 0.0
    %1440 = vmatpush1.xpose.msra.mxu0 0.0
    %1441 = vmatprep.subr.mxu0 0.0
    %1442 = vmatpush1.xpose.msra.mxu0 0.0
    %1443 = vmatprep.mubr.f32.mxu0 0.0
    %1444 = vmatmul.mubr.f32.gmra.mrb[0].mxu0 %v1368
    %v1445 = vpop.f32.mrb[0].mxu0
    %v1446 = vadd.f32 %v40, %v1445
    %v1447 = vpop.f32.mrb[0].mxu0
    %1448 = vmatprep.mubr.f32.mxu0 0.0
    %1449 = vmatmul.mubr.f32.gmra.mrb[0].mxu0 %v1371
    %v1450 = vpop.f32.mrb[0].mxu0
    %v1451 = vadd.f32 %v41, %v1450
    %v1452 = vpop.f32.mrb[0].mxu0
    %1453 = vdwg.mxu0
    %v1454 = vsel %vm377, %v1446, -inf
    %1455 = vmax.xlane.f32.xlu0 %v1454
    %v1456 = vpop.xlane.xlu0 %1455
    %v1457 = vsel %vm377, %v1451, -inf
    %1458 = vmax.xlane.f32.xlu0 %v1457
    %v1459 = vpop.xlane.xlu0 %1458
    %v1460 = vsub.f32 %v1446, %v1456
    %v1461 = vsub.f32 %v1451, %v1459
    %v1462 = vmul.f32 %v1460, 1.442695
    %v1463 = vpow.pop %v1462
    %v1464 = vmul.f32 %v1461, 1.442695
    %v1465 = vpow.pop %v1464
    %v1466 = vsel %vm377, %v1463, 0.0
    %1467 = vadd.xlane.f32.xlu0 %v1466
    %v1468 = vpop.xlane.xlu0 %1467
    %v1469 = vsel %vm377, %v1465, 0.0
    %1470 = vadd.xlane.f32.xlu0 %v1469
    %v1471 = vpop.xlane.xlu0 %1470
    %v1472 = vrcp.pop %v1468
    %v1473 = vrcp.pop %v1471
    %v1474 = vmul.f32 %v1463, %v1472
    %v1475 = vmul.f32 %v1465, %v1473
    %1476 = vrot.lane.b32.xlu0 %v129, 96
    %v1477 = vpop.permute.xlu0 %1476
    %1478 = vrot.lane.b32.xlu0 %v134, 96
    %v1479 = vpop.permute.xlu0 %1478
    %v1483 = vsel %vm377, %v1474, 0
    %v1486 = vsel %vm377, %v1475, 0
    %1488 = vmatprep.subr.mxu0 0.0
    %1489 = vmatpush1.msra.mxu0 %v1477
    %1490 = vmatprep.subr.mxu0 0.0
    %1491 = vmatpush1.msra.mxu0 %v1479
    %1492 = vmatprep.subr.mxu0 0.0
    %1493 = vmatpush1.msra.mxu0 0.0
    %1494 = vmatprep.subr.mxu0 0.0
    %1495 = vmatpush1.msra.mxu0 0.0
    %1496 = vmatprep.subr.mxu0 0.0
    %1497 = vmatpush1.msra.mxu0 0.0
    %1498 = vmatprep.subr.mxu0 0.0
    %1499 = vmatpush1.msra.mxu0 0.0
    %1500 = vmatprep.subr.mxu0 0.0
    %1501 = vmatpush1.msra.mxu0 0.0
    %1502 = vmatprep.subr.mxu0 0.0
    %1503 = vmatpush1.msra.mxu0 0.0
    %1504 = vmatprep.subr.mxu0 0.0
    %1505 = vmatpush1.msra.mxu0 0.0
    %1506 = vmatprep.subr.mxu0 0.0
    %1507 = vmatpush1.msra.mxu0 0.0
    %1508 = vmatprep.subr.mxu0 0.0
    %1509 = vmatpush1.msra.mxu0 0.0
    %1510 = vmatprep.subr.mxu0 0.0
    %1511 = vmatpush1.msra.mxu0 0.0
    %1512 = vmatprep.subr.mxu0 0.0
    %1513 = vmatpush1.msra.mxu0 0.0
    %1514 = vmatprep.subr.mxu0 0.0
    %1515 = vmatpush1.msra.mxu0 0.0
    %1516 = vmatprep.subr.mxu0 0.0
    %1517 = vmatpush1.msra.mxu0 0.0
    %1518 = vmatprep.subr.mxu0 0.0
    %1519 = vmatpush1.msra.mxu0 0.0
    %1520 = vmatprep.subr.mxu0 0.0
    %1521 = vmatpush1.msra.mxu0 0.0
    %1522 = vmatprep.subr.mxu0 0.0
    %1523 = vmatpush1.msra.mxu0 0.0
    %1524 = vmatprep.subr.mxu0 0.0
    %1525 = vmatpush1.msra.mxu0 0.0
    %1526 = vmatprep.subr.mxu0 0.0
    %1527 = vmatpush1.msra.mxu0 0.0
    %1528 = vmatprep.subr.mxu0 0.0
    %1529 = vmatpush1.msra.mxu0 0.0
    %1530 = vmatprep.subr.mxu0 0.0
    %1531 = vmatpush1.msra.mxu0 0.0
    %1532 = vmatprep.subr.mxu0 0.0
    %1533 = vmatpush1.msra.mxu0 0.0
    %1534 = vmatprep.subr.mxu0 0.0
    %1535 = vmatpush1.msra.mxu0 0.0
    %1536 = vmatprep.subr.mxu0 0.0
    %1537 = vmatpush1.msra.mxu0 0.0
    %1538 = vmatprep.subr.mxu0 0.0
    %1539 = vmatpush1.msra.mxu0 0.0
    %1540 = vmatprep.subr.mxu0 0.0
    %1541 = vmatpush1.msra.mxu0 0.0
    %1542 = vmatprep.subr.mxu0 0.0
    %1543 = vmatpush1.msra.mxu0 0.0
    %1544 = vmatprep.subr.mxu0 0.0
    %1545 = vmatpush1.msra.mxu0 0.0
    %1546 = vmatprep.subr.mxu0 0.0
    %1547 = vmatpush1.msra.mxu0 0.0
    %1548 = vmatprep.subr.mxu0 0.0
    %1549 = vmatpush1.msra.mxu0 0.0
    %1550 = vmatprep.subr.mxu0 0.0
    %1551 = vmatpush1.msra.mxu0 0.0
    %1552 = vmatprep.mubr.f32.mxu0 0.0
    %1553 = vmatmul.mubr.f32.gmra.mrb[0].mxu0 %v1483
    %v1554 = vpop.f32.mrb[0].mxu0
    %v1555 = vadd.f32 0.0, %v1554
    %v1556 = vpop.f32.mrb[0].mxu0
    %1557 = vmatprep.mubr.f32.mxu0 0.0
    %1558 = vmatmul.mubr.f32.gmra.mrb[0].mxu0 %v1486
    %v1559 = vpop.f32.mrb[0].mxu0
    %v1560 = vadd.f32 0.0, %v1559
    %v1561 = vpop.f32.mrb[0].mxu0
    %1562 = vdwg.mxu0
    %1563 = vrot.lane.b32.xlu0 %v1365, 120
    %v1564 = vpop.permute.xlu0 %1563
    %1565 = vrot.lane.b32.xlu0 %v1366, 120
    %v1566 = vpop.permute.xlu0 %1565
    %1567 = vrot.lane.b32.xlu0 %v129, 120
    %v1568 = vpop.permute.xlu0 %1567
    %1569 = vrot.lane.b32.xlu0 %v134, 120
    %v1570 = vpop.permute.xlu0 %1569
    %v1571 = vsel %vm291, %v1564, 0
    %v1573 = vsel %vm291, %v1566, 0
    %v1575 = vsel %vm291, %v1568, 0
    %v1577 = vsel %vm291, %v1570, 0
    %1579 = vmatprep.subr.mxu0 0.0
    %1580 = vmatpush1.xpose.msra.mxu0 %v1575
    %1581 = vmatprep.subr.mxu0 0.0
    %1582 = vmatpush1.xpose.msra.mxu0 %v1577
    %1583 = vmatprep.subr.mxu0 0.0
    %1584 = vmatpush1.xpose.msra.mxu0 0.0
    %1585 = vmatprep.subr.mxu0 0.0
    %1586 = vmatpush1.xpose.msra.mxu0 0.0
    %1587 = vmatprep.subr.mxu0 0.0
    %1588 = vmatpush1.xpose.msra.mxu0 0.0
    %1589 = vmatprep.subr.mxu0 0.0
    %1590 = vmatpush1.xpose.msra.mxu0 0.0
    %1591 = vmatprep.subr.mxu0 0.0
    %1592 = vmatpush1.xpose.msra.mxu0 0.0
    %1593 = vmatprep.subr.mxu0 0.0
    %1594 = vmatpush1.xpose.msra.mxu0 0.0
    %1595 = vmatprep.subr.mxu0 0.0
    %1596 = vmatpush1.xpose.msra.mxu0 0.0
    %1597 = vmatprep.subr.mxu0 0.0
    %1598 = vmatpush1.xpose.msra.mxu0 0.0
    %1599 = vmatprep.subr.mxu0 0.0
    %1600 = vmatpush1.xpose.msra.mxu0 0.0
    %1601 = vmatprep.subr.mxu0 0.0
    %1602 = vmatpush1.xpose.msra.mxu0 0.0
    %1603 = vmatprep.subr.mxu0 0.0
    %1604 = vmatpush1.xpose.msra.mxu0 0.0
    %1605 = vmatprep.subr.mxu0 0.0
    %1606 = vmatpush1.xpose.msra.mxu0 0.0
    %1607 = vmatprep.subr.mxu0 0.0
    %1608 = vmatpush1.xpose.msra.mxu0 0.0
    %1609 = vmatprep.subr.mxu0 0.0
    %1610 = vmatpush1.xpose.msra.mxu0 0.0
    %1611 = vmatprep.subr.mxu0 0.0
    %1612 = vmatpush1.xpose.msra.mxu0 0.0
    %1613 = vmatprep.subr.mxu0 0.0
    %1614 = vmatpush1.xpose.msra.mxu0 0.0
    %1615 = vmatprep.subr.mxu0 0.0
    %1616 = vmatpush1.xpose.msra.mxu0 0.0
    %1617 = vmatprep.subr.mxu0 0.0
    %1618 = vmatpush1.xpose.msra.mxu0 0.0
    %1619 = vmatprep.subr.mxu0 0.0
    %1620 = vmatpush1.xpose.msra.mxu0 0.0
    %1621 = vmatprep.subr.mxu0 0.0
    %1622 = vmatpush1.xpose.msra.mxu0 0.0
    %1623 = vmatprep.subr.mxu0 0.0
    %1624 = vmatpush1.xpose.msra.mxu0 0.0
    %1625 = vmatprep.subr.mxu0 0.0
    %1626 = vmatpush1.xpose.msra.mxu0 0.0
    %1627 = vmatprep.subr.mxu0 0.0
    %1628 = vmatpush1.xpose.msra.mxu0 0.0
    %1629 = vmatprep.subr.mxu0 0.0
    %1630 = vmatpush1.xpose.msra.mxu0 0.0
    %1631 = vmatprep.subr.mxu0 0.0
    %1632 = vmatpush1.xpose.msra.mxu0 0.0
    %1633 = vmatprep.subr.mxu0 0.0
    %1634 = vmatpush1.xpose.msra.mxu0 0.0
    %1635 = vmatprep.subr.mxu0 0.0
    %1636 = vmatpush1.xpose.msra.mxu0 0.0
    %1637 = vmatprep.subr.mxu0 0.0
    %1638 = vmatpush1.xpose.msra.mxu0 0.0
    %1639 = vmatprep.subr.mxu0 0.0
    %1640 = vmatpush1.xpose.msra.mxu0 0.0
    %1641 = vmatprep.subr.mxu0 0.0
    %1642 = vmatpush1.xpose.msra.mxu0 0.0
    %1643 = vmatprep.mubr.f32.mxu0 0.0
    %1644 = vmatmul.mubr.f32.gmra.mrb[0].mxu0 %v1571
    %v1645 = vpop.f32.mrb[0].mxu0
    %v1646 = vadd.f32 %v40, %v1645
    %v1647 = vpop.f32.mrb[0].mxu0
    %1648 = vmatprep.mubr.f32.mxu0 0.0
    %1649 = vmatmul.mubr.f32.gmra.mrb[0].mxu0 %v1573
    %v1650 = vpop.f32.mrb[0].mxu0
    %v1651 = vadd.f32 %v41, %v1650
    %v1652 = vpop.f32.mrb[0].mxu0
    %1653 = vdwg.mxu0
    %v1654 = vsel %vm377, %v1646, -inf
    %1655 = vmax.xlane.f32.xlu0 %v1654
    %v1656 = vpop.xlane.xlu0 %1655
    %v1657 = vsel %vm377, %v1651, -inf
    %1658 = vmax.xlane.f32.xlu0 %v1657
    %v1659 = vpop.xlane.xlu0 %1658
    %v1660 = vsub.f32 %v1646, %v1656
    %v1661 = vsub.f32 %v1651, %v1659
    %v1662 = vmul.f32 %v1660, 1.442695
    %v1663 = vpow.pop %v1662
    %v1664 = vmul.f32 %v1661, 1.442695
    %v1665 = vpow.pop %v1664
    %v1666 = vsel %vm377, %v1663, 0.0
    %1667 = vadd.xlane.f32.xlu0 %v1666
    %v1668 = vpop.xlane.xlu0 %1667
    %v1669 = vsel %vm377, %v1665, 0.0
    %1670 = vadd.xlane.f32.xlu0 %v1669
    %v1671 = vpop.xlane.xlu0 %1670
    %v1672 = vrcp.pop %v1668
    %v1673 = vrcp.pop %v1671
    %v1674 = vmul.f32 %v1663, %v1672
    %v1675 = vmul.f32 %v1665, %v1673
    %1676 = vrot.lane.b32.xlu0 %v129, 88
    %v1677 = vpop.permute.xlu0 %1676
    %1678 = vrot.lane.b32.xlu0 %v134, 88
    %v1679 = vpop.permute.xlu0 %1678
    %v1683 = vsel %vm377, %v1674, 0
    %v1686 = vsel %vm377, %v1675, 0
    %1688 = vmatprep.subr.mxu0 0.0
    %1689 = vmatpush1.msra.mxu0 %v1677
    %1690 = vmatprep.subr.mxu0 0.0
    %1691 = vmatpush1.msra.mxu0 %v1679
    %1692 = vmatprep.subr.mxu0 0.0
    %1693 = vmatpush1.msra.mxu0 0.0
    %1694 = vmatprep.subr.mxu0 0.0
    %1695 = vmatpush1.msra.mxu0 0.0
    %1696 = vmatprep.subr.mxu0 0.0
    %1697 = vmatpush1.msra.mxu0 0.0
    %1698 = vmatprep.subr.mxu0 0.0
    %1699 = vmatpush1.msra.mxu0 0.0
    %1700 = vmatprep.subr.mxu0 0.0
    %1701 = vmatpush1.msra.mxu0 0.0
    %1702 = vmatprep.subr.mxu0 0.0
    %1703 = vmatpush1.msra.mxu0 0.0
    %1704 = vmatprep.subr.mxu0 0.0
    %1705 = vmatpush1.msra.mxu0 0.0
    %1706 = vmatprep.subr.mxu0 0.0
    %1707 = vmatpush1.msra.mxu0 0.0
    %1708 = vmatprep.subr.mxu0 0.0
    %1709 = vmatpush1.msra.mxu0 0.0
    %1710 = vmatprep.subr.mxu0 0.0
    %1711 = vmatpush1.msra.mxu0 0.0
    %1712 = vmatprep.subr.mxu0 0.0
    %1713 = vmatpush1.msra.mxu0 0.0
    %1714 = vmatprep.subr.mxu0 0.0
    %1715 = vmatpush1.msra.mxu0 0.0
    %1716 = vmatprep.subr.mxu0 0.0
    %1717 = vmatpush1.msra.mxu0 0.0
    %1718 = vmatprep.subr.mxu0 0.0
    %1719 = vmatpush1.msra.mxu0 0.0
    %1720 = vmatprep.subr.mxu0 0.0
    %1721 = vmatpush1.msra.mxu0 0.0
    %1722 = vmatprep.subr.mxu0 0.0
    %1723 = vmatpush1.msra.mxu0 0.0
    %1724 = vmatprep.subr.mxu0 0.0
    %1725 = vmatpush1.msra.mxu0 0.0
    %1726 = vmatprep.subr.mxu0 0.0
    %1727 = vmatpush1.msra.mxu0 0.0
    %1728 = vmatprep.subr.mxu0 0.0
    %1729 = vmatpush1.msra.mxu0 0.0
    %1730 = vmatprep.subr.mxu0 0.0
    %1731 = vmatpush1.msra.mxu0 0.0
    %1732 = vmatprep.subr.mxu0 0.0
    %1733 = vmatpush1.msra.mxu0 0.0
    %1734 = vmatprep.subr.mxu0 0.0
    %1735 = vmatpush1.msra.mxu0 0.0
    %1736 = vmatprep.subr.mxu0 0.0
    %1737 = vmatpush1.msra.mxu0 0.0
    %1738 = vmatprep.subr.mxu0 0.0
    %1739 = vmatpush1.msra.mxu0 0.0
    %1740 = vmatprep.subr.mxu0 0.0
    %1741 = vmatpush1.msra.mxu0 0.0
    %1742 = vmatprep.subr.mxu0 0.0
    %1743 = vmatpush1.msra.mxu0 0.0
    %1744 = vmatprep.subr.mxu0 0.0
    %1745 = vmatpush1.msra.mxu0 0.0
    %1746 = vmatprep.subr.mxu0 0.0
    %1747 = vmatpush1.msra.mxu0 0.0
    %1748 = vmatprep.subr.mxu0 0.0
    %1749 = vmatpush1.msra.mxu0 0.0
    %1750 = vmatprep.subr.mxu0 0.0
    %1751 = vmatpush1.msra.mxu0 0.0
    %1752 = vmatprep.mubr.f32.mxu0 0.0
    %1753 = vmatmul.mubr.f32.gmra.mrb[0].mxu0 %v1683
    %v1754 = vpop.f32.mrb[0].mxu0
    %v1755 = vadd.f32 0.0, %v1754
    %v1756 = vpop.f32.mrb[0].mxu0
    %1757 = vmatprep.mubr.f32.mxu0 0.0
    %1758 = vmatmul.mubr.f32.gmra.mrb[0].mxu0 %v1686
    %v1759 = vpop.f32.mrb[0].mxu0
    %v1760 = vadd.f32 0.0, %v1759
    %v1761 = vpop.f32.mrb[0].mxu0
    %1762 = vdwg.mxu0
    %1763 = vrot.lane.b32.xlu0 %v1365, 112
    %v1764 = vpop.permute.xlu0 %1763
    %1765 = vrot.lane.b32.xlu0 %v1366, 112
    %v1766 = vpop.permute.xlu0 %1765
    %1767 = vrot.lane.b32.xlu0 %v129, 112
    %v1768 = vpop.permute.xlu0 %1767
    %1769 = vrot.lane.b32.xlu0 %v134, 112
    %v1770 = vpop.permute.xlu0 %1769
    %v1771 = vsel %vm291, %v1764, 0
    %v1773 = vsel %vm291, %v1766, 0
    %v1775 = vsel %vm291, %v1768, 0
    %v1777 = vsel %vm291, %v1770, 0
    %1779 = vmatprep.subr.mxu0 0.0
    %1780 = vmatpush1.xpose.msra.mxu0 %v1775
    %1781 = vmatprep.subr.mxu0 0.0
    %1782 = vmatpush1.xpose.msra.mxu0 %v1777
    %1783 = vmatprep.subr.mxu0 0.0
    %1784 = vmatpush1.xpose.msra.mxu0 0.0
    %1785 = vmatprep.subr.mxu0 0.0
    %1786 = vmatpush1.xpose.msra.mxu0 0.0
    %1787 = vmatprep.subr.mxu0 0.0
    %1788 = vmatpush1.xpose.msra.mxu0 0.0
    %1789 = vmatprep.subr.mxu0 0.0
    %1790 = vmatpush1.xpose.msra.mxu0 0.0
    %1791 = vmatprep.subr.mxu0 0.0
    %1792 = vmatpush1.xpose.msra.mxu0 0.0
    %1793 = vmatprep.subr.mxu0 0.0
    %1794 = vmatpush1.xpose.msra.mxu0 0.0
    %1795 = vmatprep.subr.mxu0 0.0
    %1796 = vmatpush1.xpose.msra.mxu0 0.0
    %1797 = vmatprep.subr.mxu0 0.0
    %1798 = vmatpush1.xpose.msra.mxu0 0.0
    %1799 = vmatprep.subr.mxu0 0.0
    %1800 = vmatpush1.xpose.msra.mxu0 0.0
    %1801 = vmatprep.subr.mxu0 0.0
    %1802 = vmatpush1.xpose.msra.mxu0 0.0
    %1803 = vmatprep.subr.mxu0 0.0
    %1804 = vmatpush1.xpose.msra.mxu0 0.0
    %1805 = vmatprep.subr.mxu0 0.0
    %1806 = vmatpush1.xpose.msra.mxu0 0.0
    %1807 = vmatprep.subr.mxu0 0.0
    %1808 = vmatpush1.xpose.msra.mxu0 0.0
    %1809 = vmatprep.subr.mxu0 0.0
    %1810 = vmatpush1.xpose.msra.mxu0 0.0
    %1811 = vmatprep.subr.mxu0 0.0
    %1812 = vmatpush1.xpose.msra.mxu0 0.0
    %1813 = vmatprep.subr.mxu0 0.0
    %1814 = vmatpush1.xpose.msra.mxu0 0.0
    %1815 = vmatprep.subr.mxu0 0.0
    %1816 = vmatpush1.xpose.msra.mxu0 0.0
    %1817 = vmatprep.subr.mxu0 0.0
    %1818 = vmatpush1.xpose.msra.mxu0 0.0
    %1819 = vmatprep.subr.mxu0 0.0
    %1820 = vmatpush1.xpose.msra.mxu0 0.0
    %1821 = vmatprep.subr.mxu0 0.0
    %1822 = vmatpush1.xpose.msra.mxu0 0.0
    %1823 = vmatprep.subr.mxu0 0.0
    %1824 = vmatpush1.xpose.msra.mxu0 0.0
    %1825 = vmatprep.subr.mxu0 0.0
    %1826 = vmatpush1.xpose.msra.mxu0 0.0
    %1827 = vmatprep.subr.mxu0 0.0
    %1828 = vmatpush1.xpose.msra.mxu0 0.0
    %1829 = vmatprep.subr.mxu0 0.0
    %1830 = vmatpush1.xpose.msra.mxu0 0.0
    %1831 = vmatprep.subr.mxu0 0.0
    %1832 = vmatpush1.xpose.msra.mxu0 0.0
    %1833 = vmatprep.subr.mxu0 0.0
    %1834 = vmatpush1.xpose.msra.mxu0 0.0
    %1835 = vmatprep.subr.mxu0 0.0
    %1836 = vmatpush1.xpose.msra.mxu0 0.0
    %1837 = vmatprep.subr.mxu0 0.0
    %1838 = vmatpush1.xpose.msra.mxu0 0.0
    %1839 = vmatprep.subr.mxu0 0.0
    %1840 = vmatpush1.xpose.msra.mxu0 0.0
    %1841 = vmatprep.subr.mxu0 0.0
    %1842 = vmatpush1.xpose.msra.mxu0 0.0
    %1843 = vmatprep.mubr.f32.mxu0 0.0
    %1844 = vmatmul.mubr.f32.gmra.mrb[0].mxu0 %v1771
    %v1845 = vpop.f32.mrb[0].mxu0
    %v1846 = vadd.f32 %v40, %v1845
    %v1847 = vpop.f32.mrb[0].mxu0
    %1848 = vmatprep.mubr.f32.mxu0 0.0
    %1849 = vmatmul.mubr.f32.gmra.mrb[0].mxu0 %v1773
    %v1850 = vpop.f32.mrb[0].mxu0
    %v1851 = vadd.f32 %v41, %v1850
    %v1852 = vpop.f32.mrb[0].mxu0
    %1853 = vdwg.mxu0
    %v1854 = vsel %vm377, %v1846, -inf
    %1855 = vmax.xlane.f32.xlu0 %v1854
    %v1856 = vpop.xlane.xlu0 %1855
    %v1857 = vsel %vm377, %v1851, -inf
    %1858 = vmax.xlane.f32.xlu0 %v1857
    %v1859 = vpop.xlane.xlu0 %1858
    %v1860 = vsub.f32 %v1846, %v1856
    %v1861 = vsub.f32 %v1851, %v1859
    %v1862 = vmul.f32 %v1860, 1.442695
    %v1863 = vpow.pop %v1862
    %v1864 = vmul.f32 %v1861, 1.442695
    %v1865 = vpow.pop %v1864
    %v1866 = vsel %vm377, %v1863, 0.0
    %1867 = vadd.xlane.f32.xlu0 %v1866
    %v1868 = vpop.xlane.xlu0 %1867
    %v1869 = vsel %vm377, %v1865, 0.0
    %1870 = vadd.xlane.f32.xlu0 %v1869
    %v1871 = vpop.xlane.xlu0 %1870
    %v1872 = vrcp.pop %v1868
    %v1873 = vrcp.pop %v1871
    %v1874 = vmul.f32 %v1863, %v1872
    %v1875 = vmul.f32 %v1865, %v1873
    %1876 = vrot.lane.b32.xlu0 %v129, 80
    %v1877 = vpop.permute.xlu0 %1876
    %1878 = vrot.lane.b32.xlu0 %v134, 80
    %v1879 = vpop.permute.xlu0 %1878
    %v1883 = vsel %vm377, %v1874, 0
    %v1886 = vsel %vm377, %v1875, 0
    %1888 = vmatprep.subr.mxu0 0.0
    %1889 = vmatpush1.msra.mxu0 %v1877
    %1890 = vmatprep.subr.mxu0 0.0
    %1891 = vmatpush1.msra.mxu0 %v1879
    %1892 = vmatprep.subr.mxu0 0.0
    %1893 = vmatpush1.msra.mxu0 0.0
    %1894 = vmatprep.subr.mxu0 0.0
    %1895 = vmatpush1.msra.mxu0 0.0
    %1896 = vmatprep.subr.mxu0 0.0
    %1897 = vmatpush1.msra.mxu0 0.0
    %1898 = vmatprep.subr.mxu0 0.0
    %1899 = vmatpush1.msra.mxu0 0.0
    %1900 = vmatprep.subr.mxu0 0.0
    %1901 = vmatpush1.msra.mxu0 0.0
    %1902 = vmatprep.subr.mxu0 0.0
    %1903 = vmatpush1.msra.mxu0 0.0
    %1904 = vmatprep.subr.mxu0 0.0
    %1905 = vmatpush1.msra.mxu0 0.0
    %1906 = vmatprep.subr.mxu0 0.0
    %1907 = vmatpush1.msra.mxu0 0.0
    %1908 = vmatprep.subr.mxu0 0.0
    %1909 = vmatpush1.msra.mxu0 0.0
    %1910 = vmatprep.subr.mxu0 0.0
    %1911 = vmatpush1.msra.mxu0 0.0
    %1912 = vmatprep.subr.mxu0 0.0
    %1913 = vmatpush1.msra.mxu0 0.0
    %1914 = vmatprep.subr.mxu0 0.0
    %1915 = vmatpush1.msra.mxu0 0.0
    %1916 = vmatprep.subr.mxu0 0.0
    %1917 = vmatpush1.msra.mxu0 0.0
    %1918 = vmatprep.subr.mxu0 0.0
    %1919 = vmatpush1.msra.mxu0 0.0
    %1920 = vmatprep.subr.mxu0 0.0
    %1921 = vmatpush1.msra.mxu0 0.0
    %1922 = vmatprep.subr.mxu0 0.0
    %1923 = vmatpush1.msra.mxu0 0.0
    %1924 = vmatprep.subr.mxu0 0.0
    %1925 = vmatpush1.msra.mxu0 0.0
    %1926 = vmatprep.subr.mxu0 0.0
    %1927 = vmatpush1.msra.mxu0 0.0
    %1928 = vmatprep.subr.mxu0 0.0
    %1929 = vmatpush1.msra.mxu0 0.0
    %1930 = vmatprep.subr.mxu0 0.0
    %1931 = vmatpush1.msra.mxu0 0.0
    %1932 = vmatprep.subr.mxu0 0.0
    %1933 = vmatpush1.msra.mxu0 0.0
    %1934 = vmatprep.subr.mxu0 0.0
    %1935 = vmatpush1.msra.mxu0 0.0
    %1936 = vmatprep.subr.mxu0 0.0
    %1937 = vmatpush1.msra.mxu0 0.0
    %1938 = vmatprep.subr.mxu0 0.0
    %1939 = vmatpush1.msra.mxu0 0.0
    %1940 = vmatprep.subr.mxu0 0.0
    %1941 = vmatpush1.msra.mxu0 0.0
    %1942 = vmatprep.subr.mxu0 0.0
    %1943 = vmatpush1.msra.mxu0 0.0
    %1944 = vmatprep.subr.mxu0 0.0
    %1945 = vmatpush1.msra.mxu0 0.0
    %1946 = vmatprep.subr.mxu0 0.0
    %1947 = vmatpush1.msra.mxu0 0.0
    %1948 = vmatprep.subr.mxu0 0.0
    %1949 = vmatpush1.msra.mxu0 0.0
    %1950 = vmatprep.subr.mxu0 0.0
    %1951 = vmatpush1.msra.mxu0 0.0
    %1952 = vmatprep.mubr.f32.mxu0 0.0
    %1953 = vmatmul.mubr.f32.gmra.mrb[0].mxu0 %v1883
    %v1954 = vpop.f32.mrb[0].mxu0
    %v1955 = vadd.f32 0.0, %v1954
    %v1956 = vpop.f32.mrb[0].mxu0
    %1957 = vmatprep.mubr.f32.mxu0 0.0
    %1958 = vmatmul.mubr.f32.gmra.mrb[0].mxu0 %v1886
    %v1959 = vpop.f32.mrb[0].mxu0
    %v1960 = vadd.f32 0.0, %v1959
    %v1961 = vpop.f32.mrb[0].mxu0
    %1962 = vdwg.mxu0
    %1963 = vrot.lane.b32.xlu0 %v1365, 104
    %v1964 = vpop.permute.xlu0 %1963
    %1965 = vrot.lane.b32.xlu0 %v1366, 104
    %v1966 = vpop.permute.xlu0 %1965
    %1967 = vrot.lane.b32.xlu0 %v129, 104
    %v1968 = vpop.permute.xlu0 %1967
    %1969 = vrot.lane.b32.xlu0 %v134, 104
    %v1970 = vpop.permute.xlu0 %1969
    %v1971 = vsel %vm291, %v1964, 0
    %v1973 = vsel %vm291, %v1966, 0
    %v1975 = vsel %vm291, %v1968, 0
    %v1977 = vsel %vm291, %v1970, 0
    %1979 = vmatprep.subr.mxu0 0.0
    %1980 = vmatpush1.xpose.msra.mxu0 %v1975
    %1981 = vmatprep.subr.mxu0 0.0
    %1982 = vmatpush1.xpose.msra.mxu0 %v1977
    %1983 = vmatprep.subr.mxu0 0.0
    %1984 = vmatpush1.xpose.msra.mxu0 0.0
    %1985 = vmatprep.subr.mxu0 0.0
    %1986 = vmatpush1.xpose.msra.mxu0 0.0
    %1987 = vmatprep.subr.mxu0 0.0
    %1988 = vmatpush1.xpose.msra.mxu0 0.0
    %1989 = vmatprep.subr.mxu0 0.0
    %1990 = vmatpush1.xpose.msra.mxu0 0.0
    %1991 = vmatprep.subr.mxu0 0.0
    %1992 = vmatpush1.xpose.msra.mxu0 0.0
    %1993 = vmatprep.subr.mxu0 0.0
    %1994 = vmatpush1.xpose.msra.mxu0 0.0
    %1995 = vmatprep.subr.mxu0 0.0
    %1996 = vmatpush1.xpose.msra.mxu0 0.0
    %1997 = vmatprep.subr.mxu0 0.0
    %1998 = vmatpush1.xpose.msra.mxu0 0.0
    %1999 = vmatprep.subr.mxu0 0.0
    %2000 = vmatpush1.xpose.msra.mxu0 0.0
    %2001 = vmatprep.subr.mxu0 0.0
    %2002 = vmatpush1.xpose.msra.mxu0 0.0
    %2003 = vmatprep.subr.mxu0 0.0
    %2004 = vmatpush1.xpose.msra.mxu0 0.0
    %2005 = vmatprep.subr.mxu0 0.0
    %2006 = vmatpush1.xpose.msra.mxu0 0.0
    %2007 = vmatprep.subr.mxu0 0.0
    %2008 = vmatpush1.xpose.msra.mxu0 0.0
    %2009 = vmatprep.subr.mxu0 0.0
    %2010 = vmatpush1.xpose.msra.mxu0 0.0
    %2011 = vmatprep.subr.mxu0 0.0
    %2012 = vmatpush1.xpose.msra.mxu0 0.0
    %2013 = vmatprep.subr.mxu0 0.0
    %2014 = vmatpush1.xpose.msra.mxu0 0.0
    %2015 = vmatprep.subr.mxu0 0.0
    %2016 = vmatpush1.xpose.msra.mxu0 0.0
    %2017 = vmatprep.subr.mxu0 0.0
    %2018 = vmatpush1.xpose.msra.mxu0 0.0
    %2019 = vmatprep.subr.mxu0 0.0
    %2020 = vmatpush1.xpose.msra.mxu0 0.0
    %2021 = vmatprep.subr.mxu0 0.0
    %2022 = vmatpush1.xpose.msra.mxu0 0.0
    %2023 = vmatprep.subr.mxu0 0.0
    %2024 = vmatpush1.xpose.msra.mxu0 0.0
    %2025 = vmatprep.subr.mxu0 0.0
    %2026 = vmatpush1.xpose.msra.mxu0 0.0
    %2027 = vmatprep.subr.mxu0 0.0
    %2028 = vmatpush1.xpose.msra.mxu0 0.0
    %2029 = vmatprep.subr.mxu0 0.0
    %2030 = vmatpush1.xpose.msra.mxu0 0.0
    %2031 = vmatprep.subr.mxu0 0.0
    %2032 = vmatpush1.xpose.msra.mxu0 0.0
    %2033 = vmatprep.subr.mxu0 0.0
    %2034 = vmatpush1.xpose.msra.mxu0 0.0
    %2035 = vmatprep.subr.mxu0 0.0
    %2036 = vmatpush1.xpose.msra.mxu0 0.0
    %2037 = vmatprep.subr.mxu0 0.0
    %2038 = vmatpush1.xpose.msra.mxu0 0.0
    %2039 = vmatprep.subr.mxu0 0.0
    %2040 = vmatpush1.xpose.msra.mxu0 0.0
    %2041 = vmatprep.subr.mxu0 0.0
    %2042 = vmatpush1.xpose.msra.mxu0 0.0
    %2043 = vmatprep.mubr.f32.mxu0 0.0
    %2044 = vmatmul.mubr.f32.gmra.mrb[0].mxu0 %v1971
    %v2045 = vpop.f32.mrb[0].mxu0
    %v2046 = vadd.f32 %v40, %v2045
    %v2047 = vpop.f32.mrb[0].mxu0
    %2048 = vmatprep.mubr.f32.mxu0 0.0
    %2049 = vmatmul.mubr.f32.gmra.mrb[0].mxu0 %v1973
    %v2050 = vpop.f32.mrb[0].mxu0
    %v2051 = vadd.f32 %v41, %v2050
    %v2052 = vpop.f32.mrb[0].mxu0
    %2053 = vdwg.mxu0
    %v2054 = vsel %vm377, %v2046, -inf
    %2055 = vmax.xlane.f32.xlu0 %v2054
    %v2056 = vpop.xlane.xlu0 %2055
    %v2057 = vsel %vm377, %v2051, -inf
    %2058 = vmax.xlane.f32.xlu0 %v2057
    %v2059 = vpop.xlane.xlu0 %2058
    %v2060 = vsub.f32 %v2046, %v2056
    %v2061 = vsub.f32 %v2051, %v2059
    %v2062 = vmul.f32 %v2060, 1.442695
    %v2063 = vpow.pop %v2062
    %v2064 = vmul.f32 %v2061, 1.442695
    %v2065 = vpow.pop %v2064
    %v2066 = vsel %vm377, %v2063, 0.0
    %2067 = vadd.xlane.f32.xlu0 %v2066
    %v2068 = vpop.xlane.xlu0 %2067
    %v2069 = vsel %vm377, %v2065, 0.0
    %2070 = vadd.xlane.f32.xlu0 %v2069
    %v2071 = vpop.xlane.xlu0 %2070
    %v2072 = vrcp.pop %v2068
    %v2073 = vrcp.pop %v2071
    %v2074 = vmul.f32 %v2063, %v2072
    %v2075 = vmul.f32 %v2065, %v2073
    %2076 = vrot.lane.b32.xlu0 %v129, 72
    %v2077 = vpop.permute.xlu0 %2076
    %2078 = vrot.lane.b32.xlu0 %v134, 72
    %v2079 = vpop.permute.xlu0 %2078
    %v2083 = vsel %vm377, %v2074, 0
    %v2086 = vsel %vm377, %v2075, 0
    %2088 = vmatprep.subr.mxu0 0.0
    %2089 = vmatpush1.msra.mxu0 %v2077
    %2090 = vmatprep.subr.mxu0 0.0
    %2091 = vmatpush1.msra.mxu0 %v2079
    %2092 = vmatprep.subr.mxu0 0.0
    %2093 = vmatpush1.msra.mxu0 0.0
    %2094 = vmatprep.subr.mxu0 0.0
    %2095 = vmatpush1.msra.mxu0 0.0
    %2096 = vmatprep.subr.mxu0 0.0
    %2097 = vmatpush1.msra.mxu0 0.0
    %2098 = vmatprep.subr.mxu0 0.0
    %2099 = vmatpush1.msra.mxu0 0.0
    %2100 = vmatprep.subr.mxu0 0.0
    %2101 = vmatpush1.msra.mxu0 0.0
    %2102 = vmatprep.subr.mxu0 0.0
    %2103 = vmatpush1.msra.mxu0 0.0
    %2104 = vmatprep.subr.mxu0 0.0
    %2105 = vmatpush1.msra.mxu0 0.0
    %2106 = vmatprep.subr.mxu0 0.0
    %2107 = vmatpush1.msra.mxu0 0.0
    %2108 = vmatprep.subr.mxu0 0.0
    %2109 = vmatpush1.msra.mxu0 0.0
    %2110 = vmatprep.subr.mxu0 0.0
    %2111 = vmatpush1.msra.mxu0 0.0
    %2112 = vmatprep.subr.mxu0 0.0
    %2113 = vmatpush1.msra.mxu0 0.0
    %2114 = vmatprep.subr.mxu0 0.0
    %2115 = vmatpush1.msra.mxu0 0.0
    %2116 = vmatprep.subr.mxu0 0.0
    %2117 = vmatpush1.msra.mxu0 0.0
    %2118 = vmatprep.subr.mxu0 0.0
    %2119 = vmatpush1.msra.mxu0 0.0
    %2120 = vmatprep.subr.mxu0 0.0
    %2121 = vmatpush1.msra.mxu0 0.0
    %2122 = vmatprep.subr.mxu0 0.0
    %2123 = vmatpush1.msra.mxu0 0.0
    %2124 = vmatprep.subr.mxu0 0.0
    %2125 = vmatpush1.msra.mxu0 0.0
    %2126 = vmatprep.subr.mxu0 0.0
    %2127 = vmatpush1.msra.mxu0 0.0
    %2128 = vmatprep.subr.mxu0 0.0
    %2129 = vmatpush1.msra.mxu0 0.0
    %2130 = vmatprep.subr.mxu0 0.0
    %2131 = vmatpush1.msra.mxu0 0.0
    %2132 = vmatprep.subr.mxu0 0.0
    %2133 = vmatpush1.msra.mxu0 0.0
    %2134 = vmatprep.subr.mxu0 0.0
    %2135 = vmatpush1.msra.mxu0 0.0
    %2136 = vmatprep.subr.mxu0 0.0
    %2137 = vmatpush1.msra.mxu0 0.0
    %2138 = vmatprep.subr.mxu0 0.0
    %2139 = vmatpush1.msra.mxu0 0.0
    %2140 = vmatprep.subr.mxu0 0.0
    %2141 = vmatpush1.msra.mxu0 0.0
    %2142 = vmatprep.subr.mxu0 0.0
    %2143 = vmatpush1.msra.mxu0 0.0
    %2144 = vmatprep.subr.mxu0 0.0
    %2145 = vmatpush1.msra.mxu0 0.0
    %2146 = vmatprep.subr.mxu0 0.0
    %2147 = vmatpush1.msra.mxu0 0.0
    %2148 = vmatprep.subr.mxu0 0.0
    %2149 = vmatpush1.msra.mxu0 0.0
    %2150 = vmatprep.subr.mxu0 0.0
    %2151 = vmatpush1.msra.mxu0 0.0
    %2152 = vmatprep.mubr.f32.mxu0 0.0
    %2153 = vmatmul.mubr.f32.gmra.mrb[0].mxu0 %v2083
    %v2154 = vpop.f32.mrb[0].mxu0
    %v2155 = vadd.f32 0.0, %v2154
    %v2156 = vpop.f32.mrb[0].mxu0
    %2157 = vmatprep.mubr.f32.mxu0 0.0
    %2158 = vmatmul.mubr.f32.gmra.mrb[0].mxu0 %v2086
    %v2159 = vpop.f32.mrb[0].mxu0
    %v2160 = vadd.f32 0.0, %v2159
    %v2161 = vpop.f32.mrb[0].mxu0
    %2162 = vdwg.mxu0
    %2165 = vrot.lane.b32.xlu0 %v1755, 8
    %v2166 = vpop.permute.xlu0 %2165
    %2167 = vrot.lane.b32.xlu0 %v1760, 8
    %v2168 = vpop.permute.xlu0 %2167
    %2173 = vrot.lane.b32.xlu0 %v1955, 16
    %v2174 = vpop.permute.xlu0 %2173
    %2175 = vrot.lane.b32.xlu0 %v1960, 16
    %v2176 = vpop.permute.xlu0 %2175
    %2181 = vrot.lane.b32.xlu0 %v2155, 24
    %v2182 = vpop.permute.xlu0 %2181
    %2183 = vrot.lane.b32.xlu0 %v2160, 24
    %v2184 = vpop.permute.xlu0 %2183
    %v2187 = vsel %vm291, %v1555, %v2166
    %v2188 = vsel %vm291, %v1560, %v2168
    %v2189 = vsel %vm377, %v2187, %v2174
    %v2190 = vsel %vm377, %v2188, %v2176
    %v2191 = vsel %vm1115, %v2189, %v2182
    %v2192 = vsel %vm1115, %v2190, %v2184
    %2197 = vrot.lane.b32.xlu0 %v1275, 96
    %v2198 = vpop.permute.xlu0 %2197
    %2199 = vrot.lane.b32.xlu0 %v1276, 96
    %v2200 = vpop.permute.xlu0 %2199
    %2201 = vrot.lane.b32.xlu0 %v1277, 96
    %v2202 = vpop.permute.xlu0 %2201
    %2203 = vrot.lane.b32.xlu0 %v1278, 96
    %v2204 = vpop.permute.xlu0 %2203
    %2210 = vrot.lane.b32.xlu0 %v1283, 96
    %v2211 = vpop.permute.xlu0 %2210
    %v2214 = vsel %vm55, %v2191, 0
    %v2217 = vsel %vm55, %v2192, 0
    %2219 = vmatprep.subr.mxu0 0.0
    %2220 = vmatpush1.msra.mxu0 %v2198
    %2221 = vmatprep.subr.mxu0 0.0
    %2222 = vmatpush1.msra.mxu0 %v2200
    %2223 = vmatprep.subr.mxu0 0.0
    %2224 = vmatpush1.msra.mxu0 %v2202
    %2225 = vmatprep.subr.mxu0 0.0
    %2226 = vmatpush1.msra.mxu0 %v2204
    %2227 = vmatprep.subr.mxu0 0.0
    %2228 = vmatpush1.msra.mxu0 0.0
    %2229 = vmatprep.subr.mxu0 0.0
    %2230 = vmatpush1.msra.mxu0 0.0
    %2231 = vmatprep.subr.mxu0 0.0
    %2232 = vmatpush1.msra.mxu0 0.0
    %2233 = vmatprep.subr.mxu0 0.0
    %2234 = vmatpush1.msra.mxu0 0.0
    %2235 = vmatprep.subr.mxu0 0.0
    %2236 = vmatpush1.msra.mxu0 0.0
    %2237 = vmatprep.subr.mxu0 0.0
    %2238 = vmatpush1.msra.mxu0 0.0
    %2239 = vmatprep.subr.mxu0 0.0
    %2240 = vmatpush1.msra.mxu0 0.0
    %2241 = vmatprep.subr.mxu0 0.0
    %2242 = vmatpush1.msra.mxu0 0.0
    %2243 = vmatprep.subr.mxu0 0.0
    %2244 = vmatpush1.msra.mxu0 0.0
    %2245 = vmatprep.subr.mxu0 0.0
    %2246 = vmatpush1.msra.mxu0 0.0
    %2247 = vmatprep.subr.mxu0 0.0
    %2248 = vmatpush1.msra.mxu0 0.0
    %2249 = vmatprep.subr.mxu0 0.0
    %2250 = vmatpush1.msra.mxu0 0.0
    %2251 = vmatprep.subr.mxu0 0.0
    %2252 = vmatpush1.msra.mxu0 0.0
    %2253 = vmatprep.subr.mxu0 0.0
    %2254 = vmatpush1.msra.mxu0 0.0
    %2255 = vmatprep.subr.mxu0 0.0
    %2256 = vmatpush1.msra.mxu0 0.0
    %2257 = vmatprep.subr.mxu0 0.0
    %2258 = vmatpush1.msra.mxu0 0.0
    %2259 = vmatprep.subr.mxu0 0.0
    %2260 = vmatpush1.msra.mxu0 0.0
    %2261 = vmatprep.subr.mxu0 0.0
    %2262 = vmatpush1.msra.mxu0 0.0
    %2263 = vmatprep.subr.mxu0 0.0
    %2264 = vmatpush1.msra.mxu0 0.0
    %2265 = vmatprep.subr.mxu0 0.0
    %2266 = vmatpush1.msra.mxu0 0.0
    %2267 = vmatprep.subr.mxu0 0.0
    %2268 = vmatpush1.msra.mxu0 0.0
    %2269 = vmatprep.subr.mxu0 0.0
    %2270 = vmatpush1.msra.mxu0 0.0
    %2271 = vmatprep.subr.mxu0 0.0
    %2272 = vmatpush1.msra.mxu0 0.0
    %2273 = vmatprep.subr.mxu0 0.0
    %2274 = vmatpush1.msra.mxu0 0.0
    %2275 = vmatprep.subr.mxu0 0.0
    %2276 = vmatpush1.msra.mxu0 0.0
    %2277 = vmatprep.subr.mxu0 0.0
    %2278 = vmatpush1.msra.mxu0 0.0
    %2279 = vmatprep.subr.mxu0 0.0
    %2280 = vmatpush1.msra.mxu0 0.0
    %2281 = vmatprep.subr.mxu0 0.0
    %2282 = vmatpush1.msra.mxu0 0.0
    %2283 = vmatprep.mubr.f32.mxu0 0.0
    %2284 = vmatmul.mubr.f32.gmra.mrb[0].mxu0 %v2214
    %v2285 = vpop.f32.mrb[0].mxu0
    %v2286 = vadd.f32 %v2211, %v2285
    %v2287 = vpop.f32.mrb[0].mxu0
    %2288 = vmatprep.mubr.f32.mxu0 0.0
    %2289 = vmatmul.mubr.f32.gmra.mrb[0].mxu0 %v2217
    %v2290 = vpop.f32.mrb[0].mxu0
    %v2291 = vadd.f32 %v2211, %v2290
    %v2292 = vpop.f32.mrb[0].mxu0
    %2293 = vdwg.mxu0
    %v2294 = vadd.f32 %v1219, %v2286
    %v2295 = vadd.f32 %v1220, %v2291
    %v2296 = vld [vmem:[%s9 + $0x4] sm:$0x1]
    %v2297 = vld [vmem:[%s9 + $0x5] sm:$0x1]
    %v2298 = vsel %vm55, %v2294, 0.0
    %2299 = vadd.xlane.f32.xlu0 %v2298
    %v2300 = vpop.xlane.xlu0 %2299
    %v2301 = vsel %vm55, %v2295, 0.0
    %2302 = vadd.xlane.f32.xlu0 %v2301
    %v2303 = vpop.xlane.xlu0 %2302
    %v2304 = vmul.f32 %v2300, %v145
    %v2305 = vmul.f32 %v2303, %v145
    %v2306 = vsub.f32 %v2294, %v2304
    %v2307 = vsub.f32 %v2295, %v2305
    %v2308 = vmul.f32 %v2306, %v2306
    %v2309 = vmul.f32 %v2307, %v2307
    %v2310 = vsel %vm55, %v2308, 0.0
    %2311 = vadd.xlane.f32.xlu0 %v2310
    %v2312 = vpop.xlane.xlu0 %2311
    %v2313 = vsel %vm55, %v2309, 0.0
    %2314 = vadd.xlane.f32.xlu0 %v2313
    %v2315 = vpop.xlane.xlu0 %2314
    %v2316 = vmul.f32 %v2312, %v158
    %v2317 = vmul.f32 %v2315, %v158
    %v2318 = vlaneseq
    %v2319 = vshrl.u32 %v2318, 7
    %v2320 = vsub.s32 0, %v2319
    %v2321 = vrot.slane %v2296, %v2320
    %v2322 = vmul.f32 %v2321, %v2306
    %v2323 = vmul.f32 %v2321, %v2307
    %v2324 = vrsqrt.pop %v2316
    %v2325 = vmul.f32 %v2316, %v2324
    %vm2326 = vcmp.eq.f32.partialorder %v2316, inf
    %v2327 = vsel %vm2326, %v2316, %v2325
    %vm2328 = vcmp.eq.f32.partialorder %v2316, 0.0
    %v2329 = vand.u32 %v2316, 2147483648
    %v2330 = vsel %vm2328, %v2329, %v2327
    %v2331 = vrsqrt.pop %v2317
    %v2332 = vmul.f32 %v2317, %v2331
    %vm2333 = vcmp.eq.f32.partialorder %v2317, inf
    %v2334 = vsel %vm2333, %v2317, %v2332
    %vm2335 = vcmp.eq.f32.partialorder %v2317, 0.0
    %v2336 = vand.u32 %v2317, 2147483648
    %v2337 = vsel %vm2335, %v2336, %v2334
    %v2338 = vadd.f32 %v2330, 1e-06
    %v2339 = vadd.f32 %v2337, 1e-06
    %v2340 = vrcp.pop %v2338
    %v2341 = vmul.f32 %v2322, %v2340
    %v2342 = vrcp.pop %v2339
    %v2343 = vmul.f32 %v2323, %v2342
    %v2344 = vlaneseq
    %v2345 = vshrl.u32 %v2344, 7
    %v2346 = vsub.s32 0, %v2345
    %v2347 = vrot.slane %v2297, %v2346
    %v2348 = vadd.f32 %v2341, %v2347
    %v2349 = vadd.f32 %v2343, %v2347
    %2350 = vrot.lane.b32.xlu0 %v1275, 64
    %v2351 = vpop.permute.xlu0 %2350
    %2352 = vrot.lane.b32.xlu0 %v1276, 64
    %v2353 = vpop.permute.xlu0 %2352
    %2354 = vrot.lane.b32.xlu0 %v1277, 64
    %v2355 = vpop.permute.xlu0 %2354
    %2356 = vrot.lane.b32.xlu0 %v1278, 64
    %v2357 = vpop.permute.xlu0 %2356
    %2362 = vrot.lane.b32.xlu0 %v1283, 64
    %v2363 = vpop.permute.xlu0 %2362
    %v2366 = vsel %vm55, %v2348, 0
    %v2369 = vsel %vm55, %v2349, 0
    %2371 = vmatprep.subr.mxu0 0.0
    %2372 = vmatpush1.msra.mxu0 %v2351
    %2373 = vmatprep.subr.mxu0 0.0
    %2374 = vmatpush1.msra.mxu0 %v2353
    %2375 = vmatprep.subr.mxu0 0.0
    %2376 = vmatpush1.msra.mxu0 %v2355
    %2377 = vmatprep.subr.mxu0 0.0
    %2378 = vmatpush1.msra.mxu0 %v2357
    %2379 = vmatprep.subr.mxu0 0.0
    %2380 = vmatpush1.msra.mxu0 0.0
    %2381 = vmatprep.subr.mxu0 0.0
    %2382 = vmatpush1.msra.mxu0 0.0
    %2383 = vmatprep.subr.mxu0 0.0
    %2384 = vmatpush1.msra.mxu0 0.0
    %2385 = vmatprep.subr.mxu0 0.0
    %2386 = vmatpush1.msra.mxu0 0.0
    %2387 = vmatprep.subr.mxu0 0.0
    %2388 = vmatpush1.msra.mxu0 0.0
    %2389 = vmatprep.subr.mxu0 0.0
    %2390 = vmatpush1.msra.mxu0 0.0
    %2391 = vmatprep.subr.mxu0 0.0
    %2392 = vmatpush1.msra.mxu0 0.0
    %2393 = vmatprep.subr.mxu0 0.0
    %2394 = vmatpush1.msra.mxu0 0.0
    %2395 = vmatprep.subr.mxu0 0.0
    %2396 = vmatpush1.msra.mxu0 0.0
    %2397 = vmatprep.subr.mxu0 0.0
    %2398 = vmatpush1.msra.mxu0 0.0
    %2399 = vmatprep.subr.mxu0 0.0
    %2400 = vmatpush1.msra.mxu0 0.0
    %2401 = vmatprep.subr.mxu0 0.0
    %2402 = vmatpush1.msra.mxu0 0.0
    %2403 = vmatprep.subr.mxu0 0.0
    %2404 = vmatpush1.msra.mxu0 0.0
    %2405 = vmatprep.subr.mxu0 0.0
    %2406 = vmatpush1.msra.mxu0 0.0
    %2407 = vmatprep.subr.mxu0 0.0
    %2408 = vmatpush1.msra.mxu0 0.0
    %2409 = vmatprep.subr.mxu0 0.0
    %2410 = vmatpush1.msra.mxu0 0.0
    %2411 = vmatprep.subr.mxu0 0.0
    %2412 = vmatpush1.msra.mxu0 0.0
    %2413 = vmatprep.subr.mxu0 0.0
    %2414 = vmatpush1.msra.mxu0 0.0
    %2415 = vmatprep.subr.mxu0 0.0
    %2416 = vmatpush1.msra.mxu0 0.0
    %2417 = vmatprep.subr.mxu0 0.0
    %2418 = vmatpush1.msra.mxu0 0.0
    %2419 = vmatprep.subr.mxu0 0.0
    %2420 = vmatpush1.msra.mxu0 0.0
    %2421 = vmatprep.subr.mxu0 0.0
    %2422 = vmatpush1.msra.mxu0 0.0
    %2423 = vmatprep.subr.mxu0 0.0
    %2424 = vmatpush1.msra.mxu0 0.0
    %2425 = vmatprep.subr.mxu0 0.0
    %2426 = vmatpush1.msra.mxu0 0.0
    %2427 = vmatprep.subr.mxu0 0.0
    %2428 = vmatpush1.msra.mxu0 0.0
    %2429 = vmatprep.subr.mxu0 0.0
    %2430 = vmatpush1.msra.mxu0 0.0
    %2431 = vmatprep.subr.mxu0 0.0
    %2432 = vmatpush1.msra.mxu0 0.0
    %2433 = vmatprep.subr.mxu0 0.0
    %2434 = vmatpush1.msra.mxu0 0.0
    %2435 = vmatprep.mubr.f32.mxu0 0.0
    %2436 = vmatmul.mubr.f32.gmra.mrb[0].mxu0 %v2366
    %v2437 = vpop.f32.mrb[0].mxu0
    %v2438 = vadd.f32 %v2363, %v2437
    %v2439 = vpop.f32.mrb[0].mxu0
    %2440 = vmatprep.mubr.f32.mxu0 0.0
    %2441 = vmatmul.mubr.f32.gmra.mrb[0].mxu0 %v2369
    %v2442 = vpop.f32.mrb[0].mxu0
    %v2443 = vadd.f32 %v2363, %v2442
    %v2444 = vpop.f32.mrb[0].mxu0
    %2445 = vdwg.mxu0
    %v2446 = vmax.f32 %v2438, 0.0
    %v2447 = vmax.f32 %v2443, 0.0
    %v2448 = vld [vmem:[%s5] sm:$0xff]
    %v2449 = vld [vmem:[%s5 + $0x8] sm:$0xff]
    %v2450 = vld [vmem:[%s5 + $0x10] sm:$0xff]
    %v2451 = vld [vmem:[%s5 + $0x18] sm:$0xff]
    %v2452 = vld [vmem:[%s5 + $0x20] sm:$0xff]
    %v2453 = vld [vmem:[%s5 + $0x28] sm:$0xff]
    %v2454 = vld [vmem:[%s5 + $0x30] sm:$0xff]
    %v2455 = vld [vmem:[%s5 + $0x38] sm:$0xff]
    %v2456 = vld [vmem:[%s8 + $0x4] sm:$0x1]
    %v2457 = vlaneseq
    %v2458 = vshrl.u32 %v2457, 7
    %v2459 = vsub.s32 0, %v2458
    %v2460 = vrot.slane %v2456, %v2459
    %vm2461 = vcmask 523264
    %v2463 = vsel %vm2461, %v2446, 0
    %v2466 = vsel %vm2461, %v2447, 0
    %2468 = vmatprep.subr.mxu0 0.0
    %2469 = vmatpush1.msra.mxu0 %v2448
    %2470 = vmatprep.subr.mxu0 0.0
    %2471 = vmatpush1.msra.mxu0 %v2449
    %2472 = vmatprep.subr.mxu0 0.0
    %2473 = vmatpush1.msra.mxu0 %v2450
    %2474 = vmatprep.subr.mxu0 0.0
    %2475 = vmatpush1.msra.mxu0 %v2451
    %2476 = vmatprep.subr.mxu0 0.0
    %2477 = vmatpush1.msra.mxu0 %v2452
    %2478 = vmatprep.subr.mxu0 0.0
    %2479 = vmatpush1.msra.mxu0 %v2453
    %2480 = vmatprep.subr.mxu0 0.0
    %2481 = vmatpush1.msra.mxu0 %v2454
    %2482 = vmatprep.subr.mxu0 0.0
    %2483 = vmatpush1.msra.mxu0 %v2455
    %2484 = vmatprep.subr.mxu0 0.0
    %2485 = vmatpush1.msra.mxu0 0.0
    %2486 = vmatprep.subr.mxu0 0.0
    %2487 = vmatpush1.msra.mxu0 0.0
    %2488 = vmatprep.subr.mxu0 0.0
    %2489 = vmatpush1.msra.mxu0 0.0
    %2490 = vmatprep.subr.mxu0 0.0
    %2491 = vmatpush1.msra.mxu0 0.0
    %2492 = vmatprep.subr.mxu0 0.0
    %2493 = vmatpush1.msra.mxu0 0.0
    %2494 = vmatprep.subr.mxu0 0.0
    %2495 = vmatpush1.msra.mxu0 0.0
    %2496 = vmatprep.subr.mxu0 0.0
    %2497 = vmatpush1.msra.mxu0 0.0
    %2498 = vmatprep.subr.mxu0 0.0
    %2499 = vmatpush1.msra.mxu0 0.0
    %2500 = vmatprep.subr.mxu0 0.0
    %2501 = vmatpush1.msra.mxu0 0.0
    %2502 = vmatprep.subr.mxu0 0.0
    %2503 = vmatpush1.msra.mxu0 0.0
    %2504 = vmatprep.subr.mxu0 0.0
    %2505 = vmatpush1.msra.mxu0 0.0
    %2506 = vmatprep.subr.mxu0 0.0
    %2507 = vmatpush1.msra.mxu0 0.0
    %2508 = vmatprep.subr.mxu0 0.0
    %2509 = vmatpush1.msra.mxu0 0.0
    %2510 = vmatprep.subr.mxu0 0.0
    %2511 = vmatpush1.msra.mxu0 0.0
    %2512 = vmatprep.subr.mxu0 0.0
    %2513 = vmatpush1.msra.mxu0 0.0
    %2514 = vmatprep.subr.mxu0 0.0
    %2515 = vmatpush1.msra.mxu0 0.0
    %2516 = vmatprep.subr.mxu0 0.0
    %2517 = vmatpush1.msra.mxu0 0.0
    %2518 = vmatprep.subr.mxu0 0.0
    %2519 = vmatpush1.msra.mxu0 0.0
    %2520 = vmatprep.subr.mxu0 0.0
    %2521 = vmatpush1.msra.mxu0 0.0
    %2522 = vmatprep.subr.mxu0 0.0
    %2523 = vmatpush1.msra.mxu0 0.0
    %2524 = vmatprep.subr.mxu0 0.0
    %2525 = vmatpush1.msra.mxu0 0.0
    %2526 = vmatprep.subr.mxu0 0.0
    %2527 = vmatpush1.msra.mxu0 0.0
    %2528 = vmatprep.subr.mxu0 0.0
    %2529 = vmatpush1.msra.mxu0 0.0
    %2530 = vmatprep.subr.mxu0 0.0
    %2531 = vmatpush1.msra.mxu0 0.0
    %2532 = vmatprep.mubr.f32.mxu0 0.0
    %2533 = vmatmul.mubr.f32.gmra.mrb[0].mxu0 %v2463
    %v2534 = vpop.f32.mrb[0].mxu0
    %v2535 = vadd.f32 %v2460, %v2534
    %v2536 = vpop.f32.mrb[0].mxu0
    %2537 = vmatprep.mubr.f32.mxu0 0.0
    %2538 = vmatmul.mubr.f32.gmra.mrb[0].mxu0 %v2466
    %v2539 = vpop.f32.mrb[0].mxu0
    %v2540 = vadd.f32 %v2460, %v2539
    %v2541 = vpop.f32.mrb[0].mxu0
    %2542 = vdwg.mxu0
    %v2543 = vadd.f32 %v2294, %v2535
    %v2544 = vadd.f32 %v2295, %v2540
    %v2545 = vld [vmem:[%s9 + $0x6] sm:$0x1]
    %v2546 = vld [vmem:[%s9 + $0x7] sm:$0x1]
    %v2547 = vsel %vm55, %v2543, 0.0
    %2548 = vadd.xlane.f32.xlu0 %v2547
    %v2549 = vpop.xlane.xlu0 %2548
    %v2550 = vsel %vm55, %v2544, 0.0
    %2551 = vadd.xlane.f32.xlu0 %v2550
    %v2552 = vpop.xlane.xlu0 %2551
    %v2553 = vmul.f32 %v2549, %v145
    %v2554 = vmul.f32 %v2552, %v145
    %v2555 = vsub.f32 %v2543, %v2553
    %v2556 = vsub.f32 %v2544, %v2554
    %v2557 = vmul.f32 %v2555, %v2555
    %v2558 = vmul.f32 %v2556, %v2556
    %v2559 = vsel %vm55, %v2557, 0.0
    %2560 = vadd.xlane.f32.xlu0 %v2559
    %v2561 = vpop.xlane.xlu0 %2560
    %v2562 = vsel %vm55, %v2558, 0.0
    %2563 = vadd.xlane.f32.xlu0 %v2562
    %v2564 = vpop.xlane.xlu0 %2563
    %v2565 = vmul.f32 %v2561, %v158
    %v2566 = vmul.f32 %v2564, %v158
    %v2567 = vlaneseq
    %v2568 = vshrl.u32 %v2567, 7
    %v2569 = vsub.s32 0, %v2568
    %v2570 = vrot.slane %v2545, %v2569
    %v2571 = vmul.f32 %v2570, %v2555
    %v2572 = vmul.f32 %v2570, %v2556
    %v2573 = vrsqrt.pop %v2565
    %v2574 = vmul.f32 %v2565, %v2573
    %vm2575 = vcmp.eq.f32.partialorder %v2565, inf
    %v2576 = vsel %vm2575, %v2565, %v2574
    %vm2577 = vcmp.eq.f32.partialorder %v2565, 0.0
    %v2578 = vand.u32 %v2565, 2147483648
    %v2579 = vsel %vm2577, %v2578, %v2576
    %v2580 = vrsqrt.pop %v2566
    %v2581 = vmul.f32 %v2566, %v2580
    %vm2582 = vcmp.eq.f32.partialorder %v2566, inf
    %v2583 = vsel %vm2582, %v2566, %v2581
    %vm2584 = vcmp.eq.f32.partialorder %v2566, 0.0
    %v2585 = vand.u32 %v2566, 2147483648
    %v2586 = vsel %vm2584, %v2585, %v2583
    %v2587 = vadd.f32 %v2579, 1e-06
    %v2588 = vadd.f32 %v2586, 1e-06
    %v2589 = vrcp.pop %v2587
    %v2590 = vmul.f32 %v2571, %v2589
    %v2591 = vrcp.pop %v2588
    %v2592 = vmul.f32 %v2572, %v2591
    %v2593 = vlaneseq
    %v2594 = vshrl.u32 %v2593, 7
    %v2595 = vsub.s32 0, %v2594
    %v2596 = vrot.slane %v2546, %v2595
    %v2597 = vadd.f32 %v2590, %v2596
    %v2598 = vadd.f32 %v2592, %v2596
    %s2599 = scalar_lea.vmem %s4, 64
    %v2600 = vld [vmem:[%s2599] sm:$0xff]
    %v2601 = vld [vmem:[%s2599 + $0x10] sm:$0xff]
    %v2602 = vld [vmem:[%s2599 + $0x20] sm:$0xff]
    %v2603 = vld [vmem:[%s2599 + $0x30] sm:$0xff]
    %v2604 = vld [vmem:[%s8 + $0x1] sm:$0x1]
    %v2605 = vlaneseq
    %v2606 = vshrl.u32 %v2605, 7
    %v2607 = vsub.s32 0, %v2606
    %v2608 = vrot.slane %v2604, %v2607
    %v2610 = vsel %vm55, %v2597, 0
    %v2613 = vsel %vm55, %v2598, 0
    %2615 = vmatprep.subr.mxu0 0.0
    %2616 = vmatpush1.msra.mxu0 %v2600
    %2617 = vmatprep.subr.mxu0 0.0
    %2618 = vmatpush1.msra.mxu0 %v2601
    %2619 = vmatprep.subr.mxu0 0.0
    %2620 = vmatpush1.msra.mxu0 %v2602
    %2621 = vmatprep.subr.mxu0 0.0
    %2622 = vmatpush1.msra.mxu0 %v2603
    %2623 = vmatprep.subr.mxu0 0.0
    %2624 = vmatpush1.msra.mxu0 0.0
    %2625 = vmatprep.subr.mxu0 0.0
    %2626 = vmatpush1.msra.mxu0 0.0
    %2627 = vmatprep.subr.mxu0 0.0
    %2628 = vmatpush1.msra.mxu0 0.0
    %2629 = vmatprep.subr.mxu0 0.0
    %2630 = vmatpush1.msra.mxu0 0.0
    %2631 = vmatprep.subr.mxu0 0.0
    %2632 = vmatpush1.msra.mxu0 0.0
    %2633 = vmatprep.subr.mxu0 0.0
    %2634 = vmatpush1.msra.mxu0 0.0
    %2635 = vmatprep.subr.mxu0 0.0
    %2636 = vmatpush1.msra.mxu0 0.0
    %2637 = vmatprep.subr.mxu0 0.0
    %2638 = vmatpush1.msra.mxu0 0.0
    %2639 = vmatprep.subr.mxu0 0.0
    %2640 = vmatpush1.msra.mxu0 0.0
    %2641 = vmatprep.subr.mxu0 0.0
    %2642 = vmatpush1.msra.mxu0 0.0
    %2643 = vmatprep.subr.mxu0 0.0
    %2644 = vmatpush1.msra.mxu0 0.0
    %2645 = vmatprep.subr.mxu0 0.0
    %2646 = vmatpush1.msra.mxu0 0.0
    %2647 = vmatprep.subr.mxu0 0.0
    %2648 = vmatpush1.msra.mxu0 0.0
    %2649 = vmatprep.subr.mxu0 0.0
    %2650 = vmatpush1.msra.mxu0 0.0
    %2651 = vmatprep.subr.mxu0 0.0
    %2652 = vmatpush1.msra.mxu0 0.0
    %2653 = vmatprep.subr.mxu0 0.0
    %2654 = vmatpush1.msra.mxu0 0.0
    %2655 = vmatprep.subr.mxu0 0.0
    %2656 = vmatpush1.msra.mxu0 0.0
    %2657 = vmatprep.subr.mxu0 0.0
    %2658 = vmatpush1.msra.mxu0 0.0
    %2659 = vmatprep.subr.mxu0 0.0
    %2660 = vmatpush1.msra.mxu0 0.0
    %2661 = vmatprep.subr.mxu0 0.0
    %2662 = vmatpush1.msra.mxu0 0.0
    %2663 = vmatprep.subr.mxu0 0.0
    %2664 = vmatpush1.msra.mxu0 0.0
    %2665 = vmatprep.subr.mxu0 0.0
    %2666 = vmatpush1.msra.mxu0 0.0
    %2667 = vmatprep.subr.mxu0 0.0
    %2668 = vmatpush1.msra.mxu0 0.0
    %2669 = vmatprep.subr.mxu0 0.0
    %2670 = vmatpush1.msra.mxu0 0.0
    %2671 = vmatprep.subr.mxu0 0.0
    %2672 = vmatpush1.msra.mxu0 0.0
    %2673 = vmatprep.subr.mxu0 0.0
    %2674 = vmatpush1.msra.mxu0 0.0
    %2675 = vmatprep.subr.mxu0 0.0
    %2676 = vmatpush1.msra.mxu0 0.0
    %2677 = vmatprep.subr.mxu0 0.0
    %2678 = vmatpush1.msra.mxu0 0.0
    %2679 = vmatprep.mubr.f32.mxu0 0.0
    %2680 = vmatmul.mubr.f32.gmra.mrb[0].mxu0 %v2610
    %v2681 = vpop.f32.mrb[0].mxu0
    %v2682 = vadd.f32 %v2608, %v2681
    %v2683 = vpop.f32.mrb[0].mxu0
    %2684 = vmatprep.mubr.f32.mxu0 0.0
    %2685 = vmatmul.mubr.f32.gmra.mrb[0].mxu0 %v2613
    %v2686 = vpop.f32.mrb[0].mxu0
    %v2687 = vadd.f32 %v2608, %v2686
    %v2688 = vpop.f32.mrb[0].mxu0
    %2689 = vdwg.mxu0
    %v2690 = vmul.f32 %v2682, 0.35355338
    %v2691 = vmul.f32 %v2687, 0.35355338
    %2694 = vrot.lane.b32.xlu0 %v2682, 96
    %v2695 = vpop.permute.xlu0 %2694
    %2696 = vrot.lane.b32.xlu0 %v2687, 96
    %v2697 = vpop.permute.xlu0 %2696
    %v2699 = vsel %vm291, %v2690, 0
    %v2702 = vsel %vm291, %v2691, 0
    %v2704 = vsel %vm291, %v2695, 0
    %v2706 = vsel %vm291, %v2697, 0
    %2708 = vmatprep.subr.mxu0 0.0
    %2709 = vmatpush1.xpose.msra.mxu0 %v2704
    %2710 = vmatprep.subr.mxu0 0.0
    %2711 = vmatpush1.xpose.msra.mxu0 %v2706
    %2712 = vmatprep.subr.mxu0 0.0
    %2713 = vmatpush1.xpose.msra.mxu0 0.0
    %2714 = vmatprep.subr.mxu0 0.0
    %2715 = vmatpush1.xpose.msra.mxu0 0.0
    %2716 = vmatprep.subr.mxu0 0.0
    %2717 = vmatpush1.xpose.msra.mxu0 0.0
    %2718 = vmatprep.subr.mxu0 0.0
    %2719 = vmatpush1.xpose.msra.mxu0 0.0
    %2720 = vmatprep.subr.mxu0 0.0
    %2721 = vmatpush1.xpose.msra.mxu0 0.0
    %2722 = vmatprep.subr.mxu0 0.0
    %2723 = vmatpush1.xpose.msra.mxu0 0.0
    %2724 = vmatprep.subr.mxu0 0.0
    %2725 = vmatpush1.xpose.msra.mxu0 0.0
    %2726 = vmatprep.subr.mxu0 0.0
    %2727 = vmatpush1.xpose.msra.mxu0 0.0
    %2728 = vmatprep.subr.mxu0 0.0
    %2729 = vmatpush1.xpose.msra.mxu0 0.0
    %2730 = vmatprep.subr.mxu0 0.0
    %2731 = vmatpush1.xpose.msra.mxu0 0.0
    %2732 = vmatprep.subr.mxu0 0.0
    %2733 = vmatpush1.xpose.msra.mxu0 0.0
    %2734 = vmatprep.subr.mxu0 0.0
    %2735 = vmatpush1.xpose.msra.mxu0 0.0
    %2736 = vmatprep.subr.mxu0 0.0
    %2737 = vmatpush1.xpose.msra.mxu0 0.0
    %2738 = vmatprep.subr.mxu0 0.0
    %2739 = vmatpush1.xpose.msra.mxu0 0.0
    %2740 = vmatprep.subr.mxu0 0.0
    %2741 = vmatpush1.xpose.msra.mxu0 0.0
    %2742 = vmatprep.subr.mxu0 0.0
    %2743 = vmatpush1.xpose.msra.mxu0 0.0
    %2744 = vmatprep.subr.mxu0 0.0
    %2745 = vmatpush1.xpose.msra.mxu0 0.0
    %2746 = vmatprep.subr.mxu0 0.0
    %2747 = vmatpush1.xpose.msra.mxu0 0.0
    %2748 = vmatprep.subr.mxu0 0.0
    %2749 = vmatpush1.xpose.msra.mxu0 0.0
    %2750 = vmatprep.subr.mxu0 0.0
    %2751 = vmatpush1.xpose.msra.mxu0 0.0
    %2752 = vmatprep.subr.mxu0 0.0
    %2753 = vmatpush1.xpose.msra.mxu0 0.0
    %2754 = vmatprep.subr.mxu0 0.0
    %2755 = vmatpush1.xpose.msra.mxu0 0.0
    %2756 = vmatprep.subr.mxu0 0.0
    %2757 = vmatpush1.xpose.msra.mxu0 0.0
    %2758 = vmatprep.subr.mxu0 0.0
    %2759 = vmatpush1.xpose.msra.mxu0 0.0
    %2760 = vmatprep.subr.mxu0 0.0
    %2761 = vmatpush1.xpose.msra.mxu0 0.0
    %2762 = vmatprep.subr.mxu0 0.0
    %2763 = vmatpush1.xpose.msra.mxu0 0.0
    %2764 = vmatprep.subr.mxu0 0.0
    %2765 = vmatpush1.xpose.msra.mxu0 0.0
    %2766 = vmatprep.subr.mxu0 0.0
    %2767 = vmatpush1.xpose.msra.mxu0 0.0
    %2768 = vmatprep.subr.mxu0 0.0
    %2769 = vmatpush1.xpose.msra.mxu0 0.0
    %2770 = vmatprep.subr.mxu0 0.0
    %2771 = vmatpush1.xpose.msra.mxu0 0.0
    %2772 = vmatprep.mubr.f32.mxu0 0.0
    %2773 = vmatmul.mubr.f32.gmra.mrb[0].mxu0 %v2699
    %v2774 = vpop.f32.mrb[0].mxu0
    %v2775 = vadd.f32 %v38, %v2774
    %v2776 = vpop.f32.mrb[0].mxu0
    %2777 = vmatprep.mubr.f32.mxu0 0.0
    %2778 = vmatmul.mubr.f32.gmra.mrb[0].mxu0 %v2702
    %v2779 = vpop.f32.mrb[0].mxu0
    %v2780 = vadd.f32 %v39, %v2779
    %v2781 = vpop.f32.mrb[0].mxu0
    %2782 = vdwg.mxu0
    %v2783 = vsel %vm377, %v2775, -inf
    %2784 = vmax.xlane.f32.xlu0 %v2783
    %v2785 = vpop.xlane.xlu0 %2784
    %v2786 = vsel %vm377, %v2780, -inf
    %2787 = vmax.xlane.f32.xlu0 %v2786
    %v2788 = vpop.xlane.xlu0 %2787
    %v2789 = vsub.f32 %v2775, %v2785
    %v2790 = vsub.f32 %v2780, %v2788
    %v2791 = vmul.f32 %v2789, 1.442695
    %v2792 = vpow.pop %v2791
    %v2793 = vmul.f32 %v2790, 1.442695
    %v2794 = vpow.pop %v2793
    %v2795 = vsel %vm377, %v2792, 0.0
    %2796 = vadd.xlane.f32.xlu0 %v2795
    %v2797 = vpop.xlane.xlu0 %2796
    %v2798 = vsel %vm377, %v2794, 0.0
    %2799 = vadd.xlane.f32.xlu0 %v2798
    %v2800 = vpop.xlane.xlu0 %2799
    %v2801 = vrcp.pop %v2797
    %v2802 = vrcp.pop %v2800
    %v2803 = vmul.f32 %v2792, %v2801
    %v2804 = vmul.f32 %v2794, %v2802
    %2805 = vrot.lane.b32.xlu0 %v2682, 64
    %v2806 = vpop.permute.xlu0 %2805
    %2807 = vrot.lane.b32.xlu0 %v2687, 64
    %v2808 = vpop.permute.xlu0 %2807
    %v2812 = vsel %vm377, %v2803, 0
    %v2815 = vsel %vm377, %v2804, 0
    %2817 = vmatprep.subr.mxu0 0.0
    %2818 = vmatpush1.msra.mxu0 %v2806
    %2819 = vmatprep.subr.mxu0 0.0
    %2820 = vmatpush1.msra.mxu0 %v2808
    %2821 = vmatprep.subr.mxu0 0.0
    %2822 = vmatpush1.msra.mxu0 0.0
    %2823 = vmatprep.subr.mxu0 0.0
    %2824 = vmatpush1.msra.mxu0 0.0
    %2825 = vmatprep.subr.mxu0 0.0
    %2826 = vmatpush1.msra.mxu0 0.0
    %2827 = vmatprep.subr.mxu0 0.0
    %2828 = vmatpush1.msra.mxu0 0.0
    %2829 = vmatprep.subr.mxu0 0.0
    %2830 = vmatpush1.msra.mxu0 0.0
    %2831 = vmatprep.subr.mxu0 0.0
    %2832 = vmatpush1.msra.mxu0 0.0
    %2833 = vmatprep.subr.mxu0 0.0
    %2834 = vmatpush1.msra.mxu0 0.0
    %2835 = vmatprep.subr.mxu0 0.0
    %2836 = vmatpush1.msra.mxu0 0.0
    %2837 = vmatprep.subr.mxu0 0.0
    %2838 = vmatpush1.msra.mxu0 0.0
    %2839 = vmatprep.subr.mxu0 0.0
    %2840 = vmatpush1.msra.mxu0 0.0
    %2841 = vmatprep.subr.mxu0 0.0
    %2842 = vmatpush1.msra.mxu0 0.0
    %2843 = vmatprep.subr.mxu0 0.0
    %2844 = vmatpush1.msra.mxu0 0.0
    %2845 = vmatprep.subr.mxu0 0.0
    %2846 = vmatpush1.msra.mxu0 0.0
    %2847 = vmatprep.subr.mxu0 0.0
    %2848 = vmatpush1.msra.mxu0 0.0
    %2849 = vmatprep.subr.mxu0 0.0
    %2850 = vmatpush1.msra.mxu0 0.0
    %2851 = vmatprep.subr.mxu0 0.0
    %2852 = vmatpush1.msra.mxu0 0.0
    %2853 = vmatprep.subr.mxu0 0.0
    %2854 = vmatpush1.msra.mxu0 0.0
    %2855 = vmatprep.subr.mxu0 0.0
    %2856 = vmatpush1.msra.mxu0 0.0
    %2857 = vmatprep.subr.mxu0 0.0
    %2858 = vmatpush1.msra.mxu0 0.0
    %2859 = vmatprep.subr.mxu0 0.0
    %2860 = vmatpush1.msra.mxu0 0.0
    %2861 = vmatprep.subr.mxu0 0.0
    %2862 = vmatpush1.msra.mxu0 0.0
    %2863 = vmatprep.subr.mxu0 0.0
    %2864 = vmatpush1.msra.mxu0 0.0
    %2865 = vmatprep.subr.mxu0 0.0
    %2866 = vmatpush1.msra.mxu0 0.0
    %2867 = vmatprep.subr.mxu0 0.0
    %2868 = vmatpush1.msra.mxu0 0.0
    %2869 = vmatprep.subr.mxu0 0.0
    %2870 = vmatpush1.msra.mxu0 0.0
    %2871 = vmatprep.subr.mxu0 0.0
    %2872 = vmatpush1.msra.mxu0 0.0
    %2873 = vmatprep.subr.mxu0 0.0
    %2874 = vmatpush1.msra.mxu0 0.0
    %2875 = vmatprep.subr.mxu0 0.0
    %2876 = vmatpush1.msra.mxu0 0.0
    %2877 = vmatprep.subr.mxu0 0.0
    %2878 = vmatpush1.msra.mxu0 0.0
    %2879 = vmatprep.subr.mxu0 0.0
    %2880 = vmatpush1.msra.mxu0 0.0
    %2881 = vmatprep.mubr.f32.mxu0 0.0
    %2882 = vmatmul.mubr.f32.gmra.mrb[0].mxu0 %v2812
    %v2883 = vpop.f32.mrb[0].mxu0
    %v2884 = vadd.f32 0.0, %v2883
    %v2885 = vpop.f32.mrb[0].mxu0
    %2886 = vmatprep.mubr.f32.mxu0 0.0
    %2887 = vmatmul.mubr.f32.gmra.mrb[0].mxu0 %v2815
    %v2888 = vpop.f32.mrb[0].mxu0
    %v2889 = vadd.f32 0.0, %v2888
    %v2890 = vpop.f32.mrb[0].mxu0
    %2891 = vdwg.mxu0
    %2892 = vrot.lane.b32.xlu0 %v2690, 120
    %v2893 = vpop.permute.xlu0 %2892
    %2894 = vrot.lane.b32.xlu0 %v2691, 120
    %v2895 = vpop.permute.xlu0 %2894
    %2896 = vrot.lane.b32.xlu0 %v2682, 88
    %v2897 = vpop.permute.xlu0 %2896
    %2898 = vrot.lane.b32.xlu0 %v2687, 88
    %v2899 = vpop.permute.xlu0 %2898
    %v2900 = vsel %vm291, %v2893, 0
    %v2902 = vsel %vm291, %v2895, 0
    %v2904 = vsel %vm291, %v2897, 0
    %v2906 = vsel %vm291, %v2899, 0
    %2908 = vmatprep.subr.mxu0 0.0
    %2909 = vmatpush1.xpose.msra.mxu0 %v2904
    %2910 = vmatprep.subr.mxu0 0.0
    %2911 = vmatpush1.xpose.msra.mxu0 %v2906
    %2912 = vmatprep.subr.mxu0 0.0
    %2913 = vmatpush1.xpose.msra.mxu0 0.0
    %2914 = vmatprep.subr.mxu0 0.0
    %2915 = vmatpush1.xpose.msra.mxu0 0.0
    %2916 = vmatprep.subr.mxu0 0.0
    %2917 = vmatpush1.xpose.msra.mxu0 0.0
    %2918 = vmatprep.subr.mxu0 0.0
    %2919 = vmatpush1.xpose.msra.mxu0 0.0
    %2920 = vmatprep.subr.mxu0 0.0
    %2921 = vmatpush1.xpose.msra.mxu0 0.0
    %2922 = vmatprep.subr.mxu0 0.0
    %2923 = vmatpush1.xpose.msra.mxu0 0.0
    %2924 = vmatprep.subr.mxu0 0.0
    %2925 = vmatpush1.xpose.msra.mxu0 0.0
    %2926 = vmatprep.subr.mxu0 0.0
    %2927 = vmatpush1.xpose.msra.mxu0 0.0
    %2928 = vmatprep.subr.mxu0 0.0
    %2929 = vmatpush1.xpose.msra.mxu0 0.0
    %2930 = vmatprep.subr.mxu0 0.0
    %2931 = vmatpush1.xpose.msra.mxu0 0.0
    %2932 = vmatprep.subr.mxu0 0.0
    %2933 = vmatpush1.xpose.msra.mxu0 0.0
    %2934 = vmatprep.subr.mxu0 0.0
    %2935 = vmatpush1.xpose.msra.mxu0 0.0
    %2936 = vmatprep.subr.mxu0 0.0
    %2937 = vmatpush1.xpose.msra.mxu0 0.0
    %2938 = vmatprep.subr.mxu0 0.0
    %2939 = vmatpush1.xpose.msra.mxu0 0.0
    %2940 = vmatprep.subr.mxu0 0.0
    %2941 = vmatpush1.xpose.msra.mxu0 0.0
    %2942 = vmatprep.subr.mxu0 0.0
    %2943 = vmatpush1.xpose.msra.mxu0 0.0
    %2944 = vmatprep.subr.mxu0 0.0
    %2945 = vmatpush1.xpose.msra.mxu0 0.0
    %2946 = vmatprep.subr.mxu0 0.0
    %2947 = vmatpush1.xpose.msra.mxu0 0.0
    %2948 = vmatprep.subr.mxu0 0.0
    %2949 = vmatpush1.xpose.msra.mxu0 0.0
    %2950 = vmatprep.subr.mxu0 0.0
    %2951 = vmatpush1.xpose.msra.mxu0 0.0
    %2952 = vmatprep.subr.mxu0 0.0
    %2953 = vmatpush1.xpose.msra.mxu0 0.0
    %2954 = vmatprep.subr.mxu0 0.0
    %2955 = vmatpush1.xpose.msra.mxu0 0.0
    %2956 = vmatprep.subr.mxu0 0.0
    %2957 = vmatpush1.xpose.msra.mxu0 0.0
    %2958 = vmatprep.subr.mxu0 0.0
    %2959 = vmatpush1.xpose.msra.mxu0 0.0
    %2960 = vmatprep.subr.mxu0 0.0
    %2961 = vmatpush1.xpose.msra.mxu0 0.0
    %2962 = vmatprep.subr.mxu0 0.0
    %2963 = vmatpush1.xpose.msra.mxu0 0.0
    %2964 = vmatprep.subr.mxu0 0.0
    %2965 = vmatpush1.xpose.msra.mxu0 0.0
    %2966 = vmatprep.subr.mxu0 0.0
    %2967 = vmatpush1.xpose.msra.mxu0 0.0
    %2968 = vmatprep.subr.mxu0 0.0
    %2969 = vmatpush1.xpose.msra.mxu0 0.0
    %2970 = vmatprep.subr.mxu0 0.0
    %2971 = vmatpush1.xpose.msra.mxu0 0.0
    %2972 = vmatprep.mubr.f32.mxu0 0.0
    %2973 = vmatmul.mubr.f32.gmra.mrb[0].mxu0 %v2900
    %v2974 = vpop.f32.mrb[0].mxu0
    %v2975 = vadd.f32 %v38, %v2974
    %v2976 = vpop.f32.mrb[0].mxu0
    %2977 = vmatprep.mubr.f32.mxu0 0.0
    %2978 = vmatmul.mubr.f32.gmra.mrb[0].mxu0 %v2902
    %v2979 = vpop.f32.mrb[0].mxu0
    %v2980 = vadd.f32 %v39, %v2979
    %v2981 = vpop.f32.mrb[0].mxu0
    %2982 = vdwg.mxu0
    %v2983 = vsel %vm377, %v2975, -inf
    %2984 = vmax.xlane.f32.xlu0 %v2983
    %v2985 = vpop.xlane.xlu0 %2984
    %v2986 = vsel %vm377, %v2980, -inf
    %2987 = vmax.xlane.f32.xlu0 %v2986
    %v2988 = vpop.xlane.xlu0 %2987
    %v2989 = vsub.f32 %v2975, %v2985
    %v2990 = vsub.f32 %v2980, %v2988
    %v2991 = vmul.f32 %v2989, 1.442695
    %v2992 = vpow.pop %v2991
    %v2993 = vmul.f32 %v2990, 1.442695
    %v2994 = vpow.pop %v2993
    %v2995 = vsel %vm377, %v2992, 0.0
    %2996 = vadd.xlane.f32.xlu0 %v2995
    %v2997 = vpop.xlane.xlu0 %2996
    %v2998 = vsel %vm377, %v2994, 0.0
    %2999 = vadd.xlane.f32.xlu0 %v2998
    %v3000 = vpop.xlane.xlu0 %2999
    %v3001 = vrcp.pop %v2997
    %v3002 = vrcp.pop %v3000
    %v3003 = vmul.f32 %v2992, %v3001
    %v3004 = vmul.f32 %v2994, %v3002
    %3005 = vrot.lane.b32.xlu0 %v2682, 56
    %v3006 = vpop.permute.xlu0 %3005
    %3007 = vrot.lane.b32.xlu0 %v2687, 56
    %v3008 = vpop.permute.xlu0 %3007
    %v3012 = vsel %vm377, %v3003, 0
    %v3015 = vsel %vm377, %v3004, 0
    %3017 = vmatprep.subr.mxu0 0.0
    %3018 = vmatpush1.msra.mxu0 %v3006
    %3019 = vmatprep.subr.mxu0 0.0
    %3020 = vmatpush1.msra.mxu0 %v3008
    %3021 = vmatprep.subr.mxu0 0.0
    %3022 = vmatpush1.msra.mxu0 0.0
    %3023 = vmatprep.subr.mxu0 0.0
    %3024 = vmatpush1.msra.mxu0 0.0
    %3025 = vmatprep.subr.mxu0 0.0
    %3026 = vmatpush1.msra.mxu0 0.0
    %3027 = vmatprep.subr.mxu0 0.0
    %3028 = vmatpush1.msra.mxu0 0.0
    %3029 = vmatprep.subr.mxu0 0.0
    %3030 = vmatpush1.msra.mxu0 0.0
    %3031 = vmatprep.subr.mxu0 0.0
    %3032 = vmatpush1.msra.mxu0 0.0
    %3033 = vmatprep.subr.mxu0 0.0
    %3034 = vmatpush1.msra.mxu0 0.0
    %3035 = vmatprep.subr.mxu0 0.0
    %3036 = vmatpush1.msra.mxu0 0.0
    %3037 = vmatprep.subr.mxu0 0.0
    %3038 = vmatpush1.msra.mxu0 0.0
    %3039 = vmatprep.subr.mxu0 0.0
    %3040 = vmatpush1.msra.mxu0 0.0
    %3041 = vmatprep.subr.mxu0 0.0
    %3042 = vmatpush1.msra.mxu0 0.0
    %3043 = vmatprep.subr.mxu0 0.0
    %3044 = vmatpush1.msra.mxu0 0.0
    %3045 = vmatprep.subr.mxu0 0.0
    %3046 = vmatpush1.msra.mxu0 0.0
    %3047 = vmatprep.subr.mxu0 0.0
    %3048 = vmatpush1.msra.mxu0 0.0
    %3049 = vmatprep.subr.mxu0 0.0
    %3050 = vmatpush1.msra.mxu0 0.0
    %3051 = vmatprep.subr.mxu0 0.0
    %3052 = vmatpush1.msra.mxu0 0.0
    %3053 = vmatprep.subr.mxu0 0.0
    %3054 = vmatpush1.msra.mxu0 0.0
    %3055 = vmatprep.subr.mxu0 0.0
    %3056 = vmatpush1.msra.mxu0 0.0
    %3057 = vmatprep.subr.mxu0 0.0
    %3058 = vmatpush1.msra.mxu0 0.0
    %3059 = vmatprep.subr.mxu0 0.0
    %3060 = vmatpush1.msra.mxu0 0.0
    %3061 = vmatprep.subr.mxu0 0.0
    %3062 = vmatpush1.msra.mxu0 0.0
    %3063 = vmatprep.subr.mxu0 0.0
    %3064 = vmatpush1.msra.mxu0 0.0
    %3065 = vmatprep.subr.mxu0 0.0
    %3066 = vmatpush1.msra.mxu0 0.0
    %3067 = vmatprep.subr.mxu0 0.0
    %3068 = vmatpush1.msra.mxu0 0.0
    %3069 = vmatprep.subr.mxu0 0.0
    %3070 = vmatpush1.msra.mxu0 0.0
    %3071 = vmatprep.subr.mxu0 0.0
    %3072 = vmatpush1.msra.mxu0 0.0
    %3073 = vmatprep.subr.mxu0 0.0
    %3074 = vmatpush1.msra.mxu0 0.0
    %3075 = vmatprep.subr.mxu0 0.0
    %3076 = vmatpush1.msra.mxu0 0.0
    %3077 = vmatprep.subr.mxu0 0.0
    %3078 = vmatpush1.msra.mxu0 0.0
    %3079 = vmatprep.subr.mxu0 0.0
    %3080 = vmatpush1.msra.mxu0 0.0
    %3081 = vmatprep.mubr.f32.mxu0 0.0
    %3082 = vmatmul.mubr.f32.gmra.mrb[0].mxu0 %v3012
    %v3083 = vpop.f32.mrb[0].mxu0
    %v3084 = vadd.f32 0.0, %v3083
    %v3085 = vpop.f32.mrb[0].mxu0
    %3086 = vmatprep.mubr.f32.mxu0 0.0
    %3087 = vmatmul.mubr.f32.gmra.mrb[0].mxu0 %v3015
    %v3088 = vpop.f32.mrb[0].mxu0
    %v3089 = vadd.f32 0.0, %v3088
    %v3090 = vpop.f32.mrb[0].mxu0
    %3091 = vdwg.mxu0
    %3092 = vrot.lane.b32.xlu0 %v2690, 112
    %v3093 = vpop.permute.xlu0 %3092
    %3094 = vrot.lane.b32.xlu0 %v2691, 112
    %v3095 = vpop.permute.xlu0 %3094
    %3096 = vrot.lane.b32.xlu0 %v2682, 80
    %v3097 = vpop.permute.xlu0 %3096
    %3098 = vrot.lane.b32.xlu0 %v2687, 80
    %v3099 = vpop.permute.xlu0 %3098
    %v3100 = vsel %vm291, %v3093, 0
    %v3102 = vsel %vm291, %v3095, 0
    %v3104 = vsel %vm291, %v3097, 0
    %v3106 = vsel %vm291, %v3099, 0
    %3108 = vmatprep.subr.mxu0 0.0
    %3109 = vmatpush1.xpose.msra.mxu0 %v3104
    %3110 = vmatprep.subr.mxu0 0.0
    %3111 = vmatpush1.xpose.msra.mxu0 %v3106
    %3112 = vmatprep.subr.mxu0 0.0
    %3113 = vmatpush1.xpose.msra.mxu0 0.0
    %3114 = vmatprep.subr.mxu0 0.0
    %3115 = vmatpush1.xpose.msra.mxu0 0.0
    %3116 = vmatprep.subr.mxu0 0.0
    %3117 = vmatpush1.xpose.msra.mxu0 0.0
    %3118 = vmatprep.subr.mxu0 0.0
    %3119 = vmatpush1.xpose.msra.mxu0 0.0
    %3120 = vmatprep.subr.mxu0 0.0
    %3121 = vmatpush1.xpose.msra.mxu0 0.0
    %3122 = vmatprep.subr.mxu0 0.0
    %3123 = vmatpush1.xpose.msra.mxu0 0.0
    %3124 = vmatprep.subr.mxu0 0.0
    %3125 = vmatpush1.xpose.msra.mxu0 0.0
    %3126 = vmatprep.subr.mxu0 0.0
    %3127 = vmatpush1.xpose.msra.mxu0 0.0
    %3128 = vmatprep.subr.mxu0 0.0
    %3129 = vmatpush1.xpose.msra.mxu0 0.0
    %3130 = vmatprep.subr.mxu0 0.0
    %3131 = vmatpush1.xpose.msra.mxu0 0.0
    %3132 = vmatprep.subr.mxu0 0.0
    %3133 = vmatpush1.xpose.msra.mxu0 0.0
    %3134 = vmatprep.subr.mxu0 0.0
    %3135 = vmatpush1.xpose.msra.mxu0 0.0
    %3136 = vmatprep.subr.mxu0 0.0
    %3137 = vmatpush1.xpose.msra.mxu0 0.0
    %3138 = vmatprep.subr.mxu0 0.0
    %3139 = vmatpush1.xpose.msra.mxu0 0.0
    %3140 = vmatprep.subr.mxu0 0.0
    %3141 = vmatpush1.xpose.msra.mxu0 0.0
    %3142 = vmatprep.subr.mxu0 0.0
    %3143 = vmatpush1.xpose.msra.mxu0 0.0
    %3144 = vmatprep.subr.mxu0 0.0
    %3145 = vmatpush1.xpose.msra.mxu0 0.0
    %3146 = vmatprep.subr.mxu0 0.0
    %3147 = vmatpush1.xpose.msra.mxu0 0.0
    %3148 = vmatprep.subr.mxu0 0.0
    %3149 = vmatpush1.xpose.msra.mxu0 0.0
    %3150 = vmatprep.subr.mxu0 0.0
    %3151 = vmatpush1.xpose.msra.mxu0 0.0
    %3152 = vmatprep.subr.mxu0 0.0
    %3153 = vmatpush1.xpose.msra.mxu0 0.0
    %3154 = vmatprep.subr.mxu0 0.0
    %3155 = vmatpush1.xpose.msra.mxu0 0.0
    %3156 = vmatprep.subr.mxu0 0.0
    %3157 = vmatpush1.xpose.msra.mxu0 0.0
    %3158 = vmatprep.subr.mxu0 0.0
    %3159 = vmatpush1.xpose.msra.mxu0 0.0
    %3160 = vmatprep.subr.mxu0 0.0
    %3161 = vmatpush1.xpose.msra.mxu0 0.0
    %3162 = vmatprep.subr.mxu0 0.0
    %3163 = vmatpush1.xpose.msra.mxu0 0.0
    %3164 = vmatprep.subr.mxu0 0.0
    %3165 = vmatpush1.xpose.msra.mxu0 0.0
    %3166 = vmatprep.subr.mxu0 0.0
    %3167 = vmatpush1.xpose.msra.mxu0 0.0
    %3168 = vmatprep.subr.mxu0 0.0
    %3169 = vmatpush1.xpose.msra.mxu0 0.0
    %3170 = vmatprep.subr.mxu0 0.0
    %3171 = vmatpush1.xpose.msra.mxu0 0.0
    %3172 = vmatprep.mubr.f32.mxu0 0.0
    %3173 = vmatmul.mubr.f32.gmra.mrb[0].mxu0 %v3100
    %v3174 = vpop.f32.mrb[0].mxu0
    %v3175 = vadd.f32 %v38, %v3174
    %v3176 = vpop.f32.mrb[0].mxu0
    %3177 = vmatprep.mubr.f32.mxu0 0.0
    %3178 = vmatmul.mubr.f32.gmra.mrb[0].mxu0 %v3102
    %v3179 = vpop.f32.mrb[0].mxu0
    %v3180 = vadd.f32 %v39, %v3179
    %v3181 = vpop.f32.mrb[0].mxu0
    %3182 = vdwg.mxu0
    %v3183 = vsel %vm377, %v3175, -inf
    %3184 = vmax.xlane.f32.xlu0 %v3183
    %v3185 = vpop.xlane.xlu0 %3184
    %v3186 = vsel %vm377, %v3180, -inf
    %3187 = vmax.xlane.f32.xlu0 %v3186
    %v3188 = vpop.xlane.xlu0 %3187
    %v3189 = vsub.f32 %v3175, %v3185
    %v3190 = vsub.f32 %v3180, %v3188
    %v3191 = vmul.f32 %v3189, 1.442695
    %v3192 = vpow.pop %v3191
    %v3193 = vmul.f32 %v3190, 1.442695
    %v3194 = vpow.pop %v3193
    %v3195 = vsel %vm377, %v3192, 0.0
    %3196 = vadd.xlane.f32.xlu0 %v3195
    %v3197 = vpop.xlane.xlu0 %3196
    %v3198 = vsel %vm377, %v3194, 0.0
    %3199 = vadd.xlane.f32.xlu0 %v3198
    %v3200 = vpop.xlane.xlu0 %3199
    %v3201 = vrcp.pop %v3197
    %v3202 = vrcp.pop %v3200
    %v3203 = vmul.f32 %v3192, %v3201
    %v3204 = vmul.f32 %v3194, %v3202
    %3205 = vrot.lane.b32.xlu0 %v2682, 48
    %v3206 = vpop.permute.xlu0 %3205
    %3207 = vrot.lane.b32.xlu0 %v2687, 48
    %v3208 = vpop.permute.xlu0 %3207
    %v3212 = vsel %vm377, %v3203, 0
    %v3215 = vsel %vm377, %v3204, 0
    %3217 = vmatprep.subr.mxu0 0.0
    %3218 = vmatpush1.msra.mxu0 %v3206
    %3219 = vmatprep.subr.mxu0 0.0
    %3220 = vmatpush1.msra.mxu0 %v3208
    %3221 = vmatprep.subr.mxu0 0.0
    %3222 = vmatpush1.msra.mxu0 0.0
    %3223 = vmatprep.subr.mxu0 0.0
    %3224 = vmatpush1.msra.mxu0 0.0
    %3225 = vmatprep.subr.mxu0 0.0
    %3226 = vmatpush1.msra.mxu0 0.0
    %3227 = vmatprep.subr.mxu0 0.0
    %3228 = vmatpush1.msra.mxu0 0.0
    %3229 = vmatprep.subr.mxu0 0.0
    %3230 = vmatpush1.msra.mxu0 0.0
    %3231 = vmatprep.subr.mxu0 0.0
    %3232 = vmatpush1.msra.mxu0 0.0
    %3233 = vmatprep.subr.mxu0 0.0
    %3234 = vmatpush1.msra.mxu0 0.0
    %3235 = vmatprep.subr.mxu0 0.0
    %3236 = vmatpush1.msra.mxu0 0.0
    %3237 = vmatprep.subr.mxu0 0.0
    %3238 = vmatpush1.msra.mxu0 0.0
    %3239 = vmatprep.subr.mxu0 0.0
    %3240 = vmatpush1.msra.mxu0 0.0
    %3241 = vmatprep.subr.mxu0 0.0
    %3242 = vmatpush1.msra.mxu0 0.0
    %3243 = vmatprep.subr.mxu0 0.0
    %3244 = vmatpush1.msra.mxu0 0.0
    %3245 = vmatprep.subr.mxu0 0.0
    %3246 = vmatpush1.msra.mxu0 0.0
    %3247 = vmatprep.subr.mxu0 0.0
    %3248 = vmatpush1.msra.mxu0 0.0
    %3249 = vmatprep.subr.mxu0 0.0
    %3250 = vmatpush1.msra.mxu0 0.0
    %3251 = vmatprep.subr.mxu0 0.0
    %3252 = vmatpush1.msra.mxu0 0.0
    %3253 = vmatprep.subr.mxu0 0.0
    %3254 = vmatpush1.msra.mxu0 0.0
    %3255 = vmatprep.subr.mxu0 0.0
    %3256 = vmatpush1.msra.mxu0 0.0
    %3257 = vmatprep.subr.mxu0 0.0
    %3258 = vmatpush1.msra.mxu0 0.0
    %3259 = vmatprep.subr.mxu0 0.0
    %3260 = vmatpush1.msra.mxu0 0.0
    %3261 = vmatprep.subr.mxu0 0.0
    %3262 = vmatpush1.msra.mxu0 0.0
    %3263 = vmatprep.subr.mxu0 0.0
    %3264 = vmatpush1.msra.mxu0 0.0
    %3265 = vmatprep.subr.mxu0 0.0
    %3266 = vmatpush1.msra.mxu0 0.0
    %3267 = vmatprep.subr.mxu0 0.0
    %3268 = vmatpush1.msra.mxu0 0.0
    %3269 = vmatprep.subr.mxu0 0.0
    %3270 = vmatpush1.msra.mxu0 0.0
    %3271 = vmatprep.subr.mxu0 0.0
    %3272 = vmatpush1.msra.mxu0 0.0
    %3273 = vmatprep.subr.mxu0 0.0
    %3274 = vmatpush1.msra.mxu0 0.0
    %3275 = vmatprep.subr.mxu0 0.0
    %3276 = vmatpush1.msra.mxu0 0.0
    %3277 = vmatprep.subr.mxu0 0.0
    %3278 = vmatpush1.msra.mxu0 0.0
    %3279 = vmatprep.subr.mxu0 0.0
    %3280 = vmatpush1.msra.mxu0 0.0
    %3281 = vmatprep.mubr.f32.mxu0 0.0
    %3282 = vmatmul.mubr.f32.gmra.mrb[0].mxu0 %v3212
    %v3283 = vpop.f32.mrb[0].mxu0
    %v3284 = vadd.f32 0.0, %v3283
    %v3285 = vpop.f32.mrb[0].mxu0
    %3286 = vmatprep.mubr.f32.mxu0 0.0
    %3287 = vmatmul.mubr.f32.gmra.mrb[0].mxu0 %v3215
    %v3288 = vpop.f32.mrb[0].mxu0
    %v3289 = vadd.f32 0.0, %v3288
    %v3290 = vpop.f32.mrb[0].mxu0
    %3291 = vdwg.mxu0
    %3292 = vrot.lane.b32.xlu0 %v2690, 104
    %v3293 = vpop.permute.xlu0 %3292
    %3294 = vrot.lane.b32.xlu0 %v2691, 104
    %v3295 = vpop.permute.xlu0 %3294
    %3296 = vrot.lane.b32.xlu0 %v2682, 72
    %v3297 = vpop.permute.xlu0 %3296
    %3298 = vrot.lane.b32.xlu0 %v2687, 72
    %v3299 = vpop.permute.xlu0 %3298
    %v3300 = vsel %vm291, %v3293, 0
    %v3302 = vsel %vm291, %v3295, 0
    %v3304 = vsel %vm291, %v3297, 0
    %v3306 = vsel %vm291, %v3299, 0
    %3308 = vmatprep.subr.mxu0 0.0
    %3309 = vmatpush1.xpose.msra.mxu0 %v3304
    %3310 = vmatprep.subr.mxu0 0.0
    %3311 = vmatpush1.xpose.msra.mxu0 %v3306
    %3312 = vmatprep.subr.mxu0 0.0
    %3313 = vmatpush1.xpose.msra.mxu0 0.0
    %3314 = vmatprep.subr.mxu0 0.0
    %3315 = vmatpush1.xpose.msra.mxu0 0.0
    %3316 = vmatprep.subr.mxu0 0.0
    %3317 = vmatpush1.xpose.msra.mxu0 0.0
    %3318 = vmatprep.subr.mxu0 0.0
    %3319 = vmatpush1.xpose.msra.mxu0 0.0
    %3320 = vmatprep.subr.mxu0 0.0
    %3321 = vmatpush1.xpose.msra.mxu0 0.0
    %3322 = vmatprep.subr.mxu0 0.0
    %3323 = vmatpush1.xpose.msra.mxu0 0.0
    %3324 = vmatprep.subr.mxu0 0.0
    %3325 = vmatpush1.xpose.msra.mxu0 0.0
    %3326 = vmatprep.subr.mxu0 0.0
    %3327 = vmatpush1.xpose.msra.mxu0 0.0
    %3328 = vmatprep.subr.mxu0 0.0
    %3329 = vmatpush1.xpose.msra.mxu0 0.0
    %3330 = vmatprep.subr.mxu0 0.0
    %3331 = vmatpush1.xpose.msra.mxu0 0.0
    %3332 = vmatprep.subr.mxu0 0.0
    %3333 = vmatpush1.xpose.msra.mxu0 0.0
    %3334 = vmatprep.subr.mxu0 0.0
    %3335 = vmatpush1.xpose.msra.mxu0 0.0
    %3336 = vmatprep.subr.mxu0 0.0
    %3337 = vmatpush1.xpose.msra.mxu0 0.0
    %3338 = vmatprep.subr.mxu0 0.0
    %3339 = vmatpush1.xpose.msra.mxu0 0.0
    %3340 = vmatprep.subr.mxu0 0.0
    %3341 = vmatpush1.xpose.msra.mxu0 0.0
    %3342 = vmatprep.subr.mxu0 0.0
    %3343 = vmatpush1.xpose.msra.mxu0 0.0
    %3344 = vmatprep.subr.mxu0 0.0
    %3345 = vmatpush1.xpose.msra.mxu0 0.0
    %3346 = vmatprep.subr.mxu0 0.0
    %3347 = vmatpush1.xpose.msra.mxu0 0.0
    %3348 = vmatprep.subr.mxu0 0.0
    %3349 = vmatpush1.xpose.msra.mxu0 0.0
    %3350 = vmatprep.subr.mxu0 0.0
    %3351 = vmatpush1.xpose.msra.mxu0 0.0
    %3352 = vmatprep.subr.mxu0 0.0
    %3353 = vmatpush1.xpose.msra.mxu0 0.0
    %3354 = vmatprep.subr.mxu0 0.0
    %3355 = vmatpush1.xpose.msra.mxu0 0.0
    %3356 = vmatprep.subr.mxu0 0.0
    %3357 = vmatpush1.xpose.msra.mxu0 0.0
    %3358 = vmatprep.subr.mxu0 0.0
    %3359 = vmatpush1.xpose.msra.mxu0 0.0
    %3360 = vmatprep.subr.mxu0 0.0
    %3361 = vmatpush1.xpose.msra.mxu0 0.0
    %3362 = vmatprep.subr.mxu0 0.0
    %3363 = vmatpush1.xpose.msra.mxu0 0.0
    %3364 = vmatprep.subr.mxu0 0.0
    %3365 = vmatpush1.xpose.msra.mxu0 0.0
    %3366 = vmatprep.subr.mxu0 0.0
    %3367 = vmatpush1.xpose.msra.mxu0 0.0
    %3368 = vmatprep.subr.mxu0 0.0
    %3369 = vmatpush1.xpose.msra.mxu0 0.0
    %3370 = vmatprep.subr.mxu0 0.0
    %3371 = vmatpush1.xpose.msra.mxu0 0.0
    %3372 = vmatprep.mubr.f32.mxu0 0.0
    %3373 = vmatmul.mubr.f32.gmra.mrb[0].mxu0 %v3300
    %v3374 = vpop.f32.mrb[0].mxu0
    %v3375 = vadd.f32 %v38, %v3374
    %v3376 = vpop.f32.mrb[0].mxu0
    %3377 = vmatprep.mubr.f32.mxu0 0.0
    %3378 = vmatmul.mubr.f32.gmra.mrb[0].mxu0 %v3302
    %v3379 = vpop.f32.mrb[0].mxu0
    %v3380 = vadd.f32 %v39, %v3379
    %v3381 = vpop.f32.mrb[0].mxu0
    %3382 = vdwg.mxu0
    %v3383 = vsel %vm377, %v3375, -inf
    %3384 = vmax.xlane.f32.xlu0 %v3383
    %v3385 = vpop.xlane.xlu0 %3384
    %v3386 = vsel %vm377, %v3380, -inf
    %3387 = vmax.xlane.f32.xlu0 %v3386
    %v3388 = vpop.xlane.xlu0 %3387
    %v3389 = vsub.f32 %v3375, %v3385
    %v3390 = vsub.f32 %v3380, %v3388
    %v3391 = vmul.f32 %v3389, 1.442695
    %v3392 = vpow.pop %v3391
    %v3393 = vmul.f32 %v3390, 1.442695
    %v3394 = vpow.pop %v3393
    %v3395 = vsel %vm377, %v3392, 0.0
    %3396 = vadd.xlane.f32.xlu0 %v3395
    %v3397 = vpop.xlane.xlu0 %3396
    %v3398 = vsel %vm377, %v3394, 0.0
    %3399 = vadd.xlane.f32.xlu0 %v3398
    %v3400 = vpop.xlane.xlu0 %3399
    %v3401 = vrcp.pop %v3397
    %v3402 = vrcp.pop %v3400
    %v3403 = vmul.f32 %v3392, %v3401
    %v3404 = vmul.f32 %v3394, %v3402
    %3405 = vrot.lane.b32.xlu0 %v2682, 40
    %v3406 = vpop.permute.xlu0 %3405
    %3407 = vrot.lane.b32.xlu0 %v2687, 40
    %v3408 = vpop.permute.xlu0 %3407
    %v3412 = vsel %vm377, %v3403, 0
    %v3415 = vsel %vm377, %v3404, 0
    %3417 = vmatprep.subr.mxu0 0.0
    %3418 = vmatpush1.msra.mxu0 %v3406
    %3419 = vmatprep.subr.mxu0 0.0
    %3420 = vmatpush1.msra.mxu0 %v3408
    %3421 = vmatprep.subr.mxu0 0.0
    %3422 = vmatpush1.msra.mxu0 0.0
    %3423 = vmatprep.subr.mxu0 0.0
    %3424 = vmatpush1.msra.mxu0 0.0
    %3425 = vmatprep.subr.mxu0 0.0
    %3426 = vmatpush1.msra.mxu0 0.0
    %3427 = vmatprep.subr.mxu0 0.0
    %3428 = vmatpush1.msra.mxu0 0.0
    %3429 = vmatprep.subr.mxu0 0.0
    %3430 = vmatpush1.msra.mxu0 0.0
    %3431 = vmatprep.subr.mxu0 0.0
    %3432 = vmatpush1.msra.mxu0 0.0
    %3433 = vmatprep.subr.mxu0 0.0
    %3434 = vmatpush1.msra.mxu0 0.0
    %3435 = vmatprep.subr.mxu0 0.0
    %3436 = vmatpush1.msra.mxu0 0.0
    %3437 = vmatprep.subr.mxu0 0.0
    %3438 = vmatpush1.msra.mxu0 0.0
    %3439 = vmatprep.subr.mxu0 0.0
    %3440 = vmatpush1.msra.mxu0 0.0
    %3441 = vmatprep.subr.mxu0 0.0
    %3442 = vmatpush1.msra.mxu0 0.0
    %3443 = vmatprep.subr.mxu0 0.0
    %3444 = vmatpush1.msra.mxu0 0.0
    %3445 = vmatprep.subr.mxu0 0.0
    %3446 = vmatpush1.msra.mxu0 0.0
    %3447 = vmatprep.subr.mxu0 0.0
    %3448 = vmatpush1.msra.mxu0 0.0
    %3449 = vmatprep.subr.mxu0 0.0
    %3450 = vmatpush1.msra.mxu0 0.0
    %3451 = vmatprep.subr.mxu0 0.0
    %3452 = vmatpush1.msra.mxu0 0.0
    %3453 = vmatprep.subr.mxu0 0.0
    %3454 = vmatpush1.msra.mxu0 0.0
    %3455 = vmatprep.subr.mxu0 0.0
    %3456 = vmatpush1.msra.mxu0 0.0
    %3457 = vmatprep.subr.mxu0 0.0
    %3458 = vmatpush1.msra.mxu0 0.0
    %3459 = vmatprep.subr.mxu0 0.0
    %3460 = vmatpush1.msra.mxu0 0.0
    %3461 = vmatprep.subr.mxu0 0.0
    %3462 = vmatpush1.msra.mxu0 0.0
    %3463 = vmatprep.subr.mxu0 0.0
    %3464 = vmatpush1.msra.mxu0 0.0
    %3465 = vmatprep.subr.mxu0 0.0
    %3466 = vmatpush1.msra.mxu0 0.0
    %3467 = vmatprep.subr.mxu0 0.0
    %3468 = vmatpush1.msra.mxu0 0.0
    %3469 = vmatprep.subr.mxu0 0.0
    %3470 = vmatpush1.msra.mxu0 0.0
    %3471 = vmatprep.subr.mxu0 0.0
    %3472 = vmatpush1.msra.mxu0 0.0
    %3473 = vmatprep.subr.mxu0 0.0
    %3474 = vmatpush1.msra.mxu0 0.0
    %3475 = vmatprep.subr.mxu0 0.0
    %3476 = vmatpush1.msra.mxu0 0.0
    %3477 = vmatprep.subr.mxu0 0.0
    %3478 = vmatpush1.msra.mxu0 0.0
    %3479 = vmatprep.subr.mxu0 0.0
    %3480 = vmatpush1.msra.mxu0 0.0
    %3481 = vmatprep.mubr.f32.mxu0 0.0
    %3482 = vmatmul.mubr.f32.gmra.mrb[0].mxu0 %v3412
    %v3483 = vpop.f32.mrb[0].mxu0
    %v3484 = vadd.f32 0.0, %v3483
    %v3485 = vpop.f32.mrb[0].mxu0
    %3486 = vmatprep.mubr.f32.mxu0 0.0
    %3487 = vmatmul.mubr.f32.gmra.mrb[0].mxu0 %v3415
    %v3488 = vpop.f32.mrb[0].mxu0
    %v3489 = vadd.f32 0.0, %v3488
    %v3490 = vpop.f32.mrb[0].mxu0
    %3491 = vdwg.mxu0
    %3494 = vrot.lane.b32.xlu0 %v3084, 8
    %v3495 = vpop.permute.xlu0 %3494
    %3496 = vrot.lane.b32.xlu0 %v3089, 8
    %v3497 = vpop.permute.xlu0 %3496
    %3502 = vrot.lane.b32.xlu0 %v3284, 16
    %v3503 = vpop.permute.xlu0 %3502
    %3504 = vrot.lane.b32.xlu0 %v3289, 16
    %v3505 = vpop.permute.xlu0 %3504
    %3510 = vrot.lane.b32.xlu0 %v3484, 24
    %v3511 = vpop.permute.xlu0 %3510
    %3512 = vrot.lane.b32.xlu0 %v3489, 24
    %v3513 = vpop.permute.xlu0 %3512
    %v3516 = vsel %vm291, %v2884, %v3495
    %v3517 = vsel %vm291, %v2889, %v3497
    %v3518 = vsel %vm377, %v3516, %v3503
    %v3519 = vsel %vm377, %v3517, %v3505
    %v3520 = vsel %vm1115, %v3518, %v3511
    %v3521 = vsel %vm1115, %v3519, %v3513
    %3526 = vrot.lane.b32.xlu0 %v2600, 32
    %v3527 = vpop.permute.xlu0 %3526
    %3528 = vrot.lane.b32.xlu0 %v2601, 32
    %v3529 = vpop.permute.xlu0 %3528
    %3530 = vrot.lane.b32.xlu0 %v2602, 32
    %v3531 = vpop.permute.xlu0 %3530
    %3532 = vrot.lane.b32.xlu0 %v2603, 32
    %v3533 = vpop.permute.xlu0 %3532
    %3539 = vrot.lane.b32.xlu0 %v2608, 32
    %v3540 = vpop.permute.xlu0 %3539
    %v3543 = vsel %vm55, %v3520, 0
    %v3546 = vsel %vm55, %v3521, 0
    %3548 = vmatprep.subr.mxu0 0.0
    %3549 = vmatpush1.msra.mxu0 %v3527
    %3550 = vmatprep.subr.mxu0 0.0
    %3551 = vmatpush1.msra.mxu0 %v3529
    %3552 = vmatprep.subr.mxu0 0.0
    %3553 = vmatpush1.msra.mxu0 %v3531
    %3554 = vmatprep.subr.mxu0 0.0
    %3555 = vmatpush1.msra.mxu0 %v3533
    %3556 = vmatprep.subr.mxu0 0.0
    %3557 = vmatpush1.msra.mxu0 0.0
    %3558 = vmatprep.subr.mxu0 0.0
    %3559 = vmatpush1.msra.mxu0 0.0
    %3560 = vmatprep.subr.mxu0 0.0
    %3561 = vmatpush1.msra.mxu0 0.0
    %3562 = vmatprep.subr.mxu0 0.0
    %3563 = vmatpush1.msra.mxu0 0.0
    %3564 = vmatprep.subr.mxu0 0.0
    %3565 = vmatpush1.msra.mxu0 0.0
    %3566 = vmatprep.subr.mxu0 0.0
    %3567 = vmatpush1.msra.mxu0 0.0
    %3568 = vmatprep.subr.mxu0 0.0
    %3569 = vmatpush1.msra.mxu0 0.0
    %3570 = vmatprep.subr.mxu0 0.0
    %3571 = vmatpush1.msra.mxu0 0.0
    %3572 = vmatprep.subr.mxu0 0.0
    %3573 = vmatpush1.msra.mxu0 0.0
    %3574 = vmatprep.subr.mxu0 0.0
    %3575 = vmatpush1.msra.mxu0 0.0
    %3576 = vmatprep.subr.mxu0 0.0
    %3577 = vmatpush1.msra.mxu0 0.0
    %3578 = vmatprep.subr.mxu0 0.0
    %3579 = vmatpush1.msra.mxu0 0.0
    %3580 = vmatprep.subr.mxu0 0.0
    %3581 = vmatpush1.msra.mxu0 0.0
    %3582 = vmatprep.subr.mxu0 0.0
    %3583 = vmatpush1.msra.mxu0 0.0
    %3584 = vmatprep.subr.mxu0 0.0
    %3585 = vmatpush1.msra.mxu0 0.0
    %3586 = vmatprep.subr.mxu0 0.0
    %3587 = vmatpush1.msra.mxu0 0.0
    %3588 = vmatprep.subr.mxu0 0.0
    %3589 = vmatpush1.msra.mxu0 0.0
    %3590 = vmatprep.subr.mxu0 0.0
    %3591 = vmatpush1.msra.mxu0 0.0
    %3592 = vmatprep.subr.mxu0 0.0
    %3593 = vmatpush1.msra.mxu0 0.0
    %3594 = vmatprep.subr.mxu0 0.0
    %3595 = vmatpush1.msra.mxu0 0.0
    %3596 = vmatprep.subr.mxu0 0.0
    %3597 = vmatpush1.msra.mxu0 0.0
    %3598 = vmatprep.subr.mxu0 0.0
    %3599 = vmatpush1.msra.mxu0 0.0
    %3600 = vmatprep.subr.mxu0 0.0
    %3601 = vmatpush1.msra.mxu0 0.0
    %3602 = vmatprep.subr.mxu0 0.0
    %3603 = vmatpush1.msra.mxu0 0.0
    %3604 = vmatprep.subr.mxu0 0.0
    %3605 = vmatpush1.msra.mxu0 0.0
    %3606 = vmatprep.subr.mxu0 0.0
    %3607 = vmatpush1.msra.mxu0 0.0
    %3608 = vmatprep.subr.mxu0 0.0
    %3609 = vmatpush1.msra.mxu0 0.0
    %3610 = vmatprep.subr.mxu0 0.0
    %3611 = vmatpush1.msra.mxu0 0.0
    %3612 = vmatprep.mubr.f32.mxu0 0.0
    %3613 = vmatmul.mubr.f32.gmra.mrb[0].mxu0 %v3543
    %v3614 = vpop.f32.mrb[0].mxu0
    %v3615 = vadd.f32 %v3540, %v3614
    %v3616 = vpop.f32.mrb[0].mxu0
    %3617 = vmatprep.mubr.f32.mxu0 0.0
    %3618 = vmatmul.mubr.f32.gmra.mrb[0].mxu0 %v3546
    %v3619 = vpop.f32.mrb[0].mxu0
    %v3620 = vadd.f32 %v3540, %v3619
    %v3621 = vpop.f32.mrb[0].mxu0
    %3622 = vdwg.mxu0
    %v3623 = vadd.f32 %v2543, %v3615
    %v3624 = vadd.f32 %v2544, %v3620
    %v3625 = vld [vmem:[%s9 + $0x8] sm:$0x1]
    %v3626 = vld [vmem:[%s9 + $0x9] sm:$0x1]
    %v3627 = vsel %vm55, %v3623, 0.0
    %3628 = vadd.xlane.f32.xlu0 %v3627
    %v3629 = vpop.xlane.xlu0 %3628
    %v3630 = vsel %vm55, %v3624, 0.0
    %3631 = vadd.xlane.f32.xlu0 %v3630
    %v3632 = vpop.xlane.xlu0 %3631
    %v3633 = vmul.f32 %v3629, %v145
    %v3634 = vmul.f32 %v3632, %v145
    %v3635 = vsub.f32 %v3623, %v3633
    %v3636 = vsub.f32 %v3624, %v3634
    %v3637 = vmul.f32 %v3635, %v3635
    %v3638 = vmul.f32 %v3636, %v3636
    %v3639 = vsel %vm55, %v3637, 0.0
    %3640 = vadd.xlane.f32.xlu0 %v3639
    %v3641 = vpop.xlane.xlu0 %3640
    %v3642 = vsel %vm55, %v3638, 0.0
    %3643 = vadd.xlane.f32.xlu0 %v3642
    %v3644 = vpop.xlane.xlu0 %3643
    %v3645 = vmul.f32 %v3641, %v158
    %v3646 = vmul.f32 %v3644, %v158
    %v3647 = vlaneseq
    %v3648 = vshrl.u32 %v3647, 7
    %v3649 = vsub.s32 0, %v3648
    %v3650 = vrot.slane %v3625, %v3649
    %v3651 = vmul.f32 %v3650, %v3635
    %v3652 = vmul.f32 %v3650, %v3636
    %v3653 = vrsqrt.pop %v3645
    %v3654 = vmul.f32 %v3645, %v3653
    %vm3655 = vcmp.eq.f32.partialorder %v3645, inf
    %v3656 = vsel %vm3655, %v3645, %v3654
    %vm3657 = vcmp.eq.f32.partialorder %v3645, 0.0
    %v3658 = vand.u32 %v3645, 2147483648
    %v3659 = vsel %vm3657, %v3658, %v3656
    %v3660 = vrsqrt.pop %v3646
    %v3661 = vmul.f32 %v3646, %v3660
    %vm3662 = vcmp.eq.f32.partialorder %v3646, inf
    %v3663 = vsel %vm3662, %v3646, %v3661
    %vm3664 = vcmp.eq.f32.partialorder %v3646, 0.0
    %v3665 = vand.u32 %v3646, 2147483648
    %v3666 = vsel %vm3664, %v3665, %v3663
    %v3667 = vadd.f32 %v3659, 1e-06
    %v3668 = vadd.f32 %v3666, 1e-06
    %v3669 = vrcp.pop %v3667
    %v3670 = vmul.f32 %v3651, %v3669
    %v3671 = vrcp.pop %v3668
    %v3672 = vmul.f32 %v3652, %v3671
    %v3673 = vlaneseq
    %v3674 = vshrl.u32 %v3673, 7
    %v3675 = vsub.s32 0, %v3674
    %v3676 = vrot.slane %v3626, %v3675
    %v3677 = vadd.f32 %v3670, %v3676
    %v3678 = vadd.f32 %v3672, %v3676
    %v3679 = vld [vmem:[%s2599 + $0x8] sm:$0xff]
    %v3680 = vld [vmem:[%s2599 + $0x18] sm:$0xff]
    %v3681 = vld [vmem:[%s2599 + $0x28] sm:$0xff]
    %v3682 = vld [vmem:[%s2599 + $0x38] sm:$0xff]
    %v3683 = vld [vmem:[%s8 + $0x3] sm:$0x1]
    %v3684 = vlaneseq
    %v3685 = vshrl.u32 %v3684, 7
    %v3686 = vsub.s32 0, %v3685
    %v3687 = vrot.slane %v3683, %v3686
    %v3689 = vsel %vm55, %v3677, 0
    %v3692 = vsel %vm55, %v3678, 0
    %3694 = vmatprep.subr.mxu0 0.0
    %3695 = vmatpush1.msra.mxu0 %v3679
    %3696 = vmatprep.subr.mxu0 0.0
    %3697 = vmatpush1.msra.mxu0 %v3680
    %3698 = vmatprep.subr.mxu0 0.0
    %3699 = vmatpush1.msra.mxu0 %v3681
    %3700 = vmatprep.subr.mxu0 0.0
    %3701 = vmatpush1.msra.mxu0 %v3682
    %3702 = vmatprep.subr.mxu0 0.0
    %3703 = vmatpush1.msra.mxu0 0.0
    %3704 = vmatprep.subr.mxu0 0.0
    %3705 = vmatpush1.msra.mxu0 0.0
    %3706 = vmatprep.subr.mxu0 0.0
    %3707 = vmatpush1.msra.mxu0 0.0
    %3708 = vmatprep.subr.mxu0 0.0
    %3709 = vmatpush1.msra.mxu0 0.0
    %3710 = vmatprep.subr.mxu0 0.0
    %3711 = vmatpush1.msra.mxu0 0.0
    %3712 = vmatprep.subr.mxu0 0.0
    %3713 = vmatpush1.msra.mxu0 0.0
    %3714 = vmatprep.subr.mxu0 0.0
    %3715 = vmatpush1.msra.mxu0 0.0
    %3716 = vmatprep.subr.mxu0 0.0
    %3717 = vmatpush1.msra.mxu0 0.0
    %3718 = vmatprep.subr.mxu0 0.0
    %3719 = vmatpush1.msra.mxu0 0.0
    %3720 = vmatprep.subr.mxu0 0.0
    %3721 = vmatpush1.msra.mxu0 0.0
    %3722 = vmatprep.subr.mxu0 0.0
    %3723 = vmatpush1.msra.mxu0 0.0
    %3724 = vmatprep.subr.mxu0 0.0
    %3725 = vmatpush1.msra.mxu0 0.0
    %3726 = vmatprep.subr.mxu0 0.0
    %3727 = vmatpush1.msra.mxu0 0.0
    %3728 = vmatprep.subr.mxu0 0.0
    %3729 = vmatpush1.msra.mxu0 0.0
    %3730 = vmatprep.subr.mxu0 0.0
    %3731 = vmatpush1.msra.mxu0 0.0
    %3732 = vmatprep.subr.mxu0 0.0
    %3733 = vmatpush1.msra.mxu0 0.0
    %3734 = vmatprep.subr.mxu0 0.0
    %3735 = vmatpush1.msra.mxu0 0.0
    %3736 = vmatprep.subr.mxu0 0.0
    %3737 = vmatpush1.msra.mxu0 0.0
    %3738 = vmatprep.subr.mxu0 0.0
    %3739 = vmatpush1.msra.mxu0 0.0
    %3740 = vmatprep.subr.mxu0 0.0
    %3741 = vmatpush1.msra.mxu0 0.0
    %3742 = vmatprep.subr.mxu0 0.0
    %3743 = vmatpush1.msra.mxu0 0.0
    %3744 = vmatprep.subr.mxu0 0.0
    %3745 = vmatpush1.msra.mxu0 0.0
    %3746 = vmatprep.subr.mxu0 0.0
    %3747 = vmatpush1.msra.mxu0 0.0
    %3748 = vmatprep.subr.mxu0 0.0
    %3749 = vmatpush1.msra.mxu0 0.0
    %3750 = vmatprep.subr.mxu0 0.0
    %3751 = vmatpush1.msra.mxu0 0.0
    %3752 = vmatprep.subr.mxu0 0.0
    %3753 = vmatpush1.msra.mxu0 0.0
    %3754 = vmatprep.subr.mxu0 0.0
    %3755 = vmatpush1.msra.mxu0 0.0
    %3756 = vmatprep.subr.mxu0 0.0
    %3757 = vmatpush1.msra.mxu0 0.0
    %3758 = vmatprep.mubr.f32.mxu0 0.0
    %3759 = vmatmul.mubr.f32.gmra.mrb[0].mxu0 %v3689
    %v3760 = vpop.f32.mrb[0].mxu0
    %v3761 = vadd.f32 %v3687, %v3760
    %v3762 = vpop.f32.mrb[0].mxu0
    %3763 = vmatprep.mubr.f32.mxu0 0.0
    %3764 = vmatmul.mubr.f32.gmra.mrb[0].mxu0 %v3692
    %v3765 = vpop.f32.mrb[0].mxu0
    %v3766 = vadd.f32 %v3687, %v3765
    %v3767 = vpop.f32.mrb[0].mxu0
    %3768 = vdwg.mxu0
    %v3769 = vmul.f32 %v3761, 0.35355338
    %v3770 = vmul.f32 %v3766, 0.35355338
    %3771 = vrot.lane.b32.xlu0 %v129, 64
    %v3772 = vpop.permute.xlu0 %3771
    %3773 = vrot.lane.b32.xlu0 %v134, 64
    %v3774 = vpop.permute.xlu0 %3773
    %v3776 = vsel %vm291, %v3769, 0
    %v3779 = vsel %vm291, %v3770, 0
    %v3781 = vsel %vm291, %v3772, 0
    %v3783 = vsel %vm291, %v3774, 0
    %3785 = vmatprep.subr.mxu0 0.0
    %3786 = vmatpush1.xpose.msra.mxu0 %v3781
    %3787 = vmatprep.subr.mxu0 0.0
    %3788 = vmatpush1.xpose.msra.mxu0 %v3783
    %3789 = vmatprep.subr.mxu0 0.0
    %3790 = vmatpush1.xpose.msra.mxu0 0.0
    %3791 = vmatprep.subr.mxu0 0.0
    %3792 = vmatpush1.xpose.msra.mxu0 0.0
    %3793 = vmatprep.subr.mxu0 0.0
    %3794 = vmatpush1.xpose.msra.mxu0 0.0
    %3795 = vmatprep.subr.mxu0 0.0
    %3796 = vmatpush1.xpose.msra.mxu0 0.0
    %3797 = vmatprep.subr.mxu0 0.0
    %3798 = vmatpush1.xpose.msra.mxu0 0.0
    %3799 = vmatprep.subr.mxu0 0.0
    %3800 = vmatpush1.xpose.msra.mxu0 0.0
    %3801 = vmatprep.subr.mxu0 0.0
    %3802 = vmatpush1.xpose.msra.mxu0 0.0
    %3803 = vmatprep.subr.mxu0 0.0
    %3804 = vmatpush1.xpose.msra.mxu0 0.0
    %3805 = vmatprep.subr.mxu0 0.0
    %3806 = vmatpush1.xpose.msra.mxu0 0.0
    %3807 = vmatprep.subr.mxu0 0.0
    %3808 = vmatpush1.xpose.msra.mxu0 0.0
    %3809 = vmatprep.subr.mxu0 0.0
    %3810 = vmatpush1.xpose.msra.mxu0 0.0
    %3811 = vmatprep.subr.mxu0 0.0
    %3812 = vmatpush1.xpose.msra.mxu0 0.0
    %3813 = vmatprep.subr.mxu0 0.0
    %3814 = vmatpush1.xpose.msra.mxu0 0.0
    %3815 = vmatprep.subr.mxu0 0.0
    %3816 = vmatpush1.xpose.msra.mxu0 0.0
    %3817 = vmatprep.subr.mxu0 0.0
    %3818 = vmatpush1.xpose.msra.mxu0 0.0
    %3819 = vmatprep.subr.mxu0 0.0
    %3820 = vmatpush1.xpose.msra.mxu0 0.0
    %3821 = vmatprep.subr.mxu0 0.0
    %3822 = vmatpush1.xpose.msra.mxu0 0.0
    %3823 = vmatprep.subr.mxu0 0.0
    %3824 = vmatpush1.xpose.msra.mxu0 0.0
    %3825 = vmatprep.subr.mxu0 0.0
    %3826 = vmatpush1.xpose.msra.mxu0 0.0
    %3827 = vmatprep.subr.mxu0 0.0
    %3828 = vmatpush1.xpose.msra.mxu0 0.0
    %3829 = vmatprep.subr.mxu0 0.0
    %3830 = vmatpush1.xpose.msra.mxu0 0.0
    %3831 = vmatprep.subr.mxu0 0.0
    %3832 = vmatpush1.xpose.msra.mxu0 0.0
    %3833 = vmatprep.subr.mxu0 0.0
    %3834 = vmatpush1.xpose.msra.mxu0 0.0
    %3835 = vmatprep.subr.mxu0 0.0
    %3836 = vmatpush1.xpose.msra.mxu0 0.0
    %3837 = vmatprep.subr.mxu0 0.0
    %3838 = vmatpush1.xpose.msra.mxu0 0.0
    %3839 = vmatprep.subr.mxu0 0.0
    %3840 = vmatpush1.xpose.msra.mxu0 0.0
    %3841 = vmatprep.subr.mxu0 0.0
    %3842 = vmatpush1.xpose.msra.mxu0 0.0
    %3843 = vmatprep.subr.mxu0 0.0
    %3844 = vmatpush1.xpose.msra.mxu0 0.0
    %3845 = vmatprep.subr.mxu0 0.0
    %3846 = vmatpush1.xpose.msra.mxu0 0.0
    %3847 = vmatprep.subr.mxu0 0.0
    %3848 = vmatpush1.xpose.msra.mxu0 0.0
    %3849 = vmatprep.mubr.f32.mxu0 0.0
    %3850 = vmatmul.mubr.f32.gmra.mrb[0].mxu0 %v3776
    %v3851 = vpop.f32.mrb[0].mxu0
    %v3852 = vadd.f32 %v40, %v3851
    %v3853 = vpop.f32.mrb[0].mxu0
    %3854 = vmatprep.mubr.f32.mxu0 0.0
    %3855 = vmatmul.mubr.f32.gmra.mrb[0].mxu0 %v3779
    %v3856 = vpop.f32.mrb[0].mxu0
    %v3857 = vadd.f32 %v41, %v3856
    %v3858 = vpop.f32.mrb[0].mxu0
    %3859 = vdwg.mxu0
    %v3860 = vsel %vm377, %v3852, -inf
    %3861 = vmax.xlane.f32.xlu0 %v3860
    %v3862 = vpop.xlane.xlu0 %3861
    %v3863 = vsel %vm377, %v3857, -inf
    %3864 = vmax.xlane.f32.xlu0 %v3863
    %v3865 = vpop.xlane.xlu0 %3864
    %v3866 = vsub.f32 %v3852, %v3862
    %v3867 = vsub.f32 %v3857, %v3865
    %v3868 = vmul.f32 %v3866, 1.442695
    %v3869 = vpow.pop %v3868
    %v3870 = vmul.f32 %v3867, 1.442695
    %v3871 = vpow.pop %v3870
    %v3872 = vsel %vm377, %v3869, 0.0
    %3873 = vadd.xlane.f32.xlu0 %v3872
    %v3874 = vpop.xlane.xlu0 %3873
    %v3875 = vsel %vm377, %v3871, 0.0
    %3876 = vadd.xlane.f32.xlu0 %v3875
    %v3877 = vpop.xlane.xlu0 %3876
    %v3878 = vrcp.pop %v3874
    %v3879 = vrcp.pop %v3877
    %v3880 = vmul.f32 %v3869, %v3878
    %v3881 = vmul.f32 %v3871, %v3879
    %3882 = vrot.lane.b32.xlu0 %v129, 32
    %v3883 = vpop.permute.xlu0 %3882
    %3884 = vrot.lane.b32.xlu0 %v134, 32
    %v3885 = vpop.permute.xlu0 %3884
    %v3889 = vsel %vm377, %v3880, 0
    %v3892 = vsel %vm377, %v3881, 0
    %3894 = vmatprep.subr.mxu0 0.0
    %3895 = vmatpush1.msra.mxu0 %v3883
    %3896 = vmatprep.subr.mxu0 0.0
    %3897 = vmatpush1.msra.mxu0 %v3885
    %3898 = vmatprep.subr.mxu0 0.0
    %3899 = vmatpush1.msra.mxu0 0.0
    %3900 = vmatprep.subr.mxu0 0.0
    %3901 = vmatpush1.msra.mxu0 0.0
    %3902 = vmatprep.subr.mxu0 0.0
    %3903 = vmatpush1.msra.mxu0 0.0
    %3904 = vmatprep.subr.mxu0 0.0
    %3905 = vmatpush1.msra.mxu0 0.0
    %3906 = vmatprep.subr.mxu0 0.0
    %3907 = vmatpush1.msra.mxu0 0.0
    %3908 = vmatprep.subr.mxu0 0.0
    %3909 = vmatpush1.msra.mxu0 0.0
    %3910 = vmatprep.subr.mxu0 0.0
    %3911 = vmatpush1.msra.mxu0 0.0
    %3912 = vmatprep.subr.mxu0 0.0
    %3913 = vmatpush1.msra.mxu0 0.0
    %3914 = vmatprep.subr.mxu0 0.0
    %3915 = vmatpush1.msra.mxu0 0.0
    %3916 = vmatprep.subr.mxu0 0.0
    %3917 = vmatpush1.msra.mxu0 0.0
    %3918 = vmatprep.subr.mxu0 0.0
    %3919 = vmatpush1.msra.mxu0 0.0
    %3920 = vmatprep.subr.mxu0 0.0
    %3921 = vmatpush1.msra.mxu0 0.0
    %3922 = vmatprep.subr.mxu0 0.0
    %3923 = vmatpush1.msra.mxu0 0.0
    %3924 = vmatprep.subr.mxu0 0.0
    %3925 = vmatpush1.msra.mxu0 0.0
    %3926 = vmatprep.subr.mxu0 0.0
    %3927 = vmatpush1.msra.mxu0 0.0
    %3928 = vmatprep.subr.mxu0 0.0
    %3929 = vmatpush1.msra.mxu0 0.0
    %3930 = vmatprep.subr.mxu0 0.0
    %3931 = vmatpush1.msra.mxu0 0.0
    %3932 = vmatprep.subr.mxu0 0.0
    %3933 = vmatpush1.msra.mxu0 0.0
    %3934 = vmatprep.subr.mxu0 0.0
    %3935 = vmatpush1.msra.mxu0 0.0
    %3936 = vmatprep.subr.mxu0 0.0
    %3937 = vmatpush1.msra.mxu0 0.0
    %3938 = vmatprep.subr.mxu0 0.0
    %3939 = vmatpush1.msra.mxu0 0.0
    %3940 = vmatprep.subr.mxu0 0.0
    %3941 = vmatpush1.msra.mxu0 0.0
    %3942 = vmatprep.subr.mxu0 0.0
    %3943 = vmatpush1.msra.mxu0 0.0
    %3944 = vmatprep.subr.mxu0 0.0
    %3945 = vmatpush1.msra.mxu0 0.0
    %3946 = vmatprep.subr.mxu0 0.0
    %3947 = vmatpush1.msra.mxu0 0.0
    %3948 = vmatprep.subr.mxu0 0.0
    %3949 = vmatpush1.msra.mxu0 0.0
    %3950 = vmatprep.subr.mxu0 0.0
    %3951 = vmatpush1.msra.mxu0 0.0
    %3952 = vmatprep.subr.mxu0 0.0
    %3953 = vmatpush1.msra.mxu0 0.0
    %3954 = vmatprep.subr.mxu0 0.0
    %3955 = vmatpush1.msra.mxu0 0.0
    %3956 = vmatprep.subr.mxu0 0.0
    %3957 = vmatpush1.msra.mxu0 0.0
    %3958 = vmatprep.mubr.f32.mxu0 0.0
    %3959 = vmatmul.mubr.f32.gmra.mrb[0].mxu0 %v3889
    %v3960 = vpop.f32.mrb[0].mxu0
    %v3961 = vadd.f32 0.0, %v3960
    %v3962 = vpop.f32.mrb[0].mxu0
    %3963 = vmatprep.mubr.f32.mxu0 0.0
    %3964 = vmatmul.mubr.f32.gmra.mrb[0].mxu0 %v3892
    %v3965 = vpop.f32.mrb[0].mxu0
    %v3966 = vadd.f32 0.0, %v3965
    %v3967 = vpop.f32.mrb[0].mxu0
    %3968 = vdwg.mxu0
    %3969 = vrot.lane.b32.xlu0 %v3769, 120
    %v3970 = vpop.permute.xlu0 %3969
    %3971 = vrot.lane.b32.xlu0 %v3770, 120
    %v3972 = vpop.permute.xlu0 %3971
    %3973 = vrot.lane.b32.xlu0 %v129, 56
    %v3974 = vpop.permute.xlu0 %3973
    %3975 = vrot.lane.b32.xlu0 %v134, 56
    %v3976 = vpop.permute.xlu0 %3975
    %v3977 = vsel %vm291, %v3970, 0
    %v3979 = vsel %vm291, %v3972, 0
    %v3981 = vsel %vm291, %v3974, 0
    %v3983 = vsel %vm291, %v3976, 0
    %3985 = vmatprep.subr.mxu0 0.0
    %3986 = vmatpush1.xpose.msra.mxu0 %v3981
    %3987 = vmatprep.subr.mxu0 0.0
    %3988 = vmatpush1.xpose.msra.mxu0 %v3983
    %3989 = vmatprep.subr.mxu0 0.0
    %3990 = vmatpush1.xpose.msra.mxu0 0.0
    %3991 = vmatprep.subr.mxu0 0.0
    %3992 = vmatpush1.xpose.msra.mxu0 0.0
    %3993 = vmatprep.subr.mxu0 0.0
    %3994 = vmatpush1.xpose.msra.mxu0 0.0
    %3995 = vmatprep.subr.mxu0 0.0
    %3996 = vmatpush1.xpose.msra.mxu0 0.0
    %3997 = vmatprep.subr.mxu0 0.0
    %3998 = vmatpush1.xpose.msra.mxu0 0.0
    %3999 = vmatprep.subr.mxu0 0.0
    %4000 = vmatpush1.xpose.msra.mxu0 0.0
    %4001 = vmatprep.subr.mxu0 0.0
    %4002 = vmatpush1.xpose.msra.mxu0 0.0
    %4003 = vmatprep.subr.mxu0 0.0
    %4004 = vmatpush1.xpose.msra.mxu0 0.0
    %4005 = vmatprep.subr.mxu0 0.0
    %4006 = vmatpush1.xpose.msra.mxu0 0.0
    %4007 = vmatprep.subr.mxu0 0.0
    %4008 = vmatpush1.xpose.msra.mxu0 0.0
    %4009 = vmatprep.subr.mxu0 0.0
    %4010 = vmatpush1.xpose.msra.mxu0 0.0
    %4011 = vmatprep.subr.mxu0 0.0
    %4012 = vmatpush1.xpose.msra.mxu0 0.0
    %4013 = vmatprep.subr.mxu0 0.0
    %4014 = vmatpush1.xpose.msra.mxu0 0.0
    %4015 = vmatprep.subr.mxu0 0.0
    %4016 = vmatpush1.xpose.msra.mxu0 0.0
    %4017 = vmatprep.subr.mxu0 0.0
    %4018 = vmatpush1.xpose.msra.mxu0 0.0
    %4019 = vmatprep.subr.mxu0 0.0
    %4020 = vmatpush1.xpose.msra.mxu0 0.0
    %4021 = vmatprep.subr.mxu0 0.0
    %4022 = vmatpush1.xpose.msra.mxu0 0.0
    %4023 = vmatprep.subr.mxu0 0.0
    %4024 = vmatpush1.xpose.msra.mxu0 0.0
    %4025 = vmatprep.subr.mxu0 0.0
    %4026 = vmatpush1.xpose.msra.mxu0 0.0
    %4027 = vmatprep.subr.mxu0 0.0
    %4028 = vmatpush1.xpose.msra.mxu0 0.0
    %4029 = vmatprep.subr.mxu0 0.0
    %4030 = vmatpush1.xpose.msra.mxu0 0.0
    %4031 = vmatprep.subr.mxu0 0.0
    %4032 = vmatpush1.xpose.msra.mxu0 0.0
    %4033 = vmatprep.subr.mxu0 0.0
    %4034 = vmatpush1.xpose.msra.mxu0 0.0
    %4035 = vmatprep.subr.mxu0 0.0
    %4036 = vmatpush1.xpose.msra.mxu0 0.0
    %4037 = vmatprep.subr.mxu0 0.0
    %4038 = vmatpush1.xpose.msra.mxu0 0.0
    %4039 = vmatprep.subr.mxu0 0.0
    %4040 = vmatpush1.xpose.msra.mxu0 0.0
    %4041 = vmatprep.subr.mxu0 0.0
    %4042 = vmatpush1.xpose.msra.mxu0 0.0
    %4043 = vmatprep.subr.mxu0 0.0
    %4044 = vmatpush1.xpose.msra.mxu0 0.0
    %4045 = vmatprep.subr.mxu0 0.0
    %4046 = vmatpush1.xpose.msra.mxu0 0.0
    %4047 = vmatprep.subr.mxu0 0.0
    %4048 = vmatpush1.xpose.msra.mxu0 0.0
    %4049 = vmatprep.mubr.f32.mxu0 0.0
    %4050 = vmatmul.mubr.f32.gmra.mrb[0].mxu0 %v3977
    %v4051 = vpop.f32.mrb[0].mxu0
    %v4052 = vadd.f32 %v40, %v4051
    %v4053 = vpop.f32.mrb[0].mxu0
    %4054 = vmatprep.mubr.f32.mxu0 0.0
    %4055 = vmatmul.mubr.f32.gmra.mrb[0].mxu0 %v3979
    %v4056 = vpop.f32.mrb[0].mxu0
    %v4057 = vadd.f32 %v41, %v4056
    %v4058 = vpop.f32.mrb[0].mxu0
    %4059 = vdwg.mxu0
    %v4060 = vsel %vm377, %v4052, -inf
    %4061 = vmax.xlane.f32.xlu0 %v4060
    %v4062 = vpop.xlane.xlu0 %4061
    %v4063 = vsel %vm377, %v4057, -inf
    %4064 = vmax.xlane.f32.xlu0 %v4063
    %v4065 = vpop.xlane.xlu0 %4064
    %v4066 = vsub.f32 %v4052, %v4062
    %v4067 = vsub.f32 %v4057, %v4065
    %v4068 = vmul.f32 %v4066, 1.442695
    %v4069 = vpow.pop %v4068
    %v4070 = vmul.f32 %v4067, 1.442695
    %v4071 = vpow.pop %v4070
    %v4072 = vsel %vm377, %v4069, 0.0
    %4073 = vadd.xlane.f32.xlu0 %v4072
    %v4074 = vpop.xlane.xlu0 %4073
    %v4075 = vsel %vm377, %v4071, 0.0
    %4076 = vadd.xlane.f32.xlu0 %v4075
    %v4077 = vpop.xlane.xlu0 %4076
    %v4078 = vrcp.pop %v4074
    %v4079 = vrcp.pop %v4077
    %v4080 = vmul.f32 %v4069, %v4078
    %v4081 = vmul.f32 %v4071, %v4079
    %4082 = vrot.lane.b32.xlu0 %v129, 24
    %v4083 = vpop.permute.xlu0 %4082
    %4084 = vrot.lane.b32.xlu0 %v134, 24
    %v4085 = vpop.permute.xlu0 %4084
    %v4089 = vsel %vm377, %v4080, 0
    %v4092 = vsel %vm377, %v4081, 0
    %4094 = vmatprep.subr.mxu0 0.0
    %4095 = vmatpush1.msra.mxu0 %v4083
    %4096 = vmatprep.subr.mxu0 0.0
    %4097 = vmatpush1.msra.mxu0 %v4085
    %4098 = vmatprep.subr.mxu0 0.0
    %4099 = vmatpush1.msra.mxu0 0.0
    %4100 = vmatprep.subr.mxu0 0.0
    %4101 = vmatpush1.msra.mxu0 0.0
    %4102 = vmatprep.subr.mxu0 0.0
    %4103 = vmatpush1.msra.mxu0 0.0
    %4104 = vmatprep.subr.mxu0 0.0
    %4105 = vmatpush1.msra.mxu0 0.0
    %4106 = vmatprep.subr.mxu0 0.0
    %4107 = vmatpush1.msra.mxu0 0.0
    %4108 = vmatprep.subr.mxu0 0.0
    %4109 = vmatpush1.msra.mxu0 0.0
    %4110 = vmatprep.subr.mxu0 0.0
    %4111 = vmatpush1.msra.mxu0 0.0
    %4112 = vmatprep.subr.mxu0 0.0
    %4113 = vmatpush1.msra.mxu0 0.0
    %4114 = vmatprep.subr.mxu0 0.0
    %4115 = vmatpush1.msra.mxu0 0.0
    %4116 = vmatprep.subr.mxu0 0.0
    %4117 = vmatpush1.msra.mxu0 0.0
    %4118 = vmatprep.subr.mxu0 0.0
    %4119 = vmatpush1.msra.mxu0 0.0
    %4120 = vmatprep.subr.mxu0 0.0
    %4121 = vmatpush1.msra.mxu0 0.0
    %4122 = vmatprep.subr.mxu0 0.0
    %4123 = vmatpush1.msra.mxu0 0.0
    %4124 = vmatprep.subr.mxu0 0.0
    %4125 = vmatpush1.msra.mxu0 0.0
    %4126 = vmatprep.subr.mxu0 0.0
    %4127 = vmatpush1.msra.mxu0 0.0
    %4128 = vmatprep.subr.mxu0 0.0
    %4129 = vmatpush1.msra.mxu0 0.0
    %4130 = vmatprep.subr.mxu0 0.0
    %4131 = vmatpush1.msra.mxu0 0.0
    %4132 = vmatprep.subr.mxu0 0.0
    %4133 = vmatpush1.msra.mxu0 0.0
    %4134 = vmatprep.subr.mxu0 0.0
    %4135 = vmatpush1.msra.mxu0 0.0
    %4136 = vmatprep.subr.mxu0 0.0
    %4137 = vmatpush1.msra.mxu0 0.0
    %4138 = vmatprep.subr.mxu0 0.0
    %4139 = vmatpush1.msra.mxu0 0.0
    %4140 = vmatprep.subr.mxu0 0.0
    %4141 = vmatpush1.msra.mxu0 0.0
    %4142 = vmatprep.subr.mxu0 0.0
    %4143 = vmatpush1.msra.mxu0 0.0
    %4144 = vmatprep.subr.mxu0 0.0
    %4145 = vmatpush1.msra.mxu0 0.0
    %4146 = vmatprep.subr.mxu0 0.0
    %4147 = vmatpush1.msra.mxu0 0.0
    %4148 = vmatprep.subr.mxu0 0.0
    %4149 = vmatpush1.msra.mxu0 0.0
    %4150 = vmatprep.subr.mxu0 0.0
    %4151 = vmatpush1.msra.mxu0 0.0
    %4152 = vmatprep.subr.mxu0 0.0
    %4153 = vmatpush1.msra.mxu0 0.0
    %4154 = vmatprep.subr.mxu0 0.0
    %4155 = vmatpush1.msra.mxu0 0.0
    %4156 = vmatprep.subr.mxu0 0.0
    %4157 = vmatpush1.msra.mxu0 0.0
    %4158 = vmatprep.mubr.f32.mxu0 0.0
    %4159 = vmatmul.mubr.f32.gmra.mrb[0].mxu0 %v4089
    %v4160 = vpop.f32.mrb[0].mxu0
    %v4161 = vadd.f32 0.0, %v4160
    %v4162 = vpop.f32.mrb[0].mxu0
    %4163 = vmatprep.mubr.f32.mxu0 0.0
    %4164 = vmatmul.mubr.f32.gmra.mrb[0].mxu0 %v4092
    %v4165 = vpop.f32.mrb[0].mxu0
    %v4166 = vadd.f32 0.0, %v4165
    %v4167 = vpop.f32.mrb[0].mxu0
    %4168 = vdwg.mxu0
    %4169 = vrot.lane.b32.xlu0 %v3769, 112
    %v4170 = vpop.permute.xlu0 %4169
    %4171 = vrot.lane.b32.xlu0 %v3770, 112
    %v4172 = vpop.permute.xlu0 %4171
    %4173 = vrot.lane.b32.xlu0 %v129, 48
    %v4174 = vpop.permute.xlu0 %4173
    %4175 = vrot.lane.b32.xlu0 %v134, 48
    %v4176 = vpop.permute.xlu0 %4175
    %v4177 = vsel %vm291, %v4170, 0
    %v4179 = vsel %vm291, %v4172, 0
    %v4181 = vsel %vm291, %v4174, 0
    %v4183 = vsel %vm291, %v4176, 0
    %4185 = vmatprep.subr.mxu0 0.0
    %4186 = vmatpush1.xpose.msra.mxu0 %v4181
    %4187 = vmatprep.subr.mxu0 0.0
    %4188 = vmatpush1.xpose.msra.mxu0 %v4183
    %4189 = vmatprep.subr.mxu0 0.0
    %4190 = vmatpush1.xpose.msra.mxu0 0.0
    %4191 = vmatprep.subr.mxu0 0.0
    %4192 = vmatpush1.xpose.msra.mxu0 0.0
    %4193 = vmatprep.subr.mxu0 0.0
    %4194 = vmatpush1.xpose.msra.mxu0 0.0
    %4195 = vmatprep.subr.mxu0 0.0
    %4196 = vmatpush1.xpose.msra.mxu0 0.0
    %4197 = vmatprep.subr.mxu0 0.0
    %4198 = vmatpush1.xpose.msra.mxu0 0.0
    %4199 = vmatprep.subr.mxu0 0.0
    %4200 = vmatpush1.xpose.msra.mxu0 0.0
    %4201 = vmatprep.subr.mxu0 0.0
    %4202 = vmatpush1.xpose.msra.mxu0 0.0
    %4203 = vmatprep.subr.mxu0 0.0
    %4204 = vmatpush1.xpose.msra.mxu0 0.0
    %4205 = vmatprep.subr.mxu0 0.0
    %4206 = vmatpush1.xpose.msra.mxu0 0.0
    %4207 = vmatprep.subr.mxu0 0.0
    %4208 = vmatpush1.xpose.msra.mxu0 0.0
    %4209 = vmatprep.subr.mxu0 0.0
    %4210 = vmatpush1.xpose.msra.mxu0 0.0
    %4211 = vmatprep.subr.mxu0 0.0
    %4212 = vmatpush1.xpose.msra.mxu0 0.0
    %4213 = vmatprep.subr.mxu0 0.0
    %4214 = vmatpush1.xpose.msra.mxu0 0.0
    %4215 = vmatprep.subr.mxu0 0.0
    %4216 = vmatpush1.xpose.msra.mxu0 0.0
    %4217 = vmatprep.subr.mxu0 0.0
    %4218 = vmatpush1.xpose.msra.mxu0 0.0
    %4219 = vmatprep.subr.mxu0 0.0
    %4220 = vmatpush1.xpose.msra.mxu0 0.0
    %4221 = vmatprep.subr.mxu0 0.0
    %4222 = vmatpush1.xpose.msra.mxu0 0.0
    %4223 = vmatprep.subr.mxu0 0.0
    %4224 = vmatpush1.xpose.msra.mxu0 0.0
    %4225 = vmatprep.subr.mxu0 0.0
    %4226 = vmatpush1.xpose.msra.mxu0 0.0
    %4227 = vmatprep.subr.mxu0 0.0
    %4228 = vmatpush1.xpose.msra.mxu0 0.0
    %4229 = vmatprep.subr.mxu0 0.0
    %4230 = vmatpush1.xpose.msra.mxu0 0.0
    %4231 = vmatprep.subr.mxu0 0.0
    %4232 = vmatpush1.xpose.msra.mxu0 0.0
    %4233 = vmatprep.subr.mxu0 0.0
    %4234 = vmatpush1.xpose.msra.mxu0 0.0
    %4235 = vmatprep.subr.mxu0 0.0
    %4236 = vmatpush1.xpose.msra.mxu0 0.0
    %4237 = vmatprep.subr.mxu0 0.0
    %4238 = vmatpush1.xpose.msra.mxu0 0.0
    %4239 = vmatprep.subr.mxu0 0.0
    %4240 = vmatpush1.xpose.msra.mxu0 0.0
    %4241 = vmatprep.subr.mxu0 0.0
    %4242 = vmatpush1.xpose.msra.mxu0 0.0
    %4243 = vmatprep.subr.mxu0 0.0
    %4244 = vmatpush1.xpose.msra.mxu0 0.0
    %4245 = vmatprep.subr.mxu0 0.0
    %4246 = vmatpush1.xpose.msra.mxu0 0.0
    %4247 = vmatprep.subr.mxu0 0.0
    %4248 = vmatpush1.xpose.msra.mxu0 0.0
    %4249 = vmatprep.mubr.f32.mxu0 0.0
    %4250 = vmatmul.mubr.f32.gmra.mrb[0].mxu0 %v4177
    %v4251 = vpop.f32.mrb[0].mxu0
    %v4252 = vadd.f32 %v40, %v4251
    %v4253 = vpop.f32.mrb[0].mxu0
    %4254 = vmatprep.mubr.f32.mxu0 0.0
    %4255 = vmatmul.mubr.f32.gmra.mrb[0].mxu0 %v4179
    %v4256 = vpop.f32.mrb[0].mxu0
    %v4257 = vadd.f32 %v41, %v4256
    %v4258 = vpop.f32.mrb[0].mxu0
    %4259 = vdwg.mxu0
    %v4260 = vsel %vm377, %v4252, -inf
    %4261 = vmax.xlane.f32.xlu0 %v4260
    %v4262 = vpop.xlane.xlu0 %4261
    %v4263 = vsel %vm377, %v4257, -inf
    %4264 = vmax.xlane.f32.xlu0 %v4263
    %v4265 = vpop.xlane.xlu0 %4264
    %v4266 = vsub.f32 %v4252, %v4262
    %v4267 = vsub.f32 %v4257, %v4265
    %v4268 = vmul.f32 %v4266, 1.442695
    %v4269 = vpow.pop %v4268
    %v4270 = vmul.f32 %v4267, 1.442695
    %v4271 = vpow.pop %v4270
    %v4272 = vsel %vm377, %v4269, 0.0
    %4273 = vadd.xlane.f32.xlu0 %v4272
    %v4274 = vpop.xlane.xlu0 %4273
    %v4275 = vsel %vm377, %v4271, 0.0
    %4276 = vadd.xlane.f32.xlu0 %v4275
    %v4277 = vpop.xlane.xlu0 %4276
    %v4278 = vrcp.pop %v4274
    %v4279 = vrcp.pop %v4277
    %v4280 = vmul.f32 %v4269, %v4278
    %v4281 = vmul.f32 %v4271, %v4279
    %4282 = vrot.lane.b32.xlu0 %v129, 16
    %v4283 = vpop.permute.xlu0 %4282
    %4284 = vrot.lane.b32.xlu0 %v134, 16
    %v4285 = vpop.permute.xlu0 %4284
    %v4289 = vsel %vm377, %v4280, 0
    %v4292 = vsel %vm377, %v4281, 0
    %4294 = vmatprep.subr.mxu0 0.0
    %4295 = vmatpush1.msra.mxu0 %v4283
    %4296 = vmatprep.subr.mxu0 0.0
    %4297 = vmatpush1.msra.mxu0 %v4285
    %4298 = vmatprep.subr.mxu0 0.0
    %4299 = vmatpush1.msra.mxu0 0.0
    %4300 = vmatprep.subr.mxu0 0.0
    %4301 = vmatpush1.msra.mxu0 0.0
    %4302 = vmatprep.subr.mxu0 0.0
    %4303 = vmatpush1.msra.mxu0 0.0
    %4304 = vmatprep.subr.mxu0 0.0
    %4305 = vmatpush1.msra.mxu0 0.0
    %4306 = vmatprep.subr.mxu0 0.0
    %4307 = vmatpush1.msra.mxu0 0.0
    %4308 = vmatprep.subr.mxu0 0.0
    %4309 = vmatpush1.msra.mxu0 0.0
    %4310 = vmatprep.subr.mxu0 0.0
    %4311 = vmatpush1.msra.mxu0 0.0
    %4312 = vmatprep.subr.mxu0 0.0
    %4313 = vmatpush1.msra.mxu0 0.0
    %4314 = vmatprep.subr.mxu0 0.0
    %4315 = vmatpush1.msra.mxu0 0.0
    %4316 = vmatprep.subr.mxu0 0.0
    %4317 = vmatpush1.msra.mxu0 0.0
    %4318 = vmatprep.subr.mxu0 0.0
    %4319 = vmatpush1.msra.mxu0 0.0
    %4320 = vmatprep.subr.mxu0 0.0
    %4321 = vmatpush1.msra.mxu0 0.0
    %4322 = vmatprep.subr.mxu0 0.0
    %4323 = vmatpush1.msra.mxu0 0.0
    %4324 = vmatprep.subr.mxu0 0.0
    %4325 = vmatpush1.msra.mxu0 0.0
    %4326 = vmatprep.subr.mxu0 0.0
    %4327 = vmatpush1.msra.mxu0 0.0
    %4328 = vmatprep.subr.mxu0 0.0
    %4329 = vmatpush1.msra.mxu0 0.0
    %4330 = vmatprep.subr.mxu0 0.0
    %4331 = vmatpush1.msra.mxu0 0.0
    %4332 = vmatprep.subr.mxu0 0.0
    %4333 = vmatpush1.msra.mxu0 0.0
    %4334 = vmatprep.subr.mxu0 0.0
    %4335 = vmatpush1.msra.mxu0 0.0
    %4336 = vmatprep.subr.mxu0 0.0
    %4337 = vmatpush1.msra.mxu0 0.0
    %4338 = vmatprep.subr.mxu0 0.0
    %4339 = vmatpush1.msra.mxu0 0.0
    %4340 = vmatprep.subr.mxu0 0.0
    %4341 = vmatpush1.msra.mxu0 0.0
    %4342 = vmatprep.subr.mxu0 0.0
    %4343 = vmatpush1.msra.mxu0 0.0
    %4344 = vmatprep.subr.mxu0 0.0
    %4345 = vmatpush1.msra.mxu0 0.0
    %4346 = vmatprep.subr.mxu0 0.0
    %4347 = vmatpush1.msra.mxu0 0.0
    %4348 = vmatprep.subr.mxu0 0.0
    %4349 = vmatpush1.msra.mxu0 0.0
    %4350 = vmatprep.subr.mxu0 0.0
    %4351 = vmatpush1.msra.mxu0 0.0
    %4352 = vmatprep.subr.mxu0 0.0
    %4353 = vmatpush1.msra.mxu0 0.0
    %4354 = vmatprep.subr.mxu0 0.0
    %4355 = vmatpush1.msra.mxu0 0.0
    %4356 = vmatprep.subr.mxu0 0.0
    %4357 = vmatpush1.msra.mxu0 0.0
    %4358 = vmatprep.mubr.f32.mxu0 0.0
    %4359 = vmatmul.mubr.f32.gmra.mrb[0].mxu0 %v4289
    %v4360 = vpop.f32.mrb[0].mxu0
    %v4361 = vadd.f32 0.0, %v4360
    %v4362 = vpop.f32.mrb[0].mxu0
    %4363 = vmatprep.mubr.f32.mxu0 0.0
    %4364 = vmatmul.mubr.f32.gmra.mrb[0].mxu0 %v4292
    %v4365 = vpop.f32.mrb[0].mxu0
    %v4366 = vadd.f32 0.0, %v4365
    %v4367 = vpop.f32.mrb[0].mxu0
    %4368 = vdwg.mxu0
    %4369 = vrot.lane.b32.xlu0 %v3769, 104
    %v4370 = vpop.permute.xlu0 %4369
    %4371 = vrot.lane.b32.xlu0 %v3770, 104
    %v4372 = vpop.permute.xlu0 %4371
    %4373 = vrot.lane.b32.xlu0 %v129, 40
    %v4374 = vpop.permute.xlu0 %4373
    %4375 = vrot.lane.b32.xlu0 %v134, 40
    %v4376 = vpop.permute.xlu0 %4375
    %v4377 = vsel %vm291, %v4370, 0
    %v4379 = vsel %vm291, %v4372, 0
    %v4381 = vsel %vm291, %v4374, 0
    %v4383 = vsel %vm291, %v4376, 0
    %4385 = vmatprep.subr.mxu0 0.0
    %4386 = vmatpush1.xpose.msra.mxu0 %v4381
    %4387 = vmatprep.subr.mxu0 0.0
    %4388 = vmatpush1.xpose.msra.mxu0 %v4383
    %4389 = vmatprep.subr.mxu0 0.0
    %4390 = vmatpush1.xpose.msra.mxu0 0.0
    %4391 = vmatprep.subr.mxu0 0.0
    %4392 = vmatpush1.xpose.msra.mxu0 0.0
    %4393 = vmatprep.subr.mxu0 0.0
    %4394 = vmatpush1.xpose.msra.mxu0 0.0
    %4395 = vmatprep.subr.mxu0 0.0
    %4396 = vmatpush1.xpose.msra.mxu0 0.0
    %4397 = vmatprep.subr.mxu0 0.0
    %4398 = vmatpush1.xpose.msra.mxu0 0.0
    %4399 = vmatprep.subr.mxu0 0.0
    %4400 = vmatpush1.xpose.msra.mxu0 0.0
    %4401 = vmatprep.subr.mxu0 0.0
    %4402 = vmatpush1.xpose.msra.mxu0 0.0
    %4403 = vmatprep.subr.mxu0 0.0
    %4404 = vmatpush1.xpose.msra.mxu0 0.0
    %4405 = vmatprep.subr.mxu0 0.0
    %4406 = vmatpush1.xpose.msra.mxu0 0.0
    %4407 = vmatprep.subr.mxu0 0.0
    %4408 = vmatpush1.xpose.msra.mxu0 0.0
    %4409 = vmatprep.subr.mxu0 0.0
    %4410 = vmatpush1.xpose.msra.mxu0 0.0
    %4411 = vmatprep.subr.mxu0 0.0
    %4412 = vmatpush1.xpose.msra.mxu0 0.0
    %4413 = vmatprep.subr.mxu0 0.0
    %4414 = vmatpush1.xpose.msra.mxu0 0.0
    %4415 = vmatprep.subr.mxu0 0.0
    %4416 = vmatpush1.xpose.msra.mxu0 0.0
    %4417 = vmatprep.subr.mxu0 0.0
    %4418 = vmatpush1.xpose.msra.mxu0 0.0
    %4419 = vmatprep.subr.mxu0 0.0
    %4420 = vmatpush1.xpose.msra.mxu0 0.0
    %4421 = vmatprep.subr.mxu0 0.0
    %4422 = vmatpush1.xpose.msra.mxu0 0.0
    %4423 = vmatprep.subr.mxu0 0.0
    %4424 = vmatpush1.xpose.msra.mxu0 0.0
    %4425 = vmatprep.subr.mxu0 0.0
    %4426 = vmatpush1.xpose.msra.mxu0 0.0
    %4427 = vmatprep.subr.mxu0 0.0
    %4428 = vmatpush1.xpose.msra.mxu0 0.0
    %4429 = vmatprep.subr.mxu0 0.0
    %4430 = vmatpush1.xpose.msra.mxu0 0.0
    %4431 = vmatprep.subr.mxu0 0.0
    %4432 = vmatpush1.xpose.msra.mxu0 0.0
    %4433 = vmatprep.subr.mxu0 0.0
    %4434 = vmatpush1.xpose.msra.mxu0 0.0
    %4435 = vmatprep.subr.mxu0 0.0
    %4436 = vmatpush1.xpose.msra.mxu0 0.0
    %4437 = vmatprep.subr.mxu0 0.0
    %4438 = vmatpush1.xpose.msra.mxu0 0.0
    %4439 = vmatprep.subr.mxu0 0.0
    %4440 = vmatpush1.xpose.msra.mxu0 0.0
    %4441 = vmatprep.subr.mxu0 0.0
    %4442 = vmatpush1.xpose.msra.mxu0 0.0
    %4443 = vmatprep.subr.mxu0 0.0
    %4444 = vmatpush1.xpose.msra.mxu0 0.0
    %4445 = vmatprep.subr.mxu0 0.0
    %4446 = vmatpush1.xpose.msra.mxu0 0.0
    %4447 = vmatprep.subr.mxu0 0.0
    %4448 = vmatpush1.xpose.msra.mxu0 0.0
    %4449 = vmatprep.mubr.f32.mxu0 0.0
    %4450 = vmatmul.mubr.f32.gmra.mrb[0].mxu0 %v4377
    %v4451 = vpop.f32.mrb[0].mxu0
    %v4452 = vadd.f32 %v40, %v4451
    %v4453 = vpop.f32.mrb[0].mxu0
    %4454 = vmatprep.mubr.f32.mxu0 0.0
    %4455 = vmatmul.mubr.f32.gmra.mrb[0].mxu0 %v4379
    %v4456 = vpop.f32.mrb[0].mxu0
    %v4457 = vadd.f32 %v41, %v4456
    %v4458 = vpop.f32.mrb[0].mxu0
    %4459 = vdwg.mxu0
    %v4460 = vsel %vm377, %v4452, -inf
    %4461 = vmax.xlane.f32.xlu0 %v4460
    %v4462 = vpop.xlane.xlu0 %4461
    %v4463 = vsel %vm377, %v4457, -inf
    %4464 = vmax.xlane.f32.xlu0 %v4463
    %v4465 = vpop.xlane.xlu0 %4464
    %v4466 = vsub.f32 %v4452, %v4462
    %v4467 = vsub.f32 %v4457, %v4465
    %v4468 = vmul.f32 %v4466, 1.442695
    %v4469 = vpow.pop %v4468
    %v4470 = vmul.f32 %v4467, 1.442695
    %v4471 = vpow.pop %v4470
    %v4472 = vsel %vm377, %v4469, 0.0
    %4473 = vadd.xlane.f32.xlu0 %v4472
    %v4474 = vpop.xlane.xlu0 %4473
    %v4475 = vsel %vm377, %v4471, 0.0
    %4476 = vadd.xlane.f32.xlu0 %v4475
    %v4477 = vpop.xlane.xlu0 %4476
    %v4478 = vrcp.pop %v4474
    %v4479 = vrcp.pop %v4477
    %v4480 = vmul.f32 %v4469, %v4478
    %v4481 = vmul.f32 %v4471, %v4479
    %4482 = vrot.lane.b32.xlu0 %v129, 8
    %v4483 = vpop.permute.xlu0 %4482
    %4484 = vrot.lane.b32.xlu0 %v134, 8
    %v4485 = vpop.permute.xlu0 %4484
    %v4489 = vsel %vm377, %v4480, 0
    %v4492 = vsel %vm377, %v4481, 0
    %4494 = vmatprep.subr.mxu0 0.0
    %4495 = vmatpush1.msra.mxu0 %v4483
    %4496 = vmatprep.subr.mxu0 0.0
    %4497 = vmatpush1.msra.mxu0 %v4485
    %4498 = vmatprep.subr.mxu0 0.0
    %4499 = vmatpush1.msra.mxu0 0.0
    %4500 = vmatprep.subr.mxu0 0.0
    %4501 = vmatpush1.msra.mxu0 0.0
    %4502 = vmatprep.subr.mxu0 0.0
    %4503 = vmatpush1.msra.mxu0 0.0
    %4504 = vmatprep.subr.mxu0 0.0
    %4505 = vmatpush1.msra.mxu0 0.0
    %4506 = vmatprep.subr.mxu0 0.0
    %4507 = vmatpush1.msra.mxu0 0.0
    %4508 = vmatprep.subr.mxu0 0.0
    %4509 = vmatpush1.msra.mxu0 0.0
    %4510 = vmatprep.subr.mxu0 0.0
    %4511 = vmatpush1.msra.mxu0 0.0
    %4512 = vmatprep.subr.mxu0 0.0
    %4513 = vmatpush1.msra.mxu0 0.0
    %4514 = vmatprep.subr.mxu0 0.0
    %4515 = vmatpush1.msra.mxu0 0.0
    %4516 = vmatprep.subr.mxu0 0.0
    %4517 = vmatpush1.msra.mxu0 0.0
    %4518 = vmatprep.subr.mxu0 0.0
    %4519 = vmatpush1.msra.mxu0 0.0
    %4520 = vmatprep.subr.mxu0 0.0
    %4521 = vmatpush1.msra.mxu0 0.0
    %4522 = vmatprep.subr.mxu0 0.0
    %4523 = vmatpush1.msra.mxu0 0.0
    %4524 = vmatprep.subr.mxu0 0.0
    %4525 = vmatpush1.msra.mxu0 0.0
    %4526 = vmatprep.subr.mxu0 0.0
    %4527 = vmatpush1.msra.mxu0 0.0
    %4528 = vmatprep.subr.mxu0 0.0
    %4529 = vmatpush1.msra.mxu0 0.0
    %4530 = vmatprep.subr.mxu0 0.0
    %4531 = vmatpush1.msra.mxu0 0.0
    %4532 = vmatprep.subr.mxu0 0.0
    %4533 = vmatpush1.msra.mxu0 0.0
    %4534 = vmatprep.subr.mxu0 0.0
    %4535 = vmatpush1.msra.mxu0 0.0
    %4536 = vmatprep.subr.mxu0 0.0
    %4537 = vmatpush1.msra.mxu0 0.0
    %4538 = vmatprep.subr.mxu0 0.0
    %4539 = vmatpush1.msra.mxu0 0.0
    %4540 = vmatprep.subr.mxu0 0.0
    %4541 = vmatpush1.msra.mxu0 0.0
    %4542 = vmatprep.subr.mxu0 0.0
    %4543 = vmatpush1.msra.mxu0 0.0
    %4544 = vmatprep.subr.mxu0 0.0
    %4545 = vmatpush1.msra.mxu0 0.0
    %4546 = vmatprep.subr.mxu0 0.0
    %4547 = vmatpush1.msra.mxu0 0.0
    %4548 = vmatprep.subr.mxu0 0.0
    %4549 = vmatpush1.msra.mxu0 0.0
    %4550 = vmatprep.subr.mxu0 0.0
    %4551 = vmatpush1.msra.mxu0 0.0
    %4552 = vmatprep.subr.mxu0 0.0
    %4553 = vmatpush1.msra.mxu0 0.0
    %4554 = vmatprep.subr.mxu0 0.0
    %4555 = vmatpush1.msra.mxu0 0.0
    %4556 = vmatprep.subr.mxu0 0.0
    %4557 = vmatpush1.msra.mxu0 0.0
    %4558 = vmatprep.mubr.f32.mxu0 0.0
    %4559 = vmatmul.mubr.f32.gmra.mrb[0].mxu0 %v4489
    %v4560 = vpop.f32.mrb[0].mxu0
    %v4561 = vadd.f32 0.0, %v4560
    %v4562 = vpop.f32.mrb[0].mxu0
    %4563 = vmatprep.mubr.f32.mxu0 0.0
    %4564 = vmatmul.mubr.f32.gmra.mrb[0].mxu0 %v4492
    %v4565 = vpop.f32.mrb[0].mxu0
    %v4566 = vadd.f32 0.0, %v4565
    %v4567 = vpop.f32.mrb[0].mxu0
    %4568 = vdwg.mxu0
    %4571 = vrot.lane.b32.xlu0 %v4161, 8
    %v4572 = vpop.permute.xlu0 %4571
    %4573 = vrot.lane.b32.xlu0 %v4166, 8
    %v4574 = vpop.permute.xlu0 %4573
    %4579 = vrot.lane.b32.xlu0 %v4361, 16
    %v4580 = vpop.permute.xlu0 %4579
    %4581 = vrot.lane.b32.xlu0 %v4366, 16
    %v4582 = vpop.permute.xlu0 %4581
    %4587 = vrot.lane.b32.xlu0 %v4561, 24
    %v4588 = vpop.permute.xlu0 %4587
    %4589 = vrot.lane.b32.xlu0 %v4566, 24
    %v4590 = vpop.permute.xlu0 %4589
    %v4593 = vsel %vm291, %v3961, %v4572
    %v4594 = vsel %vm291, %v3966, %v4574
    %v4595 = vsel %vm377, %v4593, %v4580
    %v4596 = vsel %vm377, %v4594, %v4582
    %v4597 = vsel %vm1115, %v4595, %v4588
    %v4598 = vsel %vm1115, %v4596, %v4590
    %4603 = vrot.lane.b32.xlu0 %v3679, 96
    %v4604 = vpop.permute.xlu0 %4603
    %4605 = vrot.lane.b32.xlu0 %v3680, 96
    %v4606 = vpop.permute.xlu0 %4605
    %4607 = vrot.lane.b32.xlu0 %v3681, 96
    %v4608 = vpop.permute.xlu0 %4607
    %4609 = vrot.lane.b32.xlu0 %v3682, 96
    %v4610 = vpop.permute.xlu0 %4609
    %4616 = vrot.lane.b32.xlu0 %v3687, 96
    %v4617 = vpop.permute.xlu0 %4616
    %v4620 = vsel %vm55, %v4597, 0
    %v4623 = vsel %vm55, %v4598, 0
    %4625 = vmatprep.subr.mxu0 0.0
    %4626 = vmatpush1.msra.mxu0 %v4604
    %4627 = vmatprep.subr.mxu0 0.0
    %4628 = vmatpush1.msra.mxu0 %v4606
    %4629 = vmatprep.subr.mxu0 0.0
    %4630 = vmatpush1.msra.mxu0 %v4608
    %4631 = vmatprep.subr.mxu0 0.0
    %4632 = vmatpush1.msra.mxu0 %v4610
    %4633 = vmatprep.subr.mxu0 0.0
    %4634 = vmatpush1.msra.mxu0 0.0
    %4635 = vmatprep.subr.mxu0 0.0
    %4636 = vmatpush1.msra.mxu0 0.0
    %4637 = vmatprep.subr.mxu0 0.0
    %4638 = vmatpush1.msra.mxu0 0.0
    %4639 = vmatprep.subr.mxu0 0.0
    %4640 = vmatpush1.msra.mxu0 0.0
    %4641 = vmatprep.subr.mxu0 0.0
    %4642 = vmatpush1.msra.mxu0 0.0
    %4643 = vmatprep.subr.mxu0 0.0
    %4644 = vmatpush1.msra.mxu0 0.0
    %4645 = vmatprep.subr.mxu0 0.0
    %4646 = vmatpush1.msra.mxu0 0.0
    %4647 = vmatprep.subr.mxu0 0.0
    %4648 = vmatpush1.msra.mxu0 0.0
    %4649 = vmatprep.subr.mxu0 0.0
    %4650 = vmatpush1.msra.mxu0 0.0
    %4651 = vmatprep.subr.mxu0 0.0
    %4652 = vmatpush1.msra.mxu0 0.0
    %4653 = vmatprep.subr.mxu0 0.0
    %4654 = vmatpush1.msra.mxu0 0.0
    %4655 = vmatprep.subr.mxu0 0.0
    %4656 = vmatpush1.msra.mxu0 0.0
    %4657 = vmatprep.subr.mxu0 0.0
    %4658 = vmatpush1.msra.mxu0 0.0
    %4659 = vmatprep.subr.mxu0 0.0
    %4660 = vmatpush1.msra.mxu0 0.0
    %4661 = vmatprep.subr.mxu0 0.0
    %4662 = vmatpush1.msra.mxu0 0.0
    %4663 = vmatprep.subr.mxu0 0.0
    %4664 = vmatpush1.msra.mxu0 0.0
    %4665 = vmatprep.subr.mxu0 0.0
    %4666 = vmatpush1.msra.mxu0 0.0
    %4667 = vmatprep.subr.mxu0 0.0
    %4668 = vmatpush1.msra.mxu0 0.0
    %4669 = vmatprep.subr.mxu0 0.0
    %4670 = vmatpush1.msra.mxu0 0.0
    %4671 = vmatprep.subr.mxu0 0.0
    %4672 = vmatpush1.msra.mxu0 0.0
    %4673 = vmatprep.subr.mxu0 0.0
    %4674 = vmatpush1.msra.mxu0 0.0
    %4675 = vmatprep.subr.mxu0 0.0
    %4676 = vmatpush1.msra.mxu0 0.0
    %4677 = vmatprep.subr.mxu0 0.0
    %4678 = vmatpush1.msra.mxu0 0.0
    %4679 = vmatprep.subr.mxu0 0.0
    %4680 = vmatpush1.msra.mxu0 0.0
    %4681 = vmatprep.subr.mxu0 0.0
    %4682 = vmatpush1.msra.mxu0 0.0
    %4683 = vmatprep.subr.mxu0 0.0
    %4684 = vmatpush1.msra.mxu0 0.0
    %4685 = vmatprep.subr.mxu0 0.0
    %4686 = vmatpush1.msra.mxu0 0.0
    %4687 = vmatprep.subr.mxu0 0.0
    %4688 = vmatpush1.msra.mxu0 0.0
    %4689 = vmatprep.mubr.f32.mxu0 0.0
    %4690 = vmatmul.mubr.f32.gmra.mrb[0].mxu0 %v4620
    %v4691 = vpop.f32.mrb[0].mxu0
    %v4692 = vadd.f32 %v4617, %v4691
    %v4693 = vpop.f32.mrb[0].mxu0
    %4694 = vmatprep.mubr.f32.mxu0 0.0
    %4695 = vmatmul.mubr.f32.gmra.mrb[0].mxu0 %v4623
    %v4696 = vpop.f32.mrb[0].mxu0
    %v4697 = vadd.f32 %v4617, %v4696
    %v4698 = vpop.f32.mrb[0].mxu0
    %4699 = vdwg.mxu0
    %v4700 = vadd.f32 %v3623, %v4692
    %v4701 = vadd.f32 %v3624, %v4697
    %v4702 = vld [vmem:[%s9 + $0xa] sm:$0x1]
    %v4703 = vld [vmem:[%s9 + $0xb] sm:$0x1]
    %v4704 = vsel %vm55, %v4700, 0.0
    %4705 = vadd.xlane.f32.xlu0 %v4704
    %v4706 = vpop.xlane.xlu0 %4705
    %v4707 = vsel %vm55, %v4701, 0.0
    %4708 = vadd.xlane.f32.xlu0 %v4707
    %v4709 = vpop.xlane.xlu0 %4708
    %v4710 = vmul.f32 %v4706, %v145
    %v4711 = vmul.f32 %v4709, %v145
    %v4712 = vsub.f32 %v4700, %v4710
    %v4713 = vsub.f32 %v4701, %v4711
    %v4714 = vmul.f32 %v4712, %v4712
    %v4715 = vmul.f32 %v4713, %v4713
    %v4716 = vsel %vm55, %v4714, 0.0
    %4717 = vadd.xlane.f32.xlu0 %v4716
    %v4718 = vpop.xlane.xlu0 %4717
    %v4719 = vsel %vm55, %v4715, 0.0
    %4720 = vadd.xlane.f32.xlu0 %v4719
    %v4721 = vpop.xlane.xlu0 %4720
    %v4722 = vmul.f32 %v4718, %v158
    %v4723 = vmul.f32 %v4721, %v158
    %v4724 = vlaneseq
    %v4725 = vshrl.u32 %v4724, 7
    %v4726 = vsub.s32 0, %v4725
    %v4727 = vrot.slane %v4702, %v4726
    %v4728 = vmul.f32 %v4727, %v4712
    %v4729 = vmul.f32 %v4727, %v4713
    %v4730 = vrsqrt.pop %v4722
    %v4731 = vmul.f32 %v4722, %v4730
    %vm4732 = vcmp.eq.f32.partialorder %v4722, inf
    %v4733 = vsel %vm4732, %v4722, %v4731
    %vm4734 = vcmp.eq.f32.partialorder %v4722, 0.0
    %v4735 = vand.u32 %v4722, 2147483648
    %v4736 = vsel %vm4734, %v4735, %v4733
    %v4737 = vrsqrt.pop %v4723
    %v4738 = vmul.f32 %v4723, %v4737
    %vm4739 = vcmp.eq.f32.partialorder %v4723, inf
    %v4740 = vsel %vm4739, %v4723, %v4738
    %vm4741 = vcmp.eq.f32.partialorder %v4723, 0.0
    %v4742 = vand.u32 %v4723, 2147483648
    %v4743 = vsel %vm4741, %v4742, %v4740
    %v4744 = vadd.f32 %v4736, 1e-06
    %v4745 = vadd.f32 %v4743, 1e-06
    %v4746 = vrcp.pop %v4744
    %v4747 = vmul.f32 %v4728, %v4746
    %v4748 = vrcp.pop %v4745
    %v4749 = vmul.f32 %v4729, %v4748
    %v4750 = vlaneseq
    %v4751 = vshrl.u32 %v4750, 7
    %v4752 = vsub.s32 0, %v4751
    %v4753 = vrot.slane %v4703, %v4752
    %v4754 = vadd.f32 %v4747, %v4753
    %v4755 = vadd.f32 %v4749, %v4753
    %4756 = vrot.lane.b32.xlu0 %v3679, 64
    %v4757 = vpop.permute.xlu0 %4756
    %4758 = vrot.lane.b32.xlu0 %v3680, 64
    %v4759 = vpop.permute.xlu0 %4758
    %4760 = vrot.lane.b32.xlu0 %v3681, 64
    %v4761 = vpop.permute.xlu0 %4760
    %4762 = vrot.lane.b32.xlu0 %v3682, 64
    %v4763 = vpop.permute.xlu0 %4762
    %4768 = vrot.lane.b32.xlu0 %v3687, 64
    %v4769 = vpop.permute.xlu0 %4768
    %v4772 = vsel %vm55, %v4754, 0
    %v4775 = vsel %vm55, %v4755, 0
    %4777 = vmatprep.subr.mxu0 0.0
    %4778 = vmatpush1.msra.mxu0 %v4757
    %4779 = vmatprep.subr.mxu0 0.0
    %4780 = vmatpush1.msra.mxu0 %v4759
    %4781 = vmatprep.subr.mxu0 0.0
    %4782 = vmatpush1.msra.mxu0 %v4761
    %4783 = vmatprep.subr.mxu0 0.0
    %4784 = vmatpush1.msra.mxu0 %v4763
    %4785 = vmatprep.subr.mxu0 0.0
    %4786 = vmatpush1.msra.mxu0 0.0
    %4787 = vmatprep.subr.mxu0 0.0
    %4788 = vmatpush1.msra.mxu0 0.0
    %4789 = vmatprep.subr.mxu0 0.0
    %4790 = vmatpush1.msra.mxu0 0.0
    %4791 = vmatprep.subr.mxu0 0.0
    %4792 = vmatpush1.msra.mxu0 0.0
    %4793 = vmatprep.subr.mxu0 0.0
    %4794 = vmatpush1.msra.mxu0 0.0
    %4795 = vmatprep.subr.mxu0 0.0
    %4796 = vmatpush1.msra.mxu0 0.0
    %4797 = vmatprep.subr.mxu0 0.0
    %4798 = vmatpush1.msra.mxu0 0.0
    %4799 = vmatprep.subr.mxu0 0.0
    %4800 = vmatpush1.msra.mxu0 0.0
    %4801 = vmatprep.subr.mxu0 0.0
    %4802 = vmatpush1.msra.mxu0 0.0
    %4803 = vmatprep.subr.mxu0 0.0
    %4804 = vmatpush1.msra.mxu0 0.0
    %4805 = vmatprep.subr.mxu0 0.0
    %4806 = vmatpush1.msra.mxu0 0.0
    %4807 = vmatprep.subr.mxu0 0.0
    %4808 = vmatpush1.msra.mxu0 0.0
    %4809 = vmatprep.subr.mxu0 0.0
    %4810 = vmatpush1.msra.mxu0 0.0
    %4811 = vmatprep.subr.mxu0 0.0
    %4812 = vmatpush1.msra.mxu0 0.0
    %4813 = vmatprep.subr.mxu0 0.0
    %4814 = vmatpush1.msra.mxu0 0.0
    %4815 = vmatprep.subr.mxu0 0.0
    %4816 = vmatpush1.msra.mxu0 0.0
    %4817 = vmatprep.subr.mxu0 0.0
    %4818 = vmatpush1.msra.mxu0 0.0
    %4819 = vmatprep.subr.mxu0 0.0
    %4820 = vmatpush1.msra.mxu0 0.0
    %4821 = vmatprep.subr.mxu0 0.0
    %4822 = vmatpush1.msra.mxu0 0.0
    %4823 = vmatprep.subr.mxu0 0.0
    %4824 = vmatpush1.msra.mxu0 0.0
    %4825 = vmatprep.subr.mxu0 0.0
    %4826 = vmatpush1.msra.mxu0 0.0
    %4827 = vmatprep.subr.mxu0 0.0
    %4828 = vmatpush1.msra.mxu0 0.0
    %4829 = vmatprep.subr.mxu0 0.0
    %4830 = vmatpush1.msra.mxu0 0.0
    %4831 = vmatprep.subr.mxu0 0.0
    %4832 = vmatpush1.msra.mxu0 0.0
    %4833 = vmatprep.subr.mxu0 0.0
    %4834 = vmatpush1.msra.mxu0 0.0
    %4835 = vmatprep.subr.mxu0 0.0
    %4836 = vmatpush1.msra.mxu0 0.0
    %4837 = vmatprep.subr.mxu0 0.0
    %4838 = vmatpush1.msra.mxu0 0.0
    %4839 = vmatprep.subr.mxu0 0.0
    %4840 = vmatpush1.msra.mxu0 0.0
    %4841 = vmatprep.mubr.f32.mxu0 0.0
    %4842 = vmatmul.mubr.f32.gmra.mrb[0].mxu0 %v4772
    %v4843 = vpop.f32.mrb[0].mxu0
    %v4844 = vadd.f32 %v4769, %v4843
    %v4845 = vpop.f32.mrb[0].mxu0
    %4846 = vmatprep.mubr.f32.mxu0 0.0
    %4847 = vmatmul.mubr.f32.gmra.mrb[0].mxu0 %v4775
    %v4848 = vpop.f32.mrb[0].mxu0
    %v4849 = vadd.f32 %v4769, %v4848
    %v4850 = vpop.f32.mrb[0].mxu0
    %4851 = vdwg.mxu0
    %v4852 = vmax.f32 %v4844, 0.0
    %v4853 = vmax.f32 %v4849, 0.0
    %s4854 = scalar_lea.vmem %s5, 64
    %v4855 = vld [vmem:[%s4854] sm:$0xff]
    %v4856 = vld [vmem:[%s4854 + $0x8] sm:$0xff]
    %v4857 = vld [vmem:[%s4854 + $0x10] sm:$0xff]
    %v4858 = vld [vmem:[%s4854 + $0x18] sm:$0xff]
    %v4859 = vld [vmem:[%s4854 + $0x20] sm:$0xff]
    %v4860 = vld [vmem:[%s4854 + $0x28] sm:$0xff]
    %v4861 = vld [vmem:[%s4854 + $0x30] sm:$0xff]
    %v4862 = vld [vmem:[%s4854 + $0x38] sm:$0xff]
    %v4863 = vld [vmem:[%s8 + $0x5] sm:$0x1]
    %v4864 = vlaneseq
    %v4865 = vshrl.u32 %v4864, 7
    %v4866 = vsub.s32 0, %v4865
    %v4867 = vrot.slane %v4863, %v4866
    %v4869 = vsel %vm2461, %v4852, 0
    %v4872 = vsel %vm2461, %v4853, 0
    %4874 = vmatprep.subr.mxu0 0.0
    %4875 = vmatpush1.msra.mxu0 %v4855
    %4876 = vmatprep.subr.mxu0 0.0
    %4877 = vmatpush1.msra.mxu0 %v4856
    %4878 = vmatprep.subr.mxu0 0.0
    %4879 = vmatpush1.msra.mxu0 %v4857
    %4880 = vmatprep.subr.mxu0 0.0
    %4881 = vmatpush1.msra.mxu0 %v4858
    %4882 = vmatprep.subr.mxu0 0.0
    %4883 = vmatpush1.msra.mxu0 %v4859
    %4884 = vmatprep.subr.mxu0 0.0
    %4885 = vmatpush1.msra.mxu0 %v4860
    %4886 = vmatprep.subr.mxu0 0.0
    %4887 = vmatpush1.msra.mxu0 %v4861
    %4888 = vmatprep.subr.mxu0 0.0
    %4889 = vmatpush1.msra.mxu0 %v4862
    %4890 = vmatprep.subr.mxu0 0.0
    %4891 = vmatpush1.msra.mxu0 0.0
    %4892 = vmatprep.subr.mxu0 0.0
    %4893 = vmatpush1.msra.mxu0 0.0
    %4894 = vmatprep.subr.mxu0 0.0
    %4895 = vmatpush1.msra.mxu0 0.0
    %4896 = vmatprep.subr.mxu0 0.0
    %4897 = vmatpush1.msra.mxu0 0.0
    %4898 = vmatprep.subr.mxu0 0.0
    %4899 = vmatpush1.msra.mxu0 0.0
    %4900 = vmatprep.subr.mxu0 0.0
    %4901 = vmatpush1.msra.mxu0 0.0
    %4902 = vmatprep.subr.mxu0 0.0
    %4903 = vmatpush1.msra.mxu0 0.0
    %4904 = vmatprep.subr.mxu0 0.0
    %4905 = vmatpush1.msra.mxu0 0.0
    %4906 = vmatprep.subr.mxu0 0.0
    %4907 = vmatpush1.msra.mxu0 0.0
    %4908 = vmatprep.subr.mxu0 0.0
    %4909 = vmatpush1.msra.mxu0 0.0
    %4910 = vmatprep.subr.mxu0 0.0
    %4911 = vmatpush1.msra.mxu0 0.0
    %4912 = vmatprep.subr.mxu0 0.0
    %4913 = vmatpush1.msra.mxu0 0.0
    %4914 = vmatprep.subr.mxu0 0.0
    %4915 = vmatpush1.msra.mxu0 0.0
    %4916 = vmatprep.subr.mxu0 0.0
    %4917 = vmatpush1.msra.mxu0 0.0
    %4918 = vmatprep.subr.mxu0 0.0
    %4919 = vmatpush1.msra.mxu0 0.0
    %4920 = vmatprep.subr.mxu0 0.0
    %4921 = vmatpush1.msra.mxu0 0.0
    %4922 = vmatprep.subr.mxu0 0.0
    %4923 = vmatpush1.msra.mxu0 0.0
    %4924 = vmatprep.subr.mxu0 0.0
    %4925 = vmatpush1.msra.mxu0 0.0
    %4926 = vmatprep.subr.mxu0 0.0
    %4927 = vmatpush1.msra.mxu0 0.0
    %4928 = vmatprep.subr.mxu0 0.0
    %4929 = vmatpush1.msra.mxu0 0.0
    %4930 = vmatprep.subr.mxu0 0.0
    %4931 = vmatpush1.msra.mxu0 0.0
    %4932 = vmatprep.subr.mxu0 0.0
    %4933 = vmatpush1.msra.mxu0 0.0
    %4934 = vmatprep.subr.mxu0 0.0
    %4935 = vmatpush1.msra.mxu0 0.0
    %4936 = vmatprep.subr.mxu0 0.0
    %4937 = vmatpush1.msra.mxu0 0.0
    %4938 = vmatprep.mubr.f32.mxu0 0.0
    %4939 = vmatmul.mubr.f32.gmra.mrb[0].mxu0 %v4869
    %v4940 = vpop.f32.mrb[0].mxu0
    %v4941 = vadd.f32 %v4867, %v4940
    %v4942 = vpop.f32.mrb[0].mxu0
    %4943 = vmatprep.mubr.f32.mxu0 0.0
    %4944 = vmatmul.mubr.f32.gmra.mrb[0].mxu0 %v4872
    %v4945 = vpop.f32.mrb[0].mxu0
    %v4946 = vadd.f32 %v4867, %v4945
    %v4947 = vpop.f32.mrb[0].mxu0
    %4948 = vdwg.mxu0
    %v4949 = vadd.f32 %v4700, %v4941
    %v4950 = vadd.f32 %v4701, %v4946
    %v4951 = vld [vmem:[%s9 + $0xc] sm:$0x1]
    %v4952 = vld [vmem:[%s9 + $0xd] sm:$0x1]
    %v4953 = vsel %vm55, %v4949, 0.0
    %4954 = vadd.xlane.f32.xlu0 %v4953
    %v4955 = vpop.xlane.xlu0 %4954
    %v4956 = vsel %vm55, %v4950, 0.0
    %4957 = vadd.xlane.f32.xlu0 %v4956
    %v4958 = vpop.xlane.xlu0 %4957
    %v4959 = vmul.f32 %v4955, %v145
    %v4960 = vmul.f32 %v4958, %v145
    %v4961 = vsub.f32 %v4949, %v4959
    %v4962 = vsub.f32 %v4950, %v4960
    %v4963 = vmul.f32 %v4961, %v4961
    %v4964 = vmul.f32 %v4962, %v4962
    %v4965 = vsel %vm55, %v4963, 0.0
    %4966 = vadd.xlane.f32.xlu0 %v4965
    %v4967 = vpop.xlane.xlu0 %4966
    %v4968 = vsel %vm55, %v4964, 0.0
    %4969 = vadd.xlane.f32.xlu0 %v4968
    %v4970 = vpop.xlane.xlu0 %4969
    %v4971 = vmul.f32 %v4967, %v158
    %v4972 = vmul.f32 %v4970, %v158
    %v4973 = vlaneseq
    %v4974 = vshrl.u32 %v4973, 7
    %v4975 = vsub.s32 0, %v4974
    %v4976 = vrot.slane %v4951, %v4975
    %v4977 = vmul.f32 %v4976, %v4961
    %v4978 = vmul.f32 %v4976, %v4962
    %v4979 = vrsqrt.pop %v4971
    %v4980 = vmul.f32 %v4971, %v4979
    %vm4981 = vcmp.eq.f32.partialorder %v4971, inf
    %v4982 = vsel %vm4981, %v4971, %v4980
    %vm4983 = vcmp.eq.f32.partialorder %v4971, 0.0
    %v4984 = vand.u32 %v4971, 2147483648
    %v4985 = vsel %vm4983, %v4984, %v4982
    %v4986 = vrsqrt.pop %v4972
    %v4987 = vmul.f32 %v4972, %v4986
    %vm4988 = vcmp.eq.f32.partialorder %v4972, inf
    %v4989 = vsel %vm4988, %v4972, %v4987
    %vm4990 = vcmp.eq.f32.partialorder %v4972, 0.0
    %v4991 = vand.u32 %v4972, 2147483648
    %v4992 = vsel %vm4990, %v4991, %v4989
    %v4993 = vadd.f32 %v4985, 1e-06
    %v4994 = vadd.f32 %v4992, 1e-06
    %v4995 = vrcp.pop %v4993
    %v4996 = vmul.f32 %v4977, %v4995
    %v4997 = vrcp.pop %v4994
    %v4998 = vmul.f32 %v4978, %v4997
    %v4999 = vlaneseq
    %v5000 = vshrl.u32 %v4999, 7
    %v5001 = vsub.s32 0, %v5000
    %v5002 = vrot.slane %v4952, %v5001
    %v5003 = vadd.f32 %v4996, %v5002
    %v5004 = vadd.f32 %v4998, %v5002
    %5005 = vst.msk [vmem:[#allocation2] sm:$0xff] %vm55, %v5003
    %5006 = vst.msk [vmem:[#allocation2 + $0x8] sm:$0xff] %vm55, %v5004
    // Predicated region
    $region42: #{decoder_forward.1} parent=1 // pred_check
      _
    $region43: #{decoder_forward.1} parent=1 // pred_check_branch
      %5008 = sbr.rel (0) target = $region45
    $region44: #{decoder_forward.1} parent=1 // pred_region
      %s5010 = ssub.s32 256, 256
      %5011 = vsyncadd [#allocation3], %s5010
      %s5012 = sshll.u32 [#allocation2], 4
      %s5013 = int_to_ptr.vmem [resolvable:$true] %s5012
      %5018 = dma.vmem_to_hbm [thread:$0]  %s5013, 256, %s10, [#allocation3], 128, 128, 8
    $region45: #{decoder_forward.1} parent=1 // pred_fallthru
      _
    // Predicated region
    $region46: #{decoder_forward.1} parent=1 // pred_check
      _
    $region47: #{decoder_forward.1} parent=1 // pred_check_branch
      %5020 = sbr.rel (0) target = $region49
    $region48: #{decoder_forward.1} parent=1 // pred_region
      %5021 = dma.done [#allocation3], 256
    $region49: #{decoder_forward.1} parent=1 // pred_fallthru
      _
    %5022 = vsyncpa [#allocation3], 1

</llo_original>
